<compile_context>
chip_gen: v5e
topology: v5e:2x2
jax: 0.10.0
libtpu: 0.0.40
codegen_flags: <defaults>
</compile_context>

<pallas_src>
import numpy as np

import jax
import jax.numpy as jnp
from jax.experimental import pallas as pl
from jax.experimental.pallas import tpu as pltpu

# ---------------- model dimensions (small, consistent with the module) -------
B = 2              # real batch
BP = 8             # batch padded to one sublane tile
C_IN = 4           # obs channels
H = W = 16         # obs spatial
C1, C2 = 8, 16     # conv channel widths (per encoder)
K = 3              # conv kernel
S = 2              # conv stride
HIDDEN = 32        # per-encoder output size (core_out_size per core)
NUM_ACTIONS = 6
RNN_SIZE = 64      # fake rnn states (passed through by _core_empty)

OH1 = (H - K) // S + 1          # conv1 output spatial = 7
OH2 = (OH1 - K) // S + 1        # conv2 output spatial = 3
N_POS = OH2 * OH2               # conv2 output positions = 9
PATCH0 = K * K * C_IN           # conv1 patch length = 36
PATCH1 = K * K * PATCH0         # merged conv1+conv2 patch length = 324
P0W = 328                       # PATCH1 rounded up to a multiple of 8
CC1 = 2 * C1                    # fused conv1 channels (actor|critic) = 16
CC2 = 2 * C2                    # fused conv2 channels = 32
W1M_N = K * K * CC1             # merged conv1 output width = 144
CH = 2 * HIDDEN                 # fused encoder features = 64
OUT_PAD = 128                   # lane-dense padded tail output
ROWS = N_POS * BP               # conv rows (pos-major, batch inner) = 72

# ---------------- single packed parameter slab (all offsets 8-aligned) --------
SLAB_W = 144
R_W1 = 0          # (324,144) block-diag merged conv1 weights (rows 324..327 = 0)
R_B1 = 328        # (1,144)   conv1 bias tiled x9
R_W2 = 336        # (144,32)  conv2 block-diag weights
R_B2 = 480        # (1,32)    conv2 bias
R_WFC = 488       # (288,64)  fc block-diag weights
R_BFC = 776       # (1,64)    fc bias
R_WH = 784        # (64,128)  tail heads: cols 0:6 actor logits, col 6 value
R_BH = 848        # (1,128)   tail bias
SLAB_ROWS = 856

_PREC = jax.lax.Precision.HIGHEST


# ---------------- the single fused Pallas kernel ------------------------------
def _fused_forward_kernel(p0_ref, slab_ref, out_ref):
    """Whole forward pass (both encoders + tail), VMEM-resident, 4 matmuls.

    p0_ref  : (ROWS, P0W) shared obs patches; row r = p*BP + b, lane layout
              (i, j, ky, kx, c) over the conv2 kernel offset (i,j) and the
              conv1 patch (ky,kx,c); lanes 324..327 zero-padded.
    slab_ref: (SLAB_ROWS, SLAB_W) all packed parameters (see R_* offsets).
    out_ref : (BP, OUT_PAD) lane-dense padded [logits(6) | value(1) | 0...].
    """
    # conv1 for BOTH encoders and all 9 conv2 offsets at once: one matmul
    # against the block-diagonal merged weights (zero pad rows are harmless).
    h1 = jnp.dot(p0_ref[...], slab_ref[R_W1:R_W1 + P0W, :],
                 preferred_element_type=jnp.float32, precision=_PREC)
    h1 = jnp.maximum(h1 + slab_ref[R_B1:R_B1 + 1, :], 0.0)          # (72, 144)

    # conv2 (both encoders): one matmul against block-diag (144, 32) weights.
    h2 = jnp.dot(h1, slab_ref[R_W2:R_W2 + W1M_N, :CC2],
                 preferred_element_type=jnp.float32, precision=_PREC)
    h2 = jnp.maximum(h2 + slab_ref[R_B2:R_B2 + 1, :CC2], 0.0)       # (72, 32)

    # relayout (pos, batch)-rows -> lanes: nine aligned (8, 32) slices
    # concatenated along lanes -> (8, 288); stays in registers (no scratch).
    feat_in = jnp.concatenate(
        [h2[p * BP:(p + 1) * BP, :] for p in range(N_POS)], axis=1)  # (8, 288)

    # fc (both encoders, block-diagonal): ONE matmul.
    feat = jnp.dot(feat_in, slab_ref[R_WFC:R_WFC + N_POS * CC2, :CH],
                   preferred_element_type=jnp.float32, precision=_PREC)
    feat = jnp.maximum(feat + slab_ref[R_BFC:R_BFC + 1, :CH], 0.0)   # (8, 64)

    # tail: actor half -> logits, critic half -> value, one lane-dense slab,
    # stored as a full unmasked (8, 128) vreg store.
    out = jnp.dot(feat, slab_ref[R_WH:R_WH + CH, :OUT_PAD],
                  preferred_element_type=jnp.float32, precision=_PREC)
    out_ref[...] = out + slab_ref[R_BH:R_BH + 1, :OUT_PAD]


def fused_forward(slab, p0):
    return pl.pallas_call(
        _fused_forward_kernel,
        out_shape=jax.ShapeDtypeStruct((BP, OUT_PAD), jnp.float32),
        in_specs=[pl.BlockSpec(memory_space=pltpu.MemorySpace.VMEM),
                  pl.BlockSpec(memory_space=pltpu.MemorySpace.VMEM)],
        out_specs=pl.BlockSpec(memory_space=pltpu.MemorySpace.VMEM),
    )(p0, slab)


# ---------------- JAX glue: shared merged im2col (few fused XLA slices) -------
def build_patches(obs_nhwc):
    """(BP,H,W,C) -> (ROWS, P0W); row r = p*BP + b, cols = (i, j, ky, kx, c)."""
    cols1 = []
    for ky in range(K):
        for kx in range(K):
            cols1.append(obs_nhwc[:, ky:ky + S * (OH1 - 1) + 1:S,
                                     kx:kx + S * (OH1 - 1) + 1:S, :])
    patches1 = jnp.concatenate(cols1, axis=-1)             # (BP, 7, 7, 36)
    cols2 = []
    for i in range(K):
        for j in range(K):
            cols2.append(patches1[:, i:i + S * (OH2 - 1) + 1:S,
                                      j:j + S * (OH2 - 1) + 1:S, :])
    p0 = jnp.concatenate(cols2, axis=-1)                   # (BP, 3, 3, 324)
    p0 = jnp.transpose(p0, (1, 2, 0, 3)).reshape(ROWS, PATCH1)
    return jnp.pad(p0, ((0, 0), (0, P0W - PATCH1)))        # K padded to 328


def actor_critic_forward(slab, obs_nchw, rnn_states):
    """Semantics of _ActorCriticSeparateWeights.forward (use_rnn=False)."""
    nb = obs_nchw.shape[0]
    obs_nhwc = jnp.transpose(obs_nchw, (0, 2, 3, 1))       # NCHW -> NHWC
    obs_p = jnp.pad(obs_nhwc, ((0, BP - nb), (0, 0), (0, 0), (0, 0)))
    p0 = build_patches(obs_p)                              # shared im2col, once
    out = fused_forward(slab, p0)                          # (8, 128) padded slab
    return {
        "action_logits": out[:nb, :NUM_ACTIONS],           # (B, NUM_ACTIONS)
        "values": out[:nb, NUM_ACTIONS],                   # (B,) == .squeeze()
        "new_rnn_states": rnn_states,                      # _core_empty passthrough
    }


# ---------------- deterministic parameter init (orthogonal, zero bias) -------
def make_encoder_params(key):
    ortho = jax.nn.initializers.orthogonal()
    k1, k2, k3 = jax.random.split(key, 3)
    return {
        "w1": ortho(k1, (K * K * C_IN, C1), jnp.float32),      # rows = (ky,kx,c)
        "b1": jnp.zeros((C1,), jnp.float32),
        "w2": ortho(k2, (K * K * C1, C2), jnp.float32),        # rows = (i,j,c1)
        "b2": jnp.zeros((C2,), jnp.float32),
        "wfc": ortho(k3, (N_POS * C2, HIDDEN), jnp.float32),   # rows = (pos,c2)
        "bfc": jnp.zeros((HIDDEN,), jnp.float32),
    }


def make_params(key):
    ka, kc, kah, kcl = jax.random.split(key, 4)
    ortho = jax.nn.initializers.orthogonal()
    return {
        "actor_enc": make_encoder_params(ka),
        "critic_enc": make_encoder_params(kc),
        # ActionParameterizationDefault (discrete): Linear(core_out, num_actions)
        "actor_head_w": ortho(kah, (HIDDEN, NUM_ACTIONS), jnp.float32),
        "actor_head_b": jnp.zeros((NUM_ACTIONS,), jnp.float32),
        # self.critic_linear = nn.Linear(core_out, 1)
        "critic_w": ortho(kcl, (HIDDEN, 1), jnp.float32),
        "critic_b": jnp.zeros((1,), jnp.float32),
    }


def pack_params(params):
    """One-time packing of all actor+critic weights into ONE (856,144) slab."""
    ae, ce = params["actor_enc"], params["critic_enc"]

    # conv1: concat along output dim, then 9 copies block-diagonally (324,144)
    w1f = jnp.concatenate([ae["w1"], ce["w1"]], axis=1)                # (36, 16)
    b1f = jnp.concatenate([ae["b1"], ce["b1"]])                        # (16,)
    w1m = jnp.zeros((PATCH1, W1M_N), jnp.float32)
    for ij in range(K * K):
        w1m = w1m.at[ij * PATCH0:(ij + 1) * PATCH0,
                     ij * CC1:(ij + 1) * CC1].set(w1f)
    b1m = jnp.tile(b1f, K * K)                                         # (144,)

    # conv2: per kernel-offset block-diagonal (actor block | critic block)
    w2 = jnp.zeros((K * K * CC1, CC2), jnp.float32)
    for ij in range(K * K):
        w2 = w2.at[ij * CC1:ij * CC1 + C1, :C2].set(ae["w2"][ij * C1:(ij + 1) * C1])
        w2 = w2.at[ij * CC1 + C1:(ij + 1) * CC1, C2:].set(ce["w2"][ij * C1:(ij + 1) * C1])
    b2f = jnp.concatenate([ae["b2"], ce["b2"]])                        # (32,)

    # fc: per spatial-position block-diagonal
    wfc = jnp.zeros((N_POS * CC2, CH), jnp.float32)
    for p in range(N_POS):
        wfc = wfc.at[p * CC2:p * CC2 + C2, :HIDDEN].set(ae["wfc"][p * C2:(p + 1) * C2])
        wfc = wfc.at[p * CC2 + C2:(p + 1) * CC2, HIDDEN:].set(ce["wfc"][p * C2:(p + 1) * C2])
    bfcf = jnp.concatenate([ae["bfc"], ce["bfc"]])                     # (64,)

    # tail heads -> lane-dense (64, 128) weight / (128,) bias
    wh = jnp.zeros((CH, OUT_PAD), jnp.float32)
    wh = wh.at[:HIDDEN, :NUM_ACTIONS].set(params["actor_head_w"])
    wh = wh.at[HIDDEN:, NUM_ACTIONS:NUM_ACTIONS + 1].set(params["critic_w"])
    bh = jnp.zeros((OUT_PAD,), jnp.float32)
    bh = bh.at[:NUM_ACTIONS].set(params["actor_head_b"])
    bh = bh.at[NUM_ACTIONS].set(params["critic_b"][0])

    # single f32 slab -> ONE HBM->VMEM DMA per kernel call
    slab = jnp.zeros((SLAB_ROWS, SLAB_W), jnp.float32)
    slab = slab.at[R_W1:R_W1 + PATCH1, :W1M_N].set(w1m)
    slab = slab.at[R_B1, :W1M_N].set(b1m)
    slab = slab.at[R_W2:R_W2 + K * K * CC1, :CC2].set(w2)
    slab = slab.at[R_B2, :CC2].set(b2f)
    slab = slab.at[R_WFC:R_WFC + N_POS * CC2, :CH].set(wfc)
    slab = slab.at[R_BFC, :CH].set(bfcf)
    slab = slab.at[R_WH:R_WH + CH, :OUT_PAD].set(wh)
    slab = slab.at[R_BH, :OUT_PAD].set(bh)
    return slab


# ---------------- plain-JAX reference (numerical sanity check) ----------------
def _mm(a, b):
    return jnp.dot(a, b, precision=_PREC)


def _im2col(x, kh, kw, stride):
    b, h, w, c = x.shape
    oh = (h - kh) // stride + 1
    ow = (w - kw) // stride + 1
    cols = []
    for i in range(kh):
        for j in range(kw):
            cols.append(x[:, i:i + stride * (oh - 1) + 1:stride,
                             j:j + stride * (ow - 1) + 1:stride, :])
    patches = jnp.concatenate(cols, axis=-1)
    return patches.reshape(b * oh * ow, kh * kw * c), oh, ow


def _ref_encoder(obs_nhwc, p):
    b = obs_nhwc.shape[0]
    x, oh, ow = _im2col(obs_nhwc, K, K, S)
    h = jax.nn.relu(_mm(x, p["w1"]) + p["b1"]).reshape(b, oh, ow, C1)
    x, oh2, ow2 = _im2col(h, K, K, S)
    h = jax.nn.relu(_mm(x, p["w2"]) + p["b2"]).reshape(b, oh2 * ow2 * C2)
    return jax.nn.relu(_mm(h, p["wfc"]) + p["bfc"])


def _ref_forward(params, obs_nchw):
    obs_nhwc = jnp.transpose(obs_nchw, (0, 2, 3, 1))
    fa = _ref_encoder(obs_nhwc, params["actor_enc"])
    fcrit = _ref_encoder(obs_nhwc, params["critic_enc"])
    logits = _mm(fa, params["actor_head_w"]) + params["actor_head_b"]
    values = (_mm(fcrit, params["critic_w"]) + params["critic_b"])[:, 0]
    return logits, values


# ---------------- run ---------------------------------------------------------
if __name__ == "__main__":
    key = jax.random.PRNGKey(0)
    k_obs, k_rnn, k_par = jax.random.split(key, 3)

    obs = jax.random.normal(k_obs, (B, C_IN, H, W), jnp.float32)       # NCHW obs
    rnn_states = jax.random.normal(k_rnn, (B, RNN_SIZE), jnp.float32)  # fake rnn states
    params = make_params(k_par)
    slab = pack_params(params)                                         # pack once

    fwd = jax.jit(actor_critic_forward)
    result = fwd(slab, obs, rnn_states)
    jax.block_until_ready(result)

    assert result["action_logits"].shape == (B, NUM_ACTIONS)
    assert result["values"].shape == (B,)
    assert result["new_rnn_states"].shape == (B, RNN_SIZE)

    # numerical sanity check vs. plain-JAX reference (HIGHEST precision in both)
    ref_logits, ref_values = _ref_forward(params, obs)
    np.testing.assert_allclose(np.asarray(result["action_logits"]),
                               np.asarray(ref_logits), rtol=2e-3, atol=2e-3)
    np.testing.assert_allclose(np.asarray(result["values"]),
                               np.asarray(ref_values), rtol=2e-3, atol=2e-3)
    print("KERNEL_OK")
</pallas_src>

<mosaic_0001>
module attributes {stable_mosaic.version = 11 : i64} {
  func.func @_fused_forward_kernel(%arg0: memref<72x328xf32, #tpu.memory_space<vmem>>, %arg1: memref<856x144xf32, #tpu.memory_space<vmem>>, %arg2: memref<8x128xf32, #tpu.memory_space<vmem>>) attributes {dimension_semantics = [], scalar_prefetch = 0 : i64, scratch_operands = 0 : i64, tpu.core_type = #tpu.core_type<tc>} {
    %c0 = arith.constant 0 : index
    %c0_0 = arith.constant 0 : index
    %0 = vector.load %arg0[%c0, %c0_0] : memref<72x328xf32, #tpu.memory_space<vmem>>, vector<72x328xf32>
    %c0_1 = arith.constant 0 : index
    %c0_2 = arith.constant 0 : index
    %1 = vector.load %arg1[%c0_1, %c0_2] : memref<856x144xf32, #tpu.memory_space<vmem>>, vector<328x144xf32>
    %cst = arith.constant dense<0.000000e+00> : vector<72x144xf32>
    %2 = tpu.matmul %0, %1, %cst {dimension_numbers = #tpu.dot_dimension_numbers<[1], [0], [0], [1], [0, 0, 1, 1], [], []>, precision = #tpu.contract_precision<fp32>} : vector<72x328xf32>, vector<328x144xf32>, vector<72x144xf32> -> vector<72x144xf32>
    %c328 = arith.constant 328 : index
    %c0_3 = arith.constant 0 : index
    %3 = vector.load %arg1[%c328, %c0_3] : memref<856x144xf32, #tpu.memory_space<vmem>>, vector<1x144xf32>
    %4 = vector.broadcast %3 : vector<1x144xf32> to vector<72x144xf32>
    %5 = arith.addf %2, %4 : vector<72x144xf32>
    %cst_4 = arith.constant 0.000000e+00 : f32
    %6 = vector.broadcast %cst_4 : f32 to vector<72x144xf32>
    %7 = arith.maximumf %5, %6 : vector<72x144xf32>
    %c336 = arith.constant 336 : index
    %c0_5 = arith.constant 0 : index
    %8 = vector.load %arg1[%c336, %c0_5] : memref<856x144xf32, #tpu.memory_space<vmem>>, vector<144x32xf32>
    %cst_6 = arith.constant dense<0.000000e+00> : vector<72x32xf32>
    %9 = tpu.matmul %7, %8, %cst_6 {dimension_numbers = #tpu.dot_dimension_numbers<[1], [0], [0], [1], [0, 0, 1, 1], [], []>, precision = #tpu.contract_precision<fp32>} : vector<72x144xf32>, vector<144x32xf32>, vector<72x32xf32> -> vector<72x32xf32>
    %c480 = arith.constant 480 : index
    %c0_7 = arith.constant 0 : index
    %10 = vector.load %arg1[%c480, %c0_7] : memref<856x144xf32, #tpu.memory_space<vmem>>, vector<1x32xf32>
    %11 = vector.broadcast %10 : vector<1x32xf32> to vector<72x32xf32>
    %12 = arith.addf %9, %11 : vector<72x32xf32>
    %cst_8 = arith.constant 0.000000e+00 : f32
    %13 = vector.broadcast %cst_8 : f32 to vector<72x32xf32>
    %14 = arith.maximumf %12, %13 : vector<72x32xf32>
    %15 = vector.extract_strided_slice %14 {offsets = [0, 0], sizes = [8, 32], strides = [1, 1]} : vector<72x32xf32> to vector<8x32xf32>
    %16 = vector.extract_strided_slice %14 {offsets = [8, 0], sizes = [8, 32], strides = [1, 1]} : vector<72x32xf32> to vector<8x32xf32>
    %17 = vector.extract_strided_slice %14 {offsets = [16, 0], sizes = [8, 32], strides = [1, 1]} : vector<72x32xf32> to vector<8x32xf32>
    %18 = vector.extract_strided_slice %14 {offsets = [24, 0], sizes = [8, 32], strides = [1, 1]} : vector<72x32xf32> to vector<8x32xf32>
    %19 = vector.extract_strided_slice %14 {offsets = [32, 0], sizes = [8, 32], strides = [1, 1]} : vector<72x32xf32> to vector<8x32xf32>
    %20 = vector.extract_strided_slice %14 {offsets = [40, 0], sizes = [8, 32], strides = [1, 1]} : vector<72x32xf32> to vector<8x32xf32>
    %21 = vector.extract_strided_slice %14 {offsets = [48, 0], sizes = [8, 32], strides = [1, 1]} : vector<72x32xf32> to vector<8x32xf32>
    %22 = vector.extract_strided_slice %14 {offsets = [56, 0], sizes = [8, 32], strides = [1, 1]} : vector<72x32xf32> to vector<8x32xf32>
    %23 = vector.extract_strided_slice %14 {offsets = [64, 0], sizes = [8, 32], strides = [1, 1]} : vector<72x32xf32> to vector<8x32xf32>
    %24 = tpu.concatenate %15, %16, %17, %18, %19, %20, %21, %22, %23 in 1 : vector<8x32xf32>, vector<8x32xf32>, vector<8x32xf32>, vector<8x32xf32>, vector<8x32xf32>, vector<8x32xf32>, vector<8x32xf32>, vector<8x32xf32>, vector<8x32xf32> -> vector<8x288xf32>
    %c488 = arith.constant 488 : index
    %c0_9 = arith.constant 0 : index
    %25 = vector.load %arg1[%c488, %c0_9] : memref<856x144xf32, #tpu.memory_space<vmem>>, vector<288x64xf32>
    %cst_10 = arith.constant dense<0.000000e+00> : vector<8x64xf32>
    %26 = tpu.matmul %24, %25, %cst_10 {dimension_numbers = #tpu.dot_dimension_numbers<[1], [0], [0], [1], [0, 0, 1, 1], [], []>, precision = #tpu.contract_precision<fp32>} : vector<8x288xf32>, vector<288x64xf32>, vector<8x64xf32> -> vector<8x64xf32>
    %c776 = arith.constant 776 : index
    %c0_11 = arith.constant 0 : index
    %27 = vector.load %arg1[%c776, %c0_11] : memref<856x144xf32, #tpu.memory_space<vmem>>, vector<1x64xf32>
    %28 = vector.broadcast %27 : vector<1x64xf32> to vector<8x64xf32>
    %29 = arith.addf %26, %28 : vector<8x64xf32>
    %cst_12 = arith.constant 0.000000e+00 : f32
    %30 = vector.broadcast %cst_12 : f32 to vector<8x64xf32>
    %31 = arith.maximumf %29, %30 : vector<8x64xf32>
    %c784 = arith.constant 784 : index
    %c0_13 = arith.constant 0 : index
    %32 = vector.load %arg1[%c784, %c0_13] : memref<856x144xf32, #tpu.memory_space<vmem>>, vector<64x128xf32>
    %cst_14 = arith.constant dense<0.000000e+00> : vector<8x128xf32>
    %33 = tpu.matmul %31, %32, %cst_14 {dimension_numbers = #tpu.dot_dimension_numbers<[1], [0], [0], [1], [0, 0, 1, 1], [], []>, precision = #tpu.contract_precision<fp32>} : vector<8x64xf32>, vector<64x128xf32>, vector<8x128xf32> -> vector<8x128xf32>
    %c848 = arith.constant 848 : index
    %c0_15 = arith.constant 0 : index
    %34 = vector.load %arg1[%c848, %c0_15] : memref<856x144xf32, #tpu.memory_space<vmem>>, vector<1x128xf32>
    %35 = vector.broadcast %34 : vector<1x128xf32> to vector<8x128xf32>
    %36 = arith.addf %33, %35 : vector<8x128xf32>
    %c0_16 = arith.constant 0 : index
    %c0_17 = arith.constant 0 : index
    %37 = vector.load %arg2[%c0_16, %c0_17] : memref<8x128xf32, #tpu.memory_space<vmem>>, vector<8x128xf32>
    tpu.vector_store %arg2[%c0_16, %c0_17], %36 {strides = array<i32>} : memref<8x128xf32, #tpu.memory_space<vmem>>, vector<8x128xf32>,
    return
  }
}

</mosaic_0001>

<llo_original>
// kernel: actor_critic_forward.1
$region0: #{actor_critic_forward.1}
  #allocation0 [shape = 'u32[]', space=smem, size = 0x4, offset = 0x4, fixed_abs, tag = 'smem constant byte address 0x4 - core index']
  #allocation1 [shape = 'u32[72,128]{1,0:T(1,128)}', space=vmem, size = 0x9000, scoped, tag = 'internal scratch']
  %s0 = inlined_call_operand.vmem [shape: f32[72,328], index: 0, kind: input, shape index: {}]
  %s1 = inlined_call_operand.vmem [shape: f32[856,144], index: 1, kind: input, shape index: {}]
  %s2 = inlined_call_operand.vmem [shape: f32[8,128], index: 2, kind: output, shape index: {}]
  %s3 = sld [smem:[#allocation0]]
  $region18: #{actor_critic_forward.1} parent=0
    _
  %s5 = ssub.s32 1, %s3
  %s6 = scalar_select 0, %s5, %s3
  // Predicated region
  $region2: #{actor_critic_forward.1} parent=0 // pred_check
    _
  $region3: #{actor_critic_forward.1} parent=0 // pred_check_branch
    %8 = sbr.rel (0) target = $region5
  $region4: #{actor_critic_forward.1} parent=0 // pred_region
    _
  $region5: #{actor_critic_forward.1} parent=0 // pred_fallthru
    _
  // Predicated region
  $region6: #{actor_critic_forward.1} parent=0 // pred_check
    _
  $region7: #{actor_critic_forward.1} parent=0 // pred_check_branch
    %10 = sbr.rel (0) target = $region9
  $region8: #{actor_critic_forward.1} parent=0 // pred_region
    _
  $region9: #{actor_critic_forward.1} parent=0 // pred_fallthru
    _
  %v11 = vld [vmem:[%s0] sm:$0xff]
  %v12 = vld [vmem:[%s0 + $0x8] sm:$0xff]
  %v13 = vld [vmem:[%s0 + $0x10] sm:$0xff]
  %v14 = vld [vmem:[%s0 + $0x18] sm:$0xff]
  %v15 = vld [vmem:[%s0 + $0x20] sm:$0xff]
  %v16 = vld [vmem:[%s0 + $0x28] sm:$0xff]
  %v17 = vld [vmem:[%s0 + $0x30] sm:$0xff]
  %v18 = vld [vmem:[%s0 + $0x38] sm:$0xff]
  %v19 = vld [vmem:[%s0 + $0x40] sm:$0xff]
  %v20 = vld [vmem:[%s0 + $0x48] sm:$0xff]
  %v21 = vld [vmem:[%s0 + $0x50] sm:$0xff]
  %v22 = vld [vmem:[%s0 + $0x58] sm:$0xff]
  %v23 = vld [vmem:[%s0 + $0x60] sm:$0xff]
  %v24 = vld [vmem:[%s0 + $0x68] sm:$0xff]
  %v25 = vld [vmem:[%s0 + $0x70] sm:$0xff]
  %v26 = vld [vmem:[%s0 + $0x78] sm:$0xff]
  %v27 = vld [vmem:[%s0 + $0x80] sm:$0xff]
  %v28 = vld [vmem:[%s0 + $0x88] sm:$0xff]
  %v29 = vld [vmem:[%s0 + $0x90] sm:$0xff]
  %v30 = vld [vmem:[%s0 + $0x98] sm:$0xff]
  %v31 = vld [vmem:[%s0 + $0xa0] sm:$0xff]
  %v32 = vld [vmem:[%s0 + $0xa8] sm:$0xff]
  %v33 = vld [vmem:[%s0 + $0xb0] sm:$0xff]
  %v34 = vld [vmem:[%s0 + $0xb8] sm:$0xff]
  %v35 = vld [vmem:[%s0 + $0xc0] sm:$0xff]
  %v36 = vld [vmem:[%s0 + $0xc8] sm:$0xff]
  %v37 = vld [vmem:[%s0 + $0xd0] sm:$0xff]
  %v38 = vld [vmem:[%s1] sm:$0xff]
  %v39 = vld [vmem:[%s1 + $0x8] sm:$0xff]
  %v40 = vld [vmem:[%s1 + $0x10] sm:$0xff]
  %v41 = vld [vmem:[%s1 + $0x18] sm:$0xff]
  %v42 = vld [vmem:[%s1 + $0x20] sm:$0xff]
  %v43 = vld [vmem:[%s1 + $0x28] sm:$0xff]
  %v44 = vld [vmem:[%s1 + $0x30] sm:$0xff]
  %v45 = vld [vmem:[%s1 + $0x38] sm:$0xff]
  %v46 = vld [vmem:[%s1 + $0x40] sm:$0xff]
  %v47 = vld [vmem:[%s1 + $0x48] sm:$0xff]
  %v48 = vld [vmem:[%s1 + $0x50] sm:$0xff]
  %v49 = vld [vmem:[%s1 + $0x58] sm:$0xff]
  %v50 = vld [vmem:[%s1 + $0x60] sm:$0xff]
  %v51 = vld [vmem:[%s1 + $0x68] sm:$0xff]
  %v52 = vld [vmem:[%s1 + $0x70] sm:$0xff]
  %v53 = vld [vmem:[%s1 + $0x78] sm:$0xff]
  %v54 = vld [vmem:[%s1 + $0x80] sm:$0xff]
  %v55 = vld [vmem:[%s1 + $0x88] sm:$0xff]
  %v56 = vld [vmem:[%s1 + $0x90] sm:$0xff]
  %v57 = vld [vmem:[%s1 + $0x98] sm:$0xff]
  %v58 = vld [vmem:[%s1 + $0xa0] sm:$0xff]
  %v59 = vld [vmem:[%s1 + $0xa8] sm:$0xff]
  %v60 = vld [vmem:[%s1 + $0xb0] sm:$0xff]
  %v61 = vld [vmem:[%s1 + $0xb8] sm:$0xff]
  %v62 = vld [vmem:[%s1 + $0xc0] sm:$0xff]
  %v63 = vld [vmem:[%s1 + $0xc8] sm:$0xff]
  %v64 = vld [vmem:[%s1 + $0xd0] sm:$0xff]
  %v65 = vld [vmem:[%s1 + $0xd8] sm:$0xff]
  %v66 = vld [vmem:[%s1 + $0xe0] sm:$0xff]
  %v67 = vld [vmem:[%s1 + $0xe8] sm:$0xff]
  %v68 = vld [vmem:[%s1 + $0xf0] sm:$0xff]
  %v69 = vld [vmem:[%s1 + $0xf8] sm:$0xff]
  %v70 = vld [vmem:[%s1 + $0x100] sm:$0xff]
  %v71 = vld [vmem:[%s1 + $0x108] sm:$0xff]
  %v72 = vld [vmem:[%s1 + $0x110] sm:$0xff]
  %v73 = vld [vmem:[%s1 + $0x118] sm:$0xff]
  %v74 = vld [vmem:[%s1 + $0x120] sm:$0xff]
  %v75 = vld [vmem:[%s1 + $0x128] sm:$0xff]
  %v76 = vld [vmem:[%s1 + $0x130] sm:$0xff]
  %v77 = vld [vmem:[%s1 + $0x138] sm:$0xff]
  %v78 = vld [vmem:[%s1 + $0x140] sm:$0xff]
  %v79 = vld [vmem:[%s1 + $0x148] sm:$0xff]
  %v80 = vld [vmem:[%s1 + $0x150] sm:$0xff]
  %v81 = vld [vmem:[%s1 + $0x158] sm:$0xff]
  %v82 = vld [vmem:[%s1 + $0x160] sm:$0xff]
  %v83 = vld [vmem:[%s1 + $0x168] sm:$0xff]
  %v84 = vld [vmem:[%s1 + $0x170] sm:$0xff]
  %v85 = vld [vmem:[%s1 + $0x178] sm:$0xff]
  %v86 = vld [vmem:[%s1 + $0x180] sm:$0xff]
  %v87 = vld [vmem:[%s1 + $0x188] sm:$0xff]
  %v88 = vld [vmem:[%s1 + $0x190] sm:$0xff]
  %v89 = vld [vmem:[%s1 + $0x198] sm:$0xff]
  %v90 = vld [vmem:[%s1 + $0x1a0] sm:$0xff]
  %v91 = vld [vmem:[%s1 + $0x1a8] sm:$0xff]
  %v92 = vld [vmem:[%s1 + $0x1b0] sm:$0xff]
  %v93 = vld [vmem:[%s1 + $0x1b8] sm:$0xff]
  %v94 = vld [vmem:[%s1 + $0x1c0] sm:$0xff]
  %v95 = vld [vmem:[%s1 + $0x1c8] sm:$0xff]
  %v96 = vld [vmem:[%s1 + $0x1d0] sm:$0xff]
  %v97 = vld [vmem:[%s1 + $0x1d8] sm:$0xff]
  %v98 = vld [vmem:[%s1 + $0x1e0] sm:$0xff]
  %v99 = vld [vmem:[%s1 + $0x1e8] sm:$0xff]
  %v100 = vld [vmem:[%s1 + $0x1f0] sm:$0xff]
  %v101 = vld [vmem:[%s1 + $0x1f8] sm:$0xff]
  %v102 = vld [vmem:[%s1 + $0x200] sm:$0xff]
  %v103 = vld [vmem:[%s1 + $0x208] sm:$0xff]
  %v104 = vld [vmem:[%s1 + $0x210] sm:$0xff]
  %v105 = vld [vmem:[%s1 + $0x218] sm:$0xff]
  %v106 = vld [vmem:[%s1 + $0x220] sm:$0xff]
  %v107 = vld [vmem:[%s1 + $0x228] sm:$0xff]
  %v108 = vld [vmem:[%s1 + $0x230] sm:$0xff]
  %v109 = vld [vmem:[%s1 + $0x238] sm:$0xff]
  %v110 = vld [vmem:[%s1 + $0x240] sm:$0xff]
  %v111 = vld [vmem:[%s1 + $0x248] sm:$0xff]
  %v112 = vld [vmem:[%s1 + $0x250] sm:$0xff]
  %v113 = vld [vmem:[%s1 + $0x258] sm:$0xff]
  %v114 = vld [vmem:[%s1 + $0x260] sm:$0xff]
  %v115 = vld [vmem:[%s1 + $0x268] sm:$0xff]
  %v116 = vld [vmem:[%s1 + $0x270] sm:$0xff]
  %v117 = vld [vmem:[%s1 + $0x278] sm:$0xff]
  %v118 = vld [vmem:[%s1 + $0x280] sm:$0xff]
  %v119 = vld [vmem:[%s1 + $0x288] sm:$0xff]
  %s120 = scalar_lea.vmem %s1, 656
  %v121 = vld [vmem:[%s120] ss:$8 sm:$0x3]
  %v123 = vperm.slane %v121, 0
  %v124 = vperm.slane %v121, 1
  %vm127 = vcmask 588800
  %v129 = vsel %vm127, %v13, 0
  %v132 = vsel %vm127, %v16, 0
  %v135 = vsel %vm127, %v19, 0
  %v138 = vsel %vm127, %v22, 0
  %v141 = vsel %vm127, %v25, 0
  %v144 = vsel %vm127, %v28, 0
  %v147 = vsel %vm127, %v31, 0
  %v150 = vsel %vm127, %v34, 0
  %v153 = vsel %vm127, %v37, 0
  %v155 = vand.u32 %v68, 4294901760
  %156 = vmatpush.msra.mxu0 %v155
  %v157 = vand.u32 %v66, 4294901760
  %158 = vmatpush.msra.mxu0 %v157
  %v159 = vand.u32 %v64, 4294901760
  %160 = vmatpush.msra.mxu0 %v159
  %v161 = vand.u32 %v62, 4294901760
  %162 = vmatpush.msra.mxu0 %v161
  %v163 = vand.u32 %v60, 4294901760
  %164 = vmatpush.msra.mxu0 %v163
  %v165 = vand.u32 %v58, 4294901760
  %166 = vmatpush.msra.mxu0 %v165
  %v167 = vand.u32 %v56, 4294901760
  %168 = vmatpush.msra.mxu0 %v167
  %v169 = vand.u32 %v54, 4294901760
  %170 = vmatpush.msra.mxu0 %v169
  %v171 = vand.u32 %v52, 4294901760
  %172 = vmatpush.msra.mxu0 %v171
  %v173 = vand.u32 %v50, 4294901760
  %174 = vmatpush.msra.mxu0 %v173
  %v175 = vand.u32 %v48, 4294901760
  %176 = vmatpush.msra.mxu0 %v175
  %v177 = vand.u32 %v46, 4294901760
  %178 = vmatpush.msra.mxu0 %v177
  %v179 = vand.u32 %v44, 4294901760
  %180 = vmatpush.msra.mxu0 %v179
  %v181 = vand.u32 %v42, 4294901760
  %182 = vmatpush.msra.mxu0 %v181
  %v183 = vand.u32 %v40, 4294901760
  %184 = vmatpush.msra.mxu0 %v183
  %v185 = vand.u32 %v38, 4294901760
  %186 = vmatpush.msra.mxu0 %v185
  %v187 = vand.u32 %v11, 4294901760
  %v188 = vsub.f32 %v11, %v187
  %v189 = vand.u32 %v188, 4294901760
  %v190 = vsub.f32 %v188, %v189
  %v191 = vand.u32 %v190, 4294901760
  %192 = vmatmul.f32.gmra.mxu0 %v191
  %v193 = vpop.f32.mrf.mxu0
  %v194 = vadd.f32 %v123, %v193
  %v195 = vand.u32 %v14, 4294901760
  %v196 = vsub.f32 %v14, %v195
  %v197 = vand.u32 %v196, 4294901760
  %v198 = vsub.f32 %v196, %v197
  %v199 = vand.u32 %v198, 4294901760
  %200 = vmatmul.f32.gmra.mxu0 %v199
  %v201 = vpop.f32.mrf.mxu0
  %v202 = vadd.f32 %v123, %v201
  %v203 = vand.u32 %v17, 4294901760
  %v204 = vsub.f32 %v17, %v203
  %v205 = vand.u32 %v204, 4294901760
  %v206 = vsub.f32 %v204, %v205
  %v207 = vand.u32 %v206, 4294901760
  %208 = vmatmul.f32.gmra.mxu0 %v207
  %v209 = vpop.f32.mrf.mxu0
  %v210 = vadd.f32 %v123, %v209
  %v211 = vand.u32 %v20, 4294901760
  %v212 = vsub.f32 %v20, %v211
  %v213 = vand.u32 %v212, 4294901760
  %v214 = vsub.f32 %v212, %v213
  %v215 = vand.u32 %v214, 4294901760
  %216 = vmatmul.f32.gmra.mxu0 %v215
  %v217 = vpop.f32.mrf.mxu0
  %v218 = vadd.f32 %v123, %v217
  %v219 = vand.u32 %v23, 4294901760
  %v220 = vsub.f32 %v23, %v219
  %v221 = vand.u32 %v220, 4294901760
  %v222 = vsub.f32 %v220, %v221
  %v223 = vand.u32 %v222, 4294901760
  %224 = vmatmul.f32.gmra.mxu0 %v223
  %v225 = vpop.f32.mrf.mxu0
  %v226 = vadd.f32 %v123, %v225
  %v227 = vand.u32 %v26, 4294901760
  %v228 = vsub.f32 %v26, %v227
  %v229 = vand.u32 %v228, 4294901760
  %v230 = vsub.f32 %v228, %v229
  %v231 = vand.u32 %v230, 4294901760
  %232 = vmatmul.f32.gmra.mxu0 %v231
  %v233 = vpop.f32.mrf.mxu0
  %v234 = vadd.f32 %v123, %v233
  %v235 = vand.u32 %v29, 4294901760
  %v236 = vsub.f32 %v29, %v235
  %v237 = vand.u32 %v236, 4294901760
  %v238 = vsub.f32 %v236, %v237
  %v239 = vand.u32 %v238, 4294901760
  %240 = vmatmul.f32.gmra.mxu0 %v239
  %v241 = vpop.f32.mrf.mxu0
  %v242 = vadd.f32 %v123, %v241
  %v243 = vand.u32 %v32, 4294901760
  %v244 = vsub.f32 %v32, %v243
  %v245 = vand.u32 %v244, 4294901760
  %v246 = vsub.f32 %v244, %v245
  %v247 = vand.u32 %v246, 4294901760
  %248 = vmatmul.f32.gmra.mxu0 %v247
  %v249 = vpop.f32.mrf.mxu0
  %v250 = vadd.f32 %v123, %v249
  %v251 = vand.u32 %v35, 4294901760
  %v252 = vsub.f32 %v35, %v251
  %v253 = vand.u32 %v252, 4294901760
  %v254 = vsub.f32 %v252, %v253
  %v255 = vand.u32 %v254, 4294901760
  %256 = vmatmul.f32.gmra.mxu0 %v255
  %v257 = vpop.f32.mrf.mxu0
  %v258 = vadd.f32 %v123, %v257
  %259 = vdwg.mxu0
  %v260 = vand.u32 %v68, 4294901760
  %v261 = vsub.f32 %v68, %v260
  %v262 = vand.u32 %v261, 4294901760
  %v263 = vsub.f32 %v261, %v262
  %v264 = vand.u32 %v263, 4294901760
  %265 = vmatpush.msra.mxu0 %v264
  %v266 = vand.u32 %v66, 4294901760
  %v267 = vsub.f32 %v66, %v266
  %v268 = vand.u32 %v267, 4294901760
  %v269 = vsub.f32 %v267, %v268
  %v270 = vand.u32 %v269, 4294901760
  %271 = vmatpush.msra.mxu0 %v270
  %v272 = vand.u32 %v64, 4294901760
  %v273 = vsub.f32 %v64, %v272
  %v274 = vand.u32 %v273, 4294901760
  %v275 = vsub.f32 %v273, %v274
  %v276 = vand.u32 %v275, 4294901760
  %277 = vmatpush.msra.mxu0 %v276
  %v278 = vand.u32 %v62, 4294901760
  %v279 = vsub.f32 %v62, %v278
  %v280 = vand.u32 %v279, 4294901760
  %v281 = vsub.f32 %v279, %v280
  %v282 = vand.u32 %v281, 4294901760
  %283 = vmatpush.msra.mxu0 %v282
  %v284 = vand.u32 %v60, 4294901760
  %v285 = vsub.f32 %v60, %v284
  %v286 = vand.u32 %v285, 4294901760
  %v287 = vsub.f32 %v285, %v286
  %v288 = vand.u32 %v287, 4294901760
  %289 = vmatpush.msra.mxu0 %v288
  %v290 = vand.u32 %v58, 4294901760
  %v291 = vsub.f32 %v58, %v290
  %v292 = vand.u32 %v291, 4294901760
  %v293 = vsub.f32 %v291, %v292
  %v294 = vand.u32 %v293, 4294901760
  %295 = vmatpush.msra.mxu0 %v294
  %v296 = vand.u32 %v56, 4294901760
  %v297 = vsub.f32 %v56, %v296
  %v298 = vand.u32 %v297, 4294901760
  %v299 = vsub.f32 %v297, %v298
  %v300 = vand.u32 %v299, 4294901760
  %301 = vmatpush.msra.mxu0 %v300
  %v302 = vand.u32 %v54, 4294901760
  %v303 = vsub.f32 %v54, %v302
  %v304 = vand.u32 %v303, 4294901760
  %v305 = vsub.f32 %v303, %v304
  %v306 = vand.u32 %v305, 4294901760
  %307 = vmatpush.msra.mxu0 %v306
  %v308 = vand.u32 %v52, 4294901760
  %v309 = vsub.f32 %v52, %v308
  %v310 = vand.u32 %v309, 4294901760
  %v311 = vsub.f32 %v309, %v310
  %v312 = vand.u32 %v311, 4294901760
  %313 = vmatpush.msra.mxu0 %v312
  %v314 = vand.u32 %v50, 4294901760
  %v315 = vsub.f32 %v50, %v314
  %v316 = vand.u32 %v315, 4294901760
  %v317 = vsub.f32 %v315, %v316
  %v318 = vand.u32 %v317, 4294901760
  %319 = vmatpush.msra.mxu0 %v318
  %v320 = vand.u32 %v48, 4294901760
  %v321 = vsub.f32 %v48, %v320
  %v322 = vand.u32 %v321, 4294901760
  %v323 = vsub.f32 %v321, %v322
  %v324 = vand.u32 %v323, 4294901760
  %325 = vmatpush.msra.mxu0 %v324
  %v326 = vand.u32 %v46, 4294901760
  %v327 = vsub.f32 %v46, %v326
  %v328 = vand.u32 %v327, 4294901760
  %v329 = vsub.f32 %v327, %v328
  %v330 = vand.u32 %v329, 4294901760
  %331 = vmatpush.msra.mxu0 %v330
  %v332 = vand.u32 %v44, 4294901760
  %v333 = vsub.f32 %v44, %v332
  %v334 = vand.u32 %v333, 4294901760
  %v335 = vsub.f32 %v333, %v334
  %v336 = vand.u32 %v335, 4294901760
  %337 = vmatpush.msra.mxu0 %v336
  %v338 = vand.u32 %v42, 4294901760
  %v339 = vsub.f32 %v42, %v338
  %v340 = vand.u32 %v339, 4294901760
  %v341 = vsub.f32 %v339, %v340
  %v342 = vand.u32 %v341, 4294901760
  %343 = vmatpush.msra.mxu0 %v342
  %v344 = vand.u32 %v40, 4294901760
  %v345 = vsub.f32 %v40, %v344
  %v346 = vand.u32 %v345, 4294901760
  %v347 = vsub.f32 %v345, %v346
  %v348 = vand.u32 %v347, 4294901760
  %349 = vmatpush.msra.mxu0 %v348
  %v350 = vand.u32 %v38, 4294901760
  %v351 = vsub.f32 %v38, %v350
  %v352 = vand.u32 %v351, 4294901760
  %v353 = vsub.f32 %v351, %v352
  %v354 = vand.u32 %v353, 4294901760
  %355 = vmatpush.msra.mxu0 %v354
  %v356 = vand.u32 %v11, 4294901760
  %357 = vmatmul.f32.gmra.mxu0 %v356
  %v358 = vpop.f32.mrf.mxu0
  %v359 = vadd.f32 %v194, %v358
  %v360 = vand.u32 %v14, 4294901760
  %361 = vmatmul.f32.gmra.mxu0 %v360
  %v362 = vpop.f32.mrf.mxu0
  %v363 = vadd.f32 %v202, %v362
  %v364 = vand.u32 %v17, 4294901760
  %365 = vmatmul.f32.gmra.mxu0 %v364
  %v366 = vpop.f32.mrf.mxu0
  %v367 = vadd.f32 %v210, %v366
  %v368 = vand.u32 %v20, 4294901760
  %369 = vmatmul.f32.gmra.mxu0 %v368
  %v370 = vpop.f32.mrf.mxu0
  %v371 = vadd.f32 %v218, %v370
  %v372 = vand.u32 %v23, 4294901760
  %373 = vmatmul.f32.gmra.mxu0 %v372
  %v374 = vpop.f32.mrf.mxu0
  %v375 = vadd.f32 %v226, %v374
  %v376 = vand.u32 %v26, 4294901760
  %377 = vmatmul.f32.gmra.mxu0 %v376
  %v378 = vpop.f32.mrf.mxu0
  %v379 = vadd.f32 %v234, %v378
  %v380 = vand.u32 %v29, 4294901760
  %381 = vmatmul.f32.gmra.mxu0 %v380
  %v382 = vpop.f32.mrf.mxu0
  %v383 = vadd.f32 %v242, %v382
  %v384 = vand.u32 %v32, 4294901760
  %385 = vmatmul.f32.gmra.mxu0 %v384
  %v386 = vpop.f32.mrf.mxu0
  %v387 = vadd.f32 %v250, %v386
  %v388 = vand.u32 %v35, 4294901760
  %389 = vmatmul.f32.gmra.mxu0 %v388
  %v390 = vpop.f32.mrf.mxu0
  %v391 = vadd.f32 %v258, %v390
  %392 = vdwg.mxu0
  %v393 = vand.u32 %v68, 4294901760
  %v394 = vsub.f32 %v68, %v393
  %395 = vmatpush.msra.mxu0 %v394
  %v396 = vand.u32 %v66, 4294901760
  %v397 = vsub.f32 %v66, %v396
  %398 = vmatpush.msra.mxu0 %v397
  %v399 = vand.u32 %v64, 4294901760
  %v400 = vsub.f32 %v64, %v399
  %401 = vmatpush.msra.mxu0 %v400
  %v402 = vand.u32 %v62, 4294901760
  %v403 = vsub.f32 %v62, %v402
  %404 = vmatpush.msra.mxu0 %v403
  %v405 = vand.u32 %v60, 4294901760
  %v406 = vsub.f32 %v60, %v405
  %407 = vmatpush.msra.mxu0 %v406
  %v408 = vand.u32 %v58, 4294901760
  %v409 = vsub.f32 %v58, %v408
  %410 = vmatpush.msra.mxu0 %v409
  %v411 = vand.u32 %v56, 4294901760
  %v412 = vsub.f32 %v56, %v411
  %413 = vmatpush.msra.mxu0 %v412
  %v414 = vand.u32 %v54, 4294901760
  %v415 = vsub.f32 %v54, %v414
  %416 = vmatpush.msra.mxu0 %v415
  %v417 = vand.u32 %v52, 4294901760
  %v418 = vsub.f32 %v52, %v417
  %419 = vmatpush.msra.mxu0 %v418
  %v420 = vand.u32 %v50, 4294901760
  %v421 = vsub.f32 %v50, %v420
  %422 = vmatpush.msra.mxu0 %v421
  %v423 = vand.u32 %v48, 4294901760
  %v424 = vsub.f32 %v48, %v423
  %425 = vmatpush.msra.mxu0 %v424
  %v426 = vand.u32 %v46, 4294901760
  %v427 = vsub.f32 %v46, %v426
  %428 = vmatpush.msra.mxu0 %v427
  %v429 = vand.u32 %v44, 4294901760
  %v430 = vsub.f32 %v44, %v429
  %431 = vmatpush.msra.mxu0 %v430
  %v432 = vand.u32 %v42, 4294901760
  %v433 = vsub.f32 %v42, %v432
  %434 = vmatpush.msra.mxu0 %v433
  %v435 = vand.u32 %v40, 4294901760
  %v436 = vsub.f32 %v40, %v435
  %437 = vmatpush.msra.mxu0 %v436
  %v438 = vand.u32 %v38, 4294901760
  %v439 = vsub.f32 %v38, %v438
  %440 = vmatpush.msra.mxu0 %v439
  %v441 = vand.u32 %v11, 4294901760
  %v442 = vsub.f32 %v11, %v441
  %443 = vmatmul.f32.gmra.mxu0 %v442
  %v444 = vpop.f32.mrf.mxu0
  %v445 = vadd.f32 %v359, %v444
  %v446 = vand.u32 %v14, 4294901760
  %v447 = vsub.f32 %v14, %v446
  %448 = vmatmul.f32.gmra.mxu0 %v447
  %v449 = vpop.f32.mrf.mxu0
  %v450 = vadd.f32 %v363, %v449
  %v451 = vand.u32 %v17, 4294901760
  %v452 = vsub.f32 %v17, %v451
  %453 = vmatmul.f32.gmra.mxu0 %v452
  %v454 = vpop.f32.mrf.mxu0
  %v455 = vadd.f32 %v367, %v454
  %v456 = vand.u32 %v20, 4294901760
  %v457 = vsub.f32 %v20, %v456
  %458 = vmatmul.f32.gmra.mxu0 %v457
  %v459 = vpop.f32.mrf.mxu0
  %v460 = vadd.f32 %v371, %v459
  %v461 = vand.u32 %v23, 4294901760
  %v462 = vsub.f32 %v23, %v461
  %463 = vmatmul.f32.gmra.mxu0 %v462
  %v464 = vpop.f32.mrf.mxu0
  %v465 = vadd.f32 %v375, %v464
  %v466 = vand.u32 %v26, 4294901760
  %v467 = vsub.f32 %v26, %v466
  %468 = vmatmul.f32.gmra.mxu0 %v467
  %v469 = vpop.f32.mrf.mxu0
  %v470 = vadd.f32 %v379, %v469
  %v471 = vand.u32 %v29, 4294901760
  %v472 = vsub.f32 %v29, %v471
  %473 = vmatmul.f32.gmra.mxu0 %v472
  %v474 = vpop.f32.mrf.mxu0
  %v475 = vadd.f32 %v383, %v474
  %v476 = vand.u32 %v32, 4294901760
  %v477 = vsub.f32 %v32, %v476
  %478 = vmatmul.f32.gmra.mxu0 %v477
  %v479 = vpop.f32.mrf.mxu0
  %v480 = vadd.f32 %v387, %v479
  %v481 = vand.u32 %v35, 4294901760
  %v482 = vsub.f32 %v35, %v481
  %483 = vmatmul.f32.gmra.mxu0 %v482
  %v484 = vpop.f32.mrf.mxu0
  %v485 = vadd.f32 %v391, %v484
  %486 = vdwg.mxu0
  %v487 = vand.u32 %v68, 4294901760
  %488 = vmatpush.msra.mxu0 %v487
  %v489 = vand.u32 %v66, 4294901760
  %490 = vmatpush.msra.mxu0 %v489
  %v491 = vand.u32 %v64, 4294901760
  %492 = vmatpush.msra.mxu0 %v491
  %v493 = vand.u32 %v62, 4294901760
  %494 = vmatpush.msra.mxu0 %v493
  %v495 = vand.u32 %v60, 4294901760
  %496 = vmatpush.msra.mxu0 %v495
  %v497 = vand.u32 %v58, 4294901760
  %498 = vmatpush.msra.mxu0 %v497
  %v499 = vand.u32 %v56, 4294901760
  %500 = vmatpush.msra.mxu0 %v499
  %v501 = vand.u32 %v54, 4294901760
  %502 = vmatpush.msra.mxu0 %v501
  %v503 = vand.u32 %v52, 4294901760
  %504 = vmatpush.msra.mxu0 %v503
  %v505 = vand.u32 %v50, 4294901760
  %506 = vmatpush.msra.mxu0 %v505
  %v507 = vand.u32 %v48, 4294901760
  %508 = vmatpush.msra.mxu0 %v507
  %v509 = vand.u32 %v46, 4294901760
  %510 = vmatpush.msra.mxu0 %v509
  %v511 = vand.u32 %v44, 4294901760
  %512 = vmatpush.msra.mxu0 %v511
  %v513 = vand.u32 %v42, 4294901760
  %514 = vmatpush.msra.mxu0 %v513
  %v515 = vand.u32 %v40, 4294901760
  %516 = vmatpush.msra.mxu0 %v515
  %v517 = vand.u32 %v38, 4294901760
  %518 = vmatpush.msra.mxu0 %v517
  %v519 = vand.u32 %v11, 4294901760
  %v520 = vsub.f32 %v11, %v519
  %v521 = vand.u32 %v520, 4294901760
  %522 = vmatmul.f32.gmra.mxu0 %v521
  %v523 = vpop.f32.mrf.mxu0
  %v524 = vadd.f32 %v445, %v523
  %v525 = vand.u32 %v14, 4294901760
  %v526 = vsub.f32 %v14, %v525
  %v527 = vand.u32 %v526, 4294901760
  %528 = vmatmul.f32.gmra.mxu0 %v527
  %v529 = vpop.f32.mrf.mxu0
  %v530 = vadd.f32 %v450, %v529
  %v531 = vand.u32 %v17, 4294901760
  %v532 = vsub.f32 %v17, %v531
  %v533 = vand.u32 %v532, 4294901760
  %534 = vmatmul.f32.gmra.mxu0 %v533
  %v535 = vpop.f32.mrf.mxu0
  %v536 = vadd.f32 %v455, %v535
  %v537 = vand.u32 %v20, 4294901760
  %v538 = vsub.f32 %v20, %v537
  %v539 = vand.u32 %v538, 4294901760
  %540 = vmatmul.f32.gmra.mxu0 %v539
  %v541 = vpop.f32.mrf.mxu0
  %v542 = vadd.f32 %v460, %v541
  %v543 = vand.u32 %v23, 4294901760
  %v544 = vsub.f32 %v23, %v543
  %v545 = vand.u32 %v544, 4294901760
  %546 = vmatmul.f32.gmra.mxu0 %v545
  %v547 = vpop.f32.mrf.mxu0
  %v548 = vadd.f32 %v465, %v547
  %v549 = vand.u32 %v26, 4294901760
  %v550 = vsub.f32 %v26, %v549
  %v551 = vand.u32 %v550, 4294901760
  %552 = vmatmul.f32.gmra.mxu0 %v551
  %v553 = vpop.f32.mrf.mxu0
  %v554 = vadd.f32 %v470, %v553
  %v555 = vand.u32 %v29, 4294901760
  %v556 = vsub.f32 %v29, %v555
  %v557 = vand.u32 %v556, 4294901760
  %558 = vmatmul.f32.gmra.mxu0 %v557
  %v559 = vpop.f32.mrf.mxu0
  %v560 = vadd.f32 %v475, %v559
  %v561 = vand.u32 %v32, 4294901760
  %v562 = vsub.f32 %v32, %v561
  %v563 = vand.u32 %v562, 4294901760
  %564 = vmatmul.f32.gmra.mxu0 %v563
  %v565 = vpop.f32.mrf.mxu0
  %v566 = vadd.f32 %v480, %v565
  %v567 = vand.u32 %v35, 4294901760
  %v568 = vsub.f32 %v35, %v567
  %v569 = vand.u32 %v568, 4294901760
  %570 = vmatmul.f32.gmra.mxu0 %v569
  %v571 = vpop.f32.mrf.mxu0
  %v572 = vadd.f32 %v485, %v571
  %573 = vdwg.mxu0
  %v574 = vand.u32 %v68, 4294901760
  %v575 = vsub.f32 %v68, %v574
  %v576 = vand.u32 %v575, 4294901760
  %577 = vmatpush.msra.mxu0 %v576
  %v578 = vand.u32 %v66, 4294901760
  %v579 = vsub.f32 %v66, %v578
  %v580 = vand.u32 %v579, 4294901760
  %581 = vmatpush.msra.mxu0 %v580
  %v582 = vand.u32 %v64, 4294901760
  %v583 = vsub.f32 %v64, %v582
  %v584 = vand.u32 %v583, 4294901760
  %585 = vmatpush.msra.mxu0 %v584
  %v586 = vand.u32 %v62, 4294901760
  %v587 = vsub.f32 %v62, %v586
  %v588 = vand.u32 %v587, 4294901760
  %589 = vmatpush.msra.mxu0 %v588
  %v590 = vand.u32 %v60, 4294901760
  %v591 = vsub.f32 %v60, %v590
  %v592 = vand.u32 %v591, 4294901760
  %593 = vmatpush.msra.mxu0 %v592
  %v594 = vand.u32 %v58, 4294901760
  %v595 = vsub.f32 %v58, %v594
  %v596 = vand.u32 %v595, 4294901760
  %597 = vmatpush.msra.mxu0 %v596
  %v598 = vand.u32 %v56, 4294901760
  %v599 = vsub.f32 %v56, %v598
  %v600 = vand.u32 %v599, 4294901760
  %601 = vmatpush.msra.mxu0 %v600
  %v602 = vand.u32 %v54, 4294901760
  %v603 = vsub.f32 %v54, %v602
  %v604 = vand.u32 %v603, 4294901760
  %605 = vmatpush.msra.mxu0 %v604
  %v606 = vand.u32 %v52, 4294901760
  %v607 = vsub.f32 %v52, %v606
  %v608 = vand.u32 %v607, 4294901760
  %609 = vmatpush.msra.mxu0 %v608
  %v610 = vand.u32 %v50, 4294901760
  %v611 = vsub.f32 %v50, %v610
  %v612 = vand.u32 %v611, 4294901760
  %613 = vmatpush.msra.mxu0 %v612
  %v614 = vand.u32 %v48, 4294901760
  %v615 = vsub.f32 %v48, %v614
  %v616 = vand.u32 %v615, 4294901760
  %617 = vmatpush.msra.mxu0 %v616
  %v618 = vand.u32 %v46, 4294901760
  %v619 = vsub.f32 %v46, %v618
  %v620 = vand.u32 %v619, 4294901760
  %621 = vmatpush.msra.mxu0 %v620
  %v622 = vand.u32 %v44, 4294901760
  %v623 = vsub.f32 %v44, %v622
  %v624 = vand.u32 %v623, 4294901760
  %625 = vmatpush.msra.mxu0 %v624
  %v626 = vand.u32 %v42, 4294901760
  %v627 = vsub.f32 %v42, %v626
  %v628 = vand.u32 %v627, 4294901760
  %629 = vmatpush.msra.mxu0 %v628
  %v630 = vand.u32 %v40, 4294901760
  %v631 = vsub.f32 %v40, %v630
  %v632 = vand.u32 %v631, 4294901760
  %633 = vmatpush.msra.mxu0 %v632
  %v634 = vand.u32 %v38, 4294901760
  %v635 = vsub.f32 %v38, %v634
  %v636 = vand.u32 %v635, 4294901760
  %637 = vmatpush.msra.mxu0 %v636
  %v638 = vand.u32 %v11, 4294901760
  %639 = vmatmul.f32.gmra.mxu0 %v638
  %v640 = vpop.f32.mrf.mxu0
  %v641 = vadd.f32 %v524, %v640
  %v642 = vand.u32 %v14, 4294901760
  %643 = vmatmul.f32.gmra.mxu0 %v642
  %v644 = vpop.f32.mrf.mxu0
  %v645 = vadd.f32 %v530, %v644
  %v646 = vand.u32 %v17, 4294901760
  %647 = vmatmul.f32.gmra.mxu0 %v646
  %v648 = vpop.f32.mrf.mxu0
  %v649 = vadd.f32 %v536, %v648
  %v650 = vand.u32 %v20, 4294901760
  %651 = vmatmul.f32.gmra.mxu0 %v650
  %v652 = vpop.f32.mrf.mxu0
  %v653 = vadd.f32 %v542, %v652
  %v654 = vand.u32 %v23, 4294901760
  %655 = vmatmul.f32.gmra.mxu0 %v654
  %v656 = vpop.f32.mrf.mxu0
  %v657 = vadd.f32 %v548, %v656
  %v658 = vand.u32 %v26, 4294901760
  %659 = vmatmul.f32.gmra.mxu0 %v658
  %v660 = vpop.f32.mrf.mxu0
  %v661 = vadd.f32 %v554, %v660
  %v662 = vand.u32 %v29, 4294901760
  %663 = vmatmul.f32.gmra.mxu0 %v662
  %v664 = vpop.f32.mrf.mxu0
  %v665 = vadd.f32 %v560, %v664
  %v666 = vand.u32 %v32, 4294901760
  %667 = vmatmul.f32.gmra.mxu0 %v666
  %v668 = vpop.f32.mrf.mxu0
  %v669 = vadd.f32 %v566, %v668
  %v670 = vand.u32 %v35, 4294901760
  %671 = vmatmul.f32.gmra.mxu0 %v670
  %v672 = vpop.f32.mrf.mxu0
  %v673 = vadd.f32 %v572, %v672
  %674 = vdwg.mxu0
  %v675 = vand.u32 %v68, 4294901760
  %676 = vmatpush.msra.mxu0 %v675
  %v677 = vand.u32 %v66, 4294901760
  %678 = vmatpush.msra.mxu0 %v677
  %v679 = vand.u32 %v64, 4294901760
  %680 = vmatpush.msra.mxu0 %v679
  %v681 = vand.u32 %v62, 4294901760
  %682 = vmatpush.msra.mxu0 %v681
  %v683 = vand.u32 %v60, 4294901760
  %684 = vmatpush.msra.mxu0 %v683
  %v685 = vand.u32 %v58, 4294901760
  %686 = vmatpush.msra.mxu0 %v685
  %v687 = vand.u32 %v56, 4294901760
  %688 = vmatpush.msra.mxu0 %v687
  %v689 = vand.u32 %v54, 4294901760
  %690 = vmatpush.msra.mxu0 %v689
  %v691 = vand.u32 %v52, 4294901760
  %692 = vmatpush.msra.mxu0 %v691
  %v693 = vand.u32 %v50, 4294901760
  %694 = vmatpush.msra.mxu0 %v693
  %v695 = vand.u32 %v48, 4294901760
  %696 = vmatpush.msra.mxu0 %v695
  %v697 = vand.u32 %v46, 4294901760
  %698 = vmatpush.msra.mxu0 %v697
  %v699 = vand.u32 %v44, 4294901760
  %700 = vmatpush.msra.mxu0 %v699
  %v701 = vand.u32 %v42, 4294901760
  %702 = vmatpush.msra.mxu0 %v701
  %v703 = vand.u32 %v40, 4294901760
  %704 = vmatpush.msra.mxu0 %v703
  %v705 = vand.u32 %v38, 4294901760
  %706 = vmatpush.msra.mxu0 %v705
  %v707 = vand.u32 %v11, 4294901760
  %708 = vmatmul.f32.gmra.mxu0 %v707
  %v709 = vpop.f32.mrf.mxu0
  %v710 = vadd.f32 %v641, %v709
  %v711 = vand.u32 %v14, 4294901760
  %712 = vmatmul.f32.gmra.mxu0 %v711
  %v713 = vpop.f32.mrf.mxu0
  %v714 = vadd.f32 %v645, %v713
  %v715 = vand.u32 %v17, 4294901760
  %716 = vmatmul.f32.gmra.mxu0 %v715
  %v717 = vpop.f32.mrf.mxu0
  %v718 = vadd.f32 %v649, %v717
  %v719 = vand.u32 %v20, 4294901760
  %720 = vmatmul.f32.gmra.mxu0 %v719
  %v721 = vpop.f32.mrf.mxu0
  %v722 = vadd.f32 %v653, %v721
  %v723 = vand.u32 %v23, 4294901760
  %724 = vmatmul.f32.gmra.mxu0 %v723
  %v725 = vpop.f32.mrf.mxu0
  %v726 = vadd.f32 %v657, %v725
  %v727 = vand.u32 %v26, 4294901760
  %728 = vmatmul.f32.gmra.mxu0 %v727
  %v729 = vpop.f32.mrf.mxu0
  %v730 = vadd.f32 %v661, %v729
  %v731 = vand.u32 %v29, 4294901760
  %732 = vmatmul.f32.gmra.mxu0 %v731
  %v733 = vpop.f32.mrf.mxu0
  %v734 = vadd.f32 %v665, %v733
  %v735 = vand.u32 %v32, 4294901760
  %736 = vmatmul.f32.gmra.mxu0 %v735
  %v737 = vpop.f32.mrf.mxu0
  %v738 = vadd.f32 %v669, %v737
  %v739 = vand.u32 %v35, 4294901760
  %740 = vmatmul.f32.gmra.mxu0 %v739
  %v741 = vpop.f32.mrf.mxu0
  %v742 = vadd.f32 %v673, %v741
  %743 = vdwg.mxu0
  %v744 = vand.u32 %v100, 4294901760
  %745 = vmatpush.msra.mxu0 %v744
  %v746 = vand.u32 %v98, 4294901760
  %747 = vmatpush.msra.mxu0 %v746
  %v748 = vand.u32 %v96, 4294901760
  %749 = vmatpush.msra.mxu0 %v748
  %v750 = vand.u32 %v94, 4294901760
  %751 = vmatpush.msra.mxu0 %v750
  %v752 = vand.u32 %v92, 4294901760
  %753 = vmatpush.msra.mxu0 %v752
  %v754 = vand.u32 %v90, 4294901760
  %755 = vmatpush.msra.mxu0 %v754
  %v756 = vand.u32 %v88, 4294901760
  %757 = vmatpush.msra.mxu0 %v756
  %v758 = vand.u32 %v86, 4294901760
  %759 = vmatpush.msra.mxu0 %v758
  %v760 = vand.u32 %v84, 4294901760
  %761 = vmatpush.msra.mxu0 %v760
  %v762 = vand.u32 %v82, 4294901760
  %763 = vmatpush.msra.mxu0 %v762
  %v764 = vand.u32 %v80, 4294901760
  %765 = vmatpush.msra.mxu0 %v764
  %v766 = vand.u32 %v78, 4294901760
  %767 = vmatpush.msra.mxu0 %v766
  %v768 = vand.u32 %v76, 4294901760
  %769 = vmatpush.msra.mxu0 %v768
  %v770 = vand.u32 %v74, 4294901760
  %771 = vmatpush.msra.mxu0 %v770
  %v772 = vand.u32 %v72, 4294901760
  %773 = vmatpush.msra.mxu0 %v772
  %v774 = vand.u32 %v70, 4294901760
  %775 = vmatpush.msra.mxu0 %v774
  %v776 = vand.u32 %v12, 4294901760
  %v777 = vsub.f32 %v12, %v776
  %v778 = vand.u32 %v777, 4294901760
  %v779 = vsub.f32 %v777, %v778
  %v780 = vand.u32 %v779, 4294901760
  %781 = vmatmul.f32.gmra.mxu0 %v780
  %v782 = vpop.f32.mrf.mxu0
  %v783 = vadd.f32 %v710, %v782
  %v784 = vand.u32 %v15, 4294901760
  %v785 = vsub.f32 %v15, %v784
  %v786 = vand.u32 %v785, 4294901760
  %v787 = vsub.f32 %v785, %v786
  %v788 = vand.u32 %v787, 4294901760
  %789 = vmatmul.f32.gmra.mxu0 %v788
  %v790 = vpop.f32.mrf.mxu0
  %v791 = vadd.f32 %v714, %v790
  %v792 = vand.u32 %v18, 4294901760
  %v793 = vsub.f32 %v18, %v792
  %v794 = vand.u32 %v793, 4294901760
  %v795 = vsub.f32 %v793, %v794
  %v796 = vand.u32 %v795, 4294901760
  %797 = vmatmul.f32.gmra.mxu0 %v796
  %v798 = vpop.f32.mrf.mxu0
  %v799 = vadd.f32 %v718, %v798
  %v800 = vand.u32 %v21, 4294901760
  %v801 = vsub.f32 %v21, %v800
  %v802 = vand.u32 %v801, 4294901760
  %v803 = vsub.f32 %v801, %v802
  %v804 = vand.u32 %v803, 4294901760
  %805 = vmatmul.f32.gmra.mxu0 %v804
  %v806 = vpop.f32.mrf.mxu0
  %v807 = vadd.f32 %v722, %v806
  %v808 = vand.u32 %v24, 4294901760
  %v809 = vsub.f32 %v24, %v808
  %v810 = vand.u32 %v809, 4294901760
  %v811 = vsub.f32 %v809, %v810
  %v812 = vand.u32 %v811, 4294901760
  %813 = vmatmul.f32.gmra.mxu0 %v812
  %v814 = vpop.f32.mrf.mxu0
  %v815 = vadd.f32 %v726, %v814
  %v816 = vand.u32 %v27, 4294901760
  %v817 = vsub.f32 %v27, %v816
  %v818 = vand.u32 %v817, 4294901760
  %v819 = vsub.f32 %v817, %v818
  %v820 = vand.u32 %v819, 4294901760
  %821 = vmatmul.f32.gmra.mxu0 %v820
  %v822 = vpop.f32.mrf.mxu0
  %v823 = vadd.f32 %v730, %v822
  %v824 = vand.u32 %v30, 4294901760
  %v825 = vsub.f32 %v30, %v824
  %v826 = vand.u32 %v825, 4294901760
  %v827 = vsub.f32 %v825, %v826
  %v828 = vand.u32 %v827, 4294901760
  %829 = vmatmul.f32.gmra.mxu0 %v828
  %v830 = vpop.f32.mrf.mxu0
  %v831 = vadd.f32 %v734, %v830
  %v832 = vand.u32 %v33, 4294901760
  %v833 = vsub.f32 %v33, %v832
  %v834 = vand.u32 %v833, 4294901760
  %v835 = vsub.f32 %v833, %v834
  %v836 = vand.u32 %v835, 4294901760
  %837 = vmatmul.f32.gmra.mxu0 %v836
  %v838 = vpop.f32.mrf.mxu0
  %v839 = vadd.f32 %v738, %v838
  %v840 = vand.u32 %v36, 4294901760
  %v841 = vsub.f32 %v36, %v840
  %v842 = vand.u32 %v841, 4294901760
  %v843 = vsub.f32 %v841, %v842
  %v844 = vand.u32 %v843, 4294901760
  %845 = vmatmul.f32.gmra.mxu0 %v844
  %v846 = vpop.f32.mrf.mxu0
  %v847 = vadd.f32 %v742, %v846
  %848 = vdwg.mxu0
  %v849 = vand.u32 %v100, 4294901760
  %v850 = vsub.f32 %v100, %v849
  %v851 = vand.u32 %v850, 4294901760
  %v852 = vsub.f32 %v850, %v851
  %v853 = vand.u32 %v852, 4294901760
  %854 = vmatpush.msra.mxu0 %v853
  %v855 = vand.u32 %v98, 4294901760
  %v856 = vsub.f32 %v98, %v855
  %v857 = vand.u32 %v856, 4294901760
  %v858 = vsub.f32 %v856, %v857
  %v859 = vand.u32 %v858, 4294901760
  %860 = vmatpush.msra.mxu0 %v859
  %v861 = vand.u32 %v96, 4294901760
  %v862 = vsub.f32 %v96, %v861
  %v863 = vand.u32 %v862, 4294901760
  %v864 = vsub.f32 %v862, %v863
  %v865 = vand.u32 %v864, 4294901760
  %866 = vmatpush.msra.mxu0 %v865
  %v867 = vand.u32 %v94, 4294901760
  %v868 = vsub.f32 %v94, %v867
  %v869 = vand.u32 %v868, 4294901760
  %v870 = vsub.f32 %v868, %v869
  %v871 = vand.u32 %v870, 4294901760
  %872 = vmatpush.msra.mxu0 %v871
  %v873 = vand.u32 %v92, 4294901760
  %v874 = vsub.f32 %v92, %v873
  %v875 = vand.u32 %v874, 4294901760
  %v876 = vsub.f32 %v874, %v875
  %v877 = vand.u32 %v876, 4294901760
  %878 = vmatpush.msra.mxu0 %v877
  %v879 = vand.u32 %v90, 4294901760
  %v880 = vsub.f32 %v90, %v879
  %v881 = vand.u32 %v880, 4294901760
  %v882 = vsub.f32 %v880, %v881
  %v883 = vand.u32 %v882, 4294901760
  %884 = vmatpush.msra.mxu0 %v883
  %v885 = vand.u32 %v88, 4294901760
  %v886 = vsub.f32 %v88, %v885
  %v887 = vand.u32 %v886, 4294901760
  %v888 = vsub.f32 %v886, %v887
  %v889 = vand.u32 %v888, 4294901760
  %890 = vmatpush.msra.mxu0 %v889
  %v891 = vand.u32 %v86, 4294901760
  %v892 = vsub.f32 %v86, %v891
  %v893 = vand.u32 %v892, 4294901760
  %v894 = vsub.f32 %v892, %v893
  %v895 = vand.u32 %v894, 4294901760
  %896 = vmatpush.msra.mxu0 %v895
  %v897 = vand.u32 %v84, 4294901760
  %v898 = vsub.f32 %v84, %v897
  %v899 = vand.u32 %v898, 4294901760
  %v900 = vsub.f32 %v898, %v899
  %v901 = vand.u32 %v900, 4294901760
  %902 = vmatpush.msra.mxu0 %v901
  %v903 = vand.u32 %v82, 4294901760
  %v904 = vsub.f32 %v82, %v903
  %v905 = vand.u32 %v904, 4294901760
  %v906 = vsub.f32 %v904, %v905
  %v907 = vand.u32 %v906, 4294901760
  %908 = vmatpush.msra.mxu0 %v907
  %v909 = vand.u32 %v80, 4294901760
  %v910 = vsub.f32 %v80, %v909
  %v911 = vand.u32 %v910, 4294901760
  %v912 = vsub.f32 %v910, %v911
  %v913 = vand.u32 %v912, 4294901760
  %914 = vmatpush.msra.mxu0 %v913
  %v915 = vand.u32 %v78, 4294901760
  %v916 = vsub.f32 %v78, %v915
  %v917 = vand.u32 %v916, 4294901760
  %v918 = vsub.f32 %v916, %v917
  %v919 = vand.u32 %v918, 4294901760
  %920 = vmatpush.msra.mxu0 %v919
  %v921 = vand.u32 %v76, 4294901760
  %v922 = vsub.f32 %v76, %v921
  %v923 = vand.u32 %v922, 4294901760
  %v924 = vsub.f32 %v922, %v923
  %v925 = vand.u32 %v924, 4294901760
  %926 = vmatpush.msra.mxu0 %v925
  %v927 = vand.u32 %v74, 4294901760
  %v928 = vsub.f32 %v74, %v927
  %v929 = vand.u32 %v928, 4294901760
  %v930 = vsub.f32 %v928, %v929
  %v931 = vand.u32 %v930, 4294901760
  %932 = vmatpush.msra.mxu0 %v931
  %v933 = vand.u32 %v72, 4294901760
  %v934 = vsub.f32 %v72, %v933
  %v935 = vand.u32 %v934, 4294901760
  %v936 = vsub.f32 %v934, %v935
  %v937 = vand.u32 %v936, 4294901760
  %938 = vmatpush.msra.mxu0 %v937
  %v939 = vand.u32 %v70, 4294901760
  %v940 = vsub.f32 %v70, %v939
  %v941 = vand.u32 %v940, 4294901760
  %v942 = vsub.f32 %v940, %v941
  %v943 = vand.u32 %v942, 4294901760
  %944 = vmatpush.msra.mxu0 %v943
  %v945 = vand.u32 %v12, 4294901760
  %946 = vmatmul.f32.gmra.mxu0 %v945
  %v947 = vpop.f32.mrf.mxu0
  %v948 = vadd.f32 %v783, %v947
  %v949 = vand.u32 %v15, 4294901760
  %950 = vmatmul.f32.gmra.mxu0 %v949
  %v951 = vpop.f32.mrf.mxu0
  %v952 = vadd.f32 %v791, %v951
  %v953 = vand.u32 %v18, 4294901760
  %954 = vmatmul.f32.gmra.mxu0 %v953
  %v955 = vpop.f32.mrf.mxu0
  %v956 = vadd.f32 %v799, %v955
  %v957 = vand.u32 %v21, 4294901760
  %958 = vmatmul.f32.gmra.mxu0 %v957
  %v959 = vpop.f32.mrf.mxu0
  %v960 = vadd.f32 %v807, %v959
  %v961 = vand.u32 %v24, 4294901760
  %962 = vmatmul.f32.gmra.mxu0 %v961
  %v963 = vpop.f32.mrf.mxu0
  %v964 = vadd.f32 %v815, %v963
  %v965 = vand.u32 %v27, 4294901760
  %966 = vmatmul.f32.gmra.mxu0 %v965
  %v967 = vpop.f32.mrf.mxu0
  %v968 = vadd.f32 %v823, %v967
  %v969 = vand.u32 %v30, 4294901760
  %970 = vmatmul.f32.gmra.mxu0 %v969
  %v971 = vpop.f32.mrf.mxu0
  %v972 = vadd.f32 %v831, %v971
  %v973 = vand.u32 %v33, 4294901760
  %974 = vmatmul.f32.gmra.mxu0 %v973
  %v975 = vpop.f32.mrf.mxu0
  %v976 = vadd.f32 %v839, %v975
  %v977 = vand.u32 %v36, 4294901760
  %978 = vmatmul.f32.gmra.mxu0 %v977
  %v979 = vpop.f32.mrf.mxu0
  %v980 = vadd.f32 %v847, %v979
  %981 = vdwg.mxu0
  %v982 = vand.u32 %v100, 4294901760
  %v983 = vsub.f32 %v100, %v982
  %984 = vmatpush.msra.mxu0 %v983
  %v985 = vand.u32 %v98, 4294901760
  %v986 = vsub.f32 %v98, %v985
  %987 = vmatpush.msra.mxu0 %v986
  %v988 = vand.u32 %v96, 4294901760
  %v989 = vsub.f32 %v96, %v988
  %990 = vmatpush.msra.mxu0 %v989
  %v991 = vand.u32 %v94, 4294901760
  %v992 = vsub.f32 %v94, %v991
  %993 = vmatpush.msra.mxu0 %v992
  %v994 = vand.u32 %v92, 4294901760
  %v995 = vsub.f32 %v92, %v994
  %996 = vmatpush.msra.mxu0 %v995
  %v997 = vand.u32 %v90, 4294901760
  %v998 = vsub.f32 %v90, %v997
  %999 = vmatpush.msra.mxu0 %v998
  %v1000 = vand.u32 %v88, 4294901760
  %v1001 = vsub.f32 %v88, %v1000
  %1002 = vmatpush.msra.mxu0 %v1001
  %v1003 = vand.u32 %v86, 4294901760
  %v1004 = vsub.f32 %v86, %v1003
  %1005 = vmatpush.msra.mxu0 %v1004
  %v1006 = vand.u32 %v84, 4294901760
  %v1007 = vsub.f32 %v84, %v1006
  %1008 = vmatpush.msra.mxu0 %v1007
  %v1009 = vand.u32 %v82, 4294901760
  %v1010 = vsub.f32 %v82, %v1009
  %1011 = vmatpush.msra.mxu0 %v1010
  %v1012 = vand.u32 %v80, 4294901760
  %v1013 = vsub.f32 %v80, %v1012
  %1014 = vmatpush.msra.mxu0 %v1013
  %v1015 = vand.u32 %v78, 4294901760
  %v1016 = vsub.f32 %v78, %v1015
  %1017 = vmatpush.msra.mxu0 %v1016
  %v1018 = vand.u32 %v76, 4294901760
  %v1019 = vsub.f32 %v76, %v1018
  %1020 = vmatpush.msra.mxu0 %v1019
  %v1021 = vand.u32 %v74, 4294901760
  %v1022 = vsub.f32 %v74, %v1021
  %1023 = vmatpush.msra.mxu0 %v1022
  %v1024 = vand.u32 %v72, 4294901760
  %v1025 = vsub.f32 %v72, %v1024
  %1026 = vmatpush.msra.mxu0 %v1025
  %v1027 = vand.u32 %v70, 4294901760
  %v1028 = vsub.f32 %v70, %v1027
  %1029 = vmatpush.msra.mxu0 %v1028
  %v1030 = vand.u32 %v12, 4294901760
  %v1031 = vsub.f32 %v12, %v1030
  %1032 = vmatmul.f32.gmra.mxu0 %v1031
  %v1033 = vpop.f32.mrf.mxu0
  %v1034 = vadd.f32 %v948, %v1033
  %v1035 = vand.u32 %v15, 4294901760
  %v1036 = vsub.f32 %v15, %v1035
  %1037 = vmatmul.f32.gmra.mxu0 %v1036
  %v1038 = vpop.f32.mrf.mxu0
  %v1039 = vadd.f32 %v952, %v1038
  %v1040 = vand.u32 %v18, 4294901760
  %v1041 = vsub.f32 %v18, %v1040
  %1042 = vmatmul.f32.gmra.mxu0 %v1041
  %v1043 = vpop.f32.mrf.mxu0
  %v1044 = vadd.f32 %v956, %v1043
  %v1045 = vand.u32 %v21, 4294901760
  %v1046 = vsub.f32 %v21, %v1045
  %1047 = vmatmul.f32.gmra.mxu0 %v1046
  %v1048 = vpop.f32.mrf.mxu0
  %v1049 = vadd.f32 %v960, %v1048
  %v1050 = vand.u32 %v24, 4294901760
  %v1051 = vsub.f32 %v24, %v1050
  %1052 = vmatmul.f32.gmra.mxu0 %v1051
  %v1053 = vpop.f32.mrf.mxu0
  %v1054 = vadd.f32 %v964, %v1053
  %v1055 = vand.u32 %v27, 4294901760
  %v1056 = vsub.f32 %v27, %v1055
  %1057 = vmatmul.f32.gmra.mxu0 %v1056
  %v1058 = vpop.f32.mrf.mxu0
  %v1059 = vadd.f32 %v968, %v1058
  %v1060 = vand.u32 %v30, 4294901760
  %v1061 = vsub.f32 %v30, %v1060
  %1062 = vmatmul.f32.gmra.mxu0 %v1061
  %v1063 = vpop.f32.mrf.mxu0
  %v1064 = vadd.f32 %v972, %v1063
  %v1065 = vand.u32 %v33, 4294901760
  %v1066 = vsub.f32 %v33, %v1065
  %1067 = vmatmul.f32.gmra.mxu0 %v1066
  %v1068 = vpop.f32.mrf.mxu0
  %v1069 = vadd.f32 %v976, %v1068
  %v1070 = vand.u32 %v36, 4294901760
  %v1071 = vsub.f32 %v36, %v1070
  %1072 = vmatmul.f32.gmra.mxu0 %v1071
  %v1073 = vpop.f32.mrf.mxu0
  %v1074 = vadd.f32 %v980, %v1073
  %1075 = vdwg.mxu0
  %v1076 = vand.u32 %v100, 4294901760
  %1077 = vmatpush.msra.mxu0 %v1076
  %v1078 = vand.u32 %v98, 4294901760
  %1079 = vmatpush.msra.mxu0 %v1078
  %v1080 = vand.u32 %v96, 4294901760
  %1081 = vmatpush.msra.mxu0 %v1080
  %v1082 = vand.u32 %v94, 4294901760
  %1083 = vmatpush.msra.mxu0 %v1082
  %v1084 = vand.u32 %v92, 4294901760
  %1085 = vmatpush.msra.mxu0 %v1084
  %v1086 = vand.u32 %v90, 4294901760
  %1087 = vmatpush.msra.mxu0 %v1086
  %v1088 = vand.u32 %v88, 4294901760
  %1089 = vmatpush.msra.mxu0 %v1088
  %v1090 = vand.u32 %v86, 4294901760
  %1091 = vmatpush.msra.mxu0 %v1090
  %v1092 = vand.u32 %v84, 4294901760
  %1093 = vmatpush.msra.mxu0 %v1092
  %v1094 = vand.u32 %v82, 4294901760
  %1095 = vmatpush.msra.mxu0 %v1094
  %v1096 = vand.u32 %v80, 4294901760
  %1097 = vmatpush.msra.mxu0 %v1096
  %v1098 = vand.u32 %v78, 4294901760
  %1099 = vmatpush.msra.mxu0 %v1098
  %v1100 = vand.u32 %v76, 4294901760
  %1101 = vmatpush.msra.mxu0 %v1100
  %v1102 = vand.u32 %v74, 4294901760
  %1103 = vmatpush.msra.mxu0 %v1102
  %v1104 = vand.u32 %v72, 4294901760
  %1105 = vmatpush.msra.mxu0 %v1104
  %v1106 = vand.u32 %v70, 4294901760
  %1107 = vmatpush.msra.mxu0 %v1106
  %v1108 = vand.u32 %v12, 4294901760
  %v1109 = vsub.f32 %v12, %v1108
  %v1110 = vand.u32 %v1109, 4294901760
  %1111 = vmatmul.f32.gmra.mxu0 %v1110
  %v1112 = vpop.f32.mrf.mxu0
  %v1113 = vadd.f32 %v1034, %v1112
  %v1114 = vand.u32 %v15, 4294901760
  %v1115 = vsub.f32 %v15, %v1114
  %v1116 = vand.u32 %v1115, 4294901760
  %1117 = vmatmul.f32.gmra.mxu0 %v1116
  %v1118 = vpop.f32.mrf.mxu0
  %v1119 = vadd.f32 %v1039, %v1118
  %v1120 = vand.u32 %v18, 4294901760
  %v1121 = vsub.f32 %v18, %v1120
  %v1122 = vand.u32 %v1121, 4294901760
  %1123 = vmatmul.f32.gmra.mxu0 %v1122
  %v1124 = vpop.f32.mrf.mxu0
  %v1125 = vadd.f32 %v1044, %v1124
  %v1126 = vand.u32 %v21, 4294901760
  %v1127 = vsub.f32 %v21, %v1126
  %v1128 = vand.u32 %v1127, 4294901760
  %1129 = vmatmul.f32.gmra.mxu0 %v1128
  %v1130 = vpop.f32.mrf.mxu0
  %v1131 = vadd.f32 %v1049, %v1130
  %v1132 = vand.u32 %v24, 4294901760
  %v1133 = vsub.f32 %v24, %v1132
  %v1134 = vand.u32 %v1133, 4294901760
  %1135 = vmatmul.f32.gmra.mxu0 %v1134
  %v1136 = vpop.f32.mrf.mxu0
  %v1137 = vadd.f32 %v1054, %v1136
  %v1138 = vand.u32 %v27, 4294901760
  %v1139 = vsub.f32 %v27, %v1138
  %v1140 = vand.u32 %v1139, 4294901760
  %1141 = vmatmul.f32.gmra.mxu0 %v1140
  %v1142 = vpop.f32.mrf.mxu0
  %v1143 = vadd.f32 %v1059, %v1142
  %v1144 = vand.u32 %v30, 4294901760
  %v1145 = vsub.f32 %v30, %v1144
  %v1146 = vand.u32 %v1145, 4294901760
  %1147 = vmatmul.f32.gmra.mxu0 %v1146
  %v1148 = vpop.f32.mrf.mxu0
  %v1149 = vadd.f32 %v1064, %v1148
  %v1150 = vand.u32 %v33, 4294901760
  %v1151 = vsub.f32 %v33, %v1150
  %v1152 = vand.u32 %v1151, 4294901760
  %1153 = vmatmul.f32.gmra.mxu0 %v1152
  %v1154 = vpop.f32.mrf.mxu0
  %v1155 = vadd.f32 %v1069, %v1154
  %v1156 = vand.u32 %v36, 4294901760
  %v1157 = vsub.f32 %v36, %v1156
  %v1158 = vand.u32 %v1157, 4294901760
  %1159 = vmatmul.f32.gmra.mxu0 %v1158
  %v1160 = vpop.f32.mrf.mxu0
  %v1161 = vadd.f32 %v1074, %v1160
  %1162 = vdwg.mxu0
  %v1163 = vand.u32 %v100, 4294901760
  %v1164 = vsub.f32 %v100, %v1163
  %v1165 = vand.u32 %v1164, 4294901760
  %1166 = vmatpush.msra.mxu0 %v1165
  %v1167 = vand.u32 %v98, 4294901760
  %v1168 = vsub.f32 %v98, %v1167
  %v1169 = vand.u32 %v1168, 4294901760
  %1170 = vmatpush.msra.mxu0 %v1169
  %v1171 = vand.u32 %v96, 4294901760
  %v1172 = vsub.f32 %v96, %v1171
  %v1173 = vand.u32 %v1172, 4294901760
  %1174 = vmatpush.msra.mxu0 %v1173
  %v1175 = vand.u32 %v94, 4294901760
  %v1176 = vsub.f32 %v94, %v1175
  %v1177 = vand.u32 %v1176, 4294901760
  %1178 = vmatpush.msra.mxu0 %v1177
  %v1179 = vand.u32 %v92, 4294901760
  %v1180 = vsub.f32 %v92, %v1179
  %v1181 = vand.u32 %v1180, 4294901760
  %1182 = vmatpush.msra.mxu0 %v1181
  %v1183 = vand.u32 %v90, 4294901760
  %v1184 = vsub.f32 %v90, %v1183
  %v1185 = vand.u32 %v1184, 4294901760
  %1186 = vmatpush.msra.mxu0 %v1185
  %v1187 = vand.u32 %v88, 4294901760
  %v1188 = vsub.f32 %v88, %v1187
  %v1189 = vand.u32 %v1188, 4294901760
  %1190 = vmatpush.msra.mxu0 %v1189
  %v1191 = vand.u32 %v86, 4294901760
  %v1192 = vsub.f32 %v86, %v1191
  %v1193 = vand.u32 %v1192, 4294901760
  %1194 = vmatpush.msra.mxu0 %v1193
  %v1195 = vand.u32 %v84, 4294901760
  %v1196 = vsub.f32 %v84, %v1195
  %v1197 = vand.u32 %v1196, 4294901760
  %1198 = vmatpush.msra.mxu0 %v1197
  %v1199 = vand.u32 %v82, 4294901760
  %v1200 = vsub.f32 %v82, %v1199
  %v1201 = vand.u32 %v1200, 4294901760
  %1202 = vmatpush.msra.mxu0 %v1201
  %v1203 = vand.u32 %v80, 4294901760
  %v1204 = vsub.f32 %v80, %v1203
  %v1205 = vand.u32 %v1204, 4294901760
  %1206 = vmatpush.msra.mxu0 %v1205
  %v1207 = vand.u32 %v78, 4294901760
  %v1208 = vsub.f32 %v78, %v1207
  %v1209 = vand.u32 %v1208, 4294901760
  %1210 = vmatpush.msra.mxu0 %v1209
  %v1211 = vand.u32 %v76, 4294901760
  %v1212 = vsub.f32 %v76, %v1211
  %v1213 = vand.u32 %v1212, 4294901760
  %1214 = vmatpush.msra.mxu0 %v1213
  %v1215 = vand.u32 %v74, 4294901760
  %v1216 = vsub.f32 %v74, %v1215
  %v1217 = vand.u32 %v1216, 4294901760
  %1218 = vmatpush.msra.mxu0 %v1217
  %v1219 = vand.u32 %v72, 4294901760
  %v1220 = vsub.f32 %v72, %v1219
  %v1221 = vand.u32 %v1220, 4294901760
  %1222 = vmatpush.msra.mxu0 %v1221
  %v1223 = vand.u32 %v70, 4294901760
  %v1224 = vsub.f32 %v70, %v1223
  %v1225 = vand.u32 %v1224, 4294901760
  %1226 = vmatpush.msra.mxu0 %v1225
  %v1227 = vand.u32 %v12, 4294901760
  %1228 = vmatmul.f32.gmra.mxu0 %v1227
  %v1229 = vpop.f32.mrf.mxu0
  %v1230 = vadd.f32 %v1113, %v1229
  %v1231 = vand.u32 %v15, 4294901760
  %1232 = vmatmul.f32.gmra.mxu0 %v1231
  %v1233 = vpop.f32.mrf.mxu0
  %v1234 = vadd.f32 %v1119, %v1233
  %v1235 = vand.u32 %v18, 4294901760
  %1236 = vmatmul.f32.gmra.mxu0 %v1235
  %v1237 = vpop.f32.mrf.mxu0
  %v1238 = vadd.f32 %v1125, %v1237
  %v1239 = vand.u32 %v21, 4294901760
  %1240 = vmatmul.f32.gmra.mxu0 %v1239
  %v1241 = vpop.f32.mrf.mxu0
  %v1242 = vadd.f32 %v1131, %v1241
  %v1243 = vand.u32 %v24, 4294901760
  %1244 = vmatmul.f32.gmra.mxu0 %v1243
  %v1245 = vpop.f32.mrf.mxu0
  %v1246 = vadd.f32 %v1137, %v1245
  %v1247 = vand.u32 %v27, 4294901760
  %1248 = vmatmul.f32.gmra.mxu0 %v1247
  %v1249 = vpop.f32.mrf.mxu0
  %v1250 = vadd.f32 %v1143, %v1249
  %v1251 = vand.u32 %v30, 4294901760
  %1252 = vmatmul.f32.gmra.mxu0 %v1251
  %v1253 = vpop.f32.mrf.mxu0
  %v1254 = vadd.f32 %v1149, %v1253
  %v1255 = vand.u32 %v33, 4294901760
  %1256 = vmatmul.f32.gmra.mxu0 %v1255
  %v1257 = vpop.f32.mrf.mxu0
  %v1258 = vadd.f32 %v1155, %v1257
  %v1259 = vand.u32 %v36, 4294901760
  %1260 = vmatmul.f32.gmra.mxu0 %v1259
  %v1261 = vpop.f32.mrf.mxu0
  %v1262 = vadd.f32 %v1161, %v1261
  %1263 = vdwg.mxu0
  %v1264 = vand.u32 %v100, 4294901760
  %1265 = vmatpush.msra.mxu0 %v1264
  %v1266 = vand.u32 %v98, 4294901760
  %1267 = vmatpush.msra.mxu0 %v1266
  %v1268 = vand.u32 %v96, 4294901760
  %1269 = vmatpush.msra.mxu0 %v1268
  %v1270 = vand.u32 %v94, 4294901760
  %1271 = vmatpush.msra.mxu0 %v1270
  %v1272 = vand.u32 %v92, 4294901760
  %1273 = vmatpush.msra.mxu0 %v1272
  %v1274 = vand.u32 %v90, 4294901760
  %1275 = vmatpush.msra.mxu0 %v1274
  %v1276 = vand.u32 %v88, 4294901760
  %1277 = vmatpush.msra.mxu0 %v1276
  %v1278 = vand.u32 %v86, 4294901760
  %1279 = vmatpush.msra.mxu0 %v1278
  %v1280 = vand.u32 %v84, 4294901760
  %1281 = vmatpush.msra.mxu0 %v1280
  %v1282 = vand.u32 %v82, 4294901760
  %1283 = vmatpush.msra.mxu0 %v1282
  %v1284 = vand.u32 %v80, 4294901760
  %1285 = vmatpush.msra.mxu0 %v1284
  %v1286 = vand.u32 %v78, 4294901760
  %1287 = vmatpush.msra.mxu0 %v1286
  %v1288 = vand.u32 %v76, 4294901760
  %1289 = vmatpush.msra.mxu0 %v1288
  %v1290 = vand.u32 %v74, 4294901760
  %1291 = vmatpush.msra.mxu0 %v1290
  %v1292 = vand.u32 %v72, 4294901760
  %1293 = vmatpush.msra.mxu0 %v1292
  %v1294 = vand.u32 %v70, 4294901760
  %1295 = vmatpush.msra.mxu0 %v1294
  %v1296 = vand.u32 %v12, 4294901760
  %1297 = vmatmul.f32.gmra.mxu0 %v1296
  %v1298 = vpop.f32.mrf.mxu0
  %v1299 = vadd.f32 %v1230, %v1298
  %v1300 = vand.u32 %v15, 4294901760
  %1301 = vmatmul.f32.gmra.mxu0 %v1300
  %v1302 = vpop.f32.mrf.mxu0
  %v1303 = vadd.f32 %v1234, %v1302
  %v1304 = vand.u32 %v18, 4294901760
  %1305 = vmatmul.f32.gmra.mxu0 %v1304
  %v1306 = vpop.f32.mrf.mxu0
  %v1307 = vadd.f32 %v1238, %v1306
  %v1308 = vand.u32 %v21, 4294901760
  %1309 = vmatmul.f32.gmra.mxu0 %v1308
  %v1310 = vpop.f32.mrf.mxu0
  %v1311 = vadd.f32 %v1242, %v1310
  %v1312 = vand.u32 %v24, 4294901760
  %1313 = vmatmul.f32.gmra.mxu0 %v1312
  %v1314 = vpop.f32.mrf.mxu0
  %v1315 = vadd.f32 %v1246, %v1314
  %v1316 = vand.u32 %v27, 4294901760
  %1317 = vmatmul.f32.gmra.mxu0 %v1316
  %v1318 = vpop.f32.mrf.mxu0
  %v1319 = vadd.f32 %v1250, %v1318
  %v1320 = vand.u32 %v30, 4294901760
  %1321 = vmatmul.f32.gmra.mxu0 %v1320
  %v1322 = vpop.f32.mrf.mxu0
  %v1323 = vadd.f32 %v1254, %v1322
  %v1324 = vand.u32 %v33, 4294901760
  %1325 = vmatmul.f32.gmra.mxu0 %v1324
  %v1326 = vpop.f32.mrf.mxu0
  %v1327 = vadd.f32 %v1258, %v1326
  %v1328 = vand.u32 %v36, 4294901760
  %1329 = vmatmul.f32.gmra.mxu0 %v1328
  %v1330 = vpop.f32.mrf.mxu0
  %v1331 = vadd.f32 %v1262, %v1330
  %1332 = vdwg.mxu0
  %1333 = vmatpush.msra.mxu0 0.0
  %1334 = vmatpush.msra.mxu0 0.0
  %1335 = vmatpush.msra.mxu0 0.0
  %1336 = vmatpush.msra.mxu0 0.0
  %1337 = vmatpush.msra.mxu0 0.0
  %1338 = vmatpush.msra.mxu0 0.0
  %1339 = vmatpush.msra.mxu0 0.0
  %v1340 = vand.u32 %v118, 4294901760
  %1341 = vmatpush.msra.mxu0 %v1340
  %v1342 = vand.u32 %v116, 4294901760
  %1343 = vmatpush.msra.mxu0 %v1342
  %v1344 = vand.u32 %v114, 4294901760
  %1345 = vmatpush.msra.mxu0 %v1344
  %v1346 = vand.u32 %v112, 4294901760
  %1347 = vmatpush.msra.mxu0 %v1346
  %v1348 = vand.u32 %v110, 4294901760
  %1349 = vmatpush.msra.mxu0 %v1348
  %v1350 = vand.u32 %v108, 4294901760
  %1351 = vmatpush.msra.mxu0 %v1350
  %v1352 = vand.u32 %v106, 4294901760
  %1353 = vmatpush.msra.mxu0 %v1352
  %v1354 = vand.u32 %v104, 4294901760
  %1355 = vmatpush.msra.mxu0 %v1354
  %v1356 = vand.u32 %v102, 4294901760
  %1357 = vmatpush.msra.mxu0 %v1356
  %v1358 = vand.u32 %v129, 4294901760
  %v1359 = vsub.f32 %v129, %v1358
  %v1360 = vand.u32 %v1359, 4294901760
  %v1361 = vsub.f32 %v1359, %v1360
  %v1362 = vand.u32 %v1361, 4294901760
  %1363 = vmatmul.f32.gmra.mxu0 %v1362
  %v1364 = vpop.f32.mrf.mxu0
  %v1365 = vadd.f32 %v1299, %v1364
  %v1366 = vand.u32 %v132, 4294901760
  %v1367 = vsub.f32 %v132, %v1366
  %v1368 = vand.u32 %v1367, 4294901760
  %v1369 = vsub.f32 %v1367, %v1368
  %v1370 = vand.u32 %v1369, 4294901760
  %1371 = vmatmul.f32.gmra.mxu0 %v1370
  %v1372 = vpop.f32.mrf.mxu0
  %v1373 = vadd.f32 %v1303, %v1372
  %v1374 = vand.u32 %v135, 4294901760
  %v1375 = vsub.f32 %v135, %v1374
  %v1376 = vand.u32 %v1375, 4294901760
  %v1377 = vsub.f32 %v1375, %v1376
  %v1378 = vand.u32 %v1377, 4294901760
  %1379 = vmatmul.f32.gmra.mxu0 %v1378
  %v1380 = vpop.f32.mrf.mxu0
  %v1381 = vadd.f32 %v1307, %v1380
  %v1382 = vand.u32 %v138, 4294901760
  %v1383 = vsub.f32 %v138, %v1382
  %v1384 = vand.u32 %v1383, 4294901760
  %v1385 = vsub.f32 %v1383, %v1384
  %v1386 = vand.u32 %v1385, 4294901760
  %1387 = vmatmul.f32.gmra.mxu0 %v1386
  %v1388 = vpop.f32.mrf.mxu0
  %v1389 = vadd.f32 %v1311, %v1388
  %v1390 = vand.u32 %v141, 4294901760
  %v1391 = vsub.f32 %v141, %v1390
  %v1392 = vand.u32 %v1391, 4294901760
  %v1393 = vsub.f32 %v1391, %v1392
  %v1394 = vand.u32 %v1393, 4294901760
  %1395 = vmatmul.f32.gmra.mxu0 %v1394
  %v1396 = vpop.f32.mrf.mxu0
  %v1397 = vadd.f32 %v1315, %v1396
  %v1398 = vand.u32 %v144, 4294901760
  %v1399 = vsub.f32 %v144, %v1398
  %v1400 = vand.u32 %v1399, 4294901760
  %v1401 = vsub.f32 %v1399, %v1400
  %v1402 = vand.u32 %v1401, 4294901760
  %1403 = vmatmul.f32.gmra.mxu0 %v1402
  %v1404 = vpop.f32.mrf.mxu0
  %v1405 = vadd.f32 %v1319, %v1404
  %v1406 = vand.u32 %v147, 4294901760
  %v1407 = vsub.f32 %v147, %v1406
  %v1408 = vand.u32 %v1407, 4294901760
  %v1409 = vsub.f32 %v1407, %v1408
  %v1410 = vand.u32 %v1409, 4294901760
  %1411 = vmatmul.f32.gmra.mxu0 %v1410
  %v1412 = vpop.f32.mrf.mxu0
  %v1413 = vadd.f32 %v1323, %v1412
  %v1414 = vand.u32 %v150, 4294901760
  %v1415 = vsub.f32 %v150, %v1414
  %v1416 = vand.u32 %v1415, 4294901760
  %v1417 = vsub.f32 %v1415, %v1416
  %v1418 = vand.u32 %v1417, 4294901760
  %1419 = vmatmul.f32.gmra.mxu0 %v1418
  %v1420 = vpop.f32.mrf.mxu0
  %v1421 = vadd.f32 %v1327, %v1420
  %v1422 = vand.u32 %v153, 4294901760
  %v1423 = vsub.f32 %v153, %v1422
  %v1424 = vand.u32 %v1423, 4294901760
  %v1425 = vsub.f32 %v1423, %v1424
  %v1426 = vand.u32 %v1425, 4294901760
  %1427 = vmatmul.f32.gmra.mxu0 %v1426
  %v1428 = vpop.f32.mrf.mxu0
  %v1429 = vadd.f32 %v1331, %v1428
  %1430 = vdwg.mxu0
  %1431 = vmatpush.msra.mxu0 0.0
  %1432 = vmatpush.msra.mxu0 0.0
  %1433 = vmatpush.msra.mxu0 0.0
  %1434 = vmatpush.msra.mxu0 0.0
  %1435 = vmatpush.msra.mxu0 0.0
  %1436 = vmatpush.msra.mxu0 0.0
  %1437 = vmatpush.msra.mxu0 0.0
  %v1438 = vand.u32 %v118, 4294901760
  %v1439 = vsub.f32 %v118, %v1438
  %v1440 = vand.u32 %v1439, 4294901760
  %v1441 = vsub.f32 %v1439, %v1440
  %v1442 = vand.u32 %v1441, 4294901760
  %1443 = vmatpush.msra.mxu0 %v1442
  %v1444 = vand.u32 %v116, 4294901760
  %v1445 = vsub.f32 %v116, %v1444
  %v1446 = vand.u32 %v1445, 4294901760
  %v1447 = vsub.f32 %v1445, %v1446
  %v1448 = vand.u32 %v1447, 4294901760
  %1449 = vmatpush.msra.mxu0 %v1448
  %v1450 = vand.u32 %v114, 4294901760
  %v1451 = vsub.f32 %v114, %v1450
  %v1452 = vand.u32 %v1451, 4294901760
  %v1453 = vsub.f32 %v1451, %v1452
  %v1454 = vand.u32 %v1453, 4294901760
  %1455 = vmatpush.msra.mxu0 %v1454
  %v1456 = vand.u32 %v112, 4294901760
  %v1457 = vsub.f32 %v112, %v1456
  %v1458 = vand.u32 %v1457, 4294901760
  %v1459 = vsub.f32 %v1457, %v1458
  %v1460 = vand.u32 %v1459, 4294901760
  %1461 = vmatpush.msra.mxu0 %v1460
  %v1462 = vand.u32 %v110, 4294901760
  %v1463 = vsub.f32 %v110, %v1462
  %v1464 = vand.u32 %v1463, 4294901760
  %v1465 = vsub.f32 %v1463, %v1464
  %v1466 = vand.u32 %v1465, 4294901760
  %1467 = vmatpush.msra.mxu0 %v1466
  %v1468 = vand.u32 %v108, 4294901760
  %v1469 = vsub.f32 %v108, %v1468
  %v1470 = vand.u32 %v1469, 4294901760
  %v1471 = vsub.f32 %v1469, %v1470
  %v1472 = vand.u32 %v1471, 4294901760
  %1473 = vmatpush.msra.mxu0 %v1472
  %v1474 = vand.u32 %v106, 4294901760
  %v1475 = vsub.f32 %v106, %v1474
  %v1476 = vand.u32 %v1475, 4294901760
  %v1477 = vsub.f32 %v1475, %v1476
  %v1478 = vand.u32 %v1477, 4294901760
  %1479 = vmatpush.msra.mxu0 %v1478
  %v1480 = vand.u32 %v104, 4294901760
  %v1481 = vsub.f32 %v104, %v1480
  %v1482 = vand.u32 %v1481, 4294901760
  %v1483 = vsub.f32 %v1481, %v1482
  %v1484 = vand.u32 %v1483, 4294901760
  %1485 = vmatpush.msra.mxu0 %v1484
  %v1486 = vand.u32 %v102, 4294901760
  %v1487 = vsub.f32 %v102, %v1486
  %v1488 = vand.u32 %v1487, 4294901760
  %v1489 = vsub.f32 %v1487, %v1488
  %v1490 = vand.u32 %v1489, 4294901760
  %1491 = vmatpush.msra.mxu0 %v1490
  %v1492 = vand.u32 %v129, 4294901760
  %1493 = vmatmul.f32.gmra.mxu0 %v1492
  %v1494 = vpop.f32.mrf.mxu0
  %v1495 = vadd.f32 %v1365, %v1494
  %v1496 = vand.u32 %v132, 4294901760
  %1497 = vmatmul.f32.gmra.mxu0 %v1496
  %v1498 = vpop.f32.mrf.mxu0
  %v1499 = vadd.f32 %v1373, %v1498
  %v1500 = vand.u32 %v135, 4294901760
  %1501 = vmatmul.f32.gmra.mxu0 %v1500
  %v1502 = vpop.f32.mrf.mxu0
  %v1503 = vadd.f32 %v1381, %v1502
  %v1504 = vand.u32 %v138, 4294901760
  %1505 = vmatmul.f32.gmra.mxu0 %v1504
  %v1506 = vpop.f32.mrf.mxu0
  %v1507 = vadd.f32 %v1389, %v1506
  %v1508 = vand.u32 %v141, 4294901760
  %1509 = vmatmul.f32.gmra.mxu0 %v1508
  %v1510 = vpop.f32.mrf.mxu0
  %v1511 = vadd.f32 %v1397, %v1510
  %v1512 = vand.u32 %v144, 4294901760
  %1513 = vmatmul.f32.gmra.mxu0 %v1512
  %v1514 = vpop.f32.mrf.mxu0
  %v1515 = vadd.f32 %v1405, %v1514
  %v1516 = vand.u32 %v147, 4294901760
  %1517 = vmatmul.f32.gmra.mxu0 %v1516
  %v1518 = vpop.f32.mrf.mxu0
  %v1519 = vadd.f32 %v1413, %v1518
  %v1520 = vand.u32 %v150, 4294901760
  %1521 = vmatmul.f32.gmra.mxu0 %v1520
  %v1522 = vpop.f32.mrf.mxu0
  %v1523 = vadd.f32 %v1421, %v1522
  %v1524 = vand.u32 %v153, 4294901760
  %1525 = vmatmul.f32.gmra.mxu0 %v1524
  %v1526 = vpop.f32.mrf.mxu0
  %v1527 = vadd.f32 %v1429, %v1526
  %1528 = vdwg.mxu0
  %1529 = vmatpush.msra.mxu0 0.0
  %1530 = vmatpush.msra.mxu0 0.0
  %1531 = vmatpush.msra.mxu0 0.0
  %1532 = vmatpush.msra.mxu0 0.0
  %1533 = vmatpush.msra.mxu0 0.0
  %1534 = vmatpush.msra.mxu0 0.0
  %1535 = vmatpush.msra.mxu0 0.0
  %v1536 = vand.u32 %v118, 4294901760
  %v1537 = vsub.f32 %v118, %v1536
  %1538 = vmatpush.msra.mxu0 %v1537
  %v1539 = vand.u32 %v116, 4294901760
  %v1540 = vsub.f32 %v116, %v1539
  %1541 = vmatpush.msra.mxu0 %v1540
  %v1542 = vand.u32 %v114, 4294901760
  %v1543 = vsub.f32 %v114, %v1542
  %1544 = vmatpush.msra.mxu0 %v1543
  %v1545 = vand.u32 %v112, 4294901760
  %v1546 = vsub.f32 %v112, %v1545
  %1547 = vmatpush.msra.mxu0 %v1546
  %v1548 = vand.u32 %v110, 4294901760
  %v1549 = vsub.f32 %v110, %v1548
  %1550 = vmatpush.msra.mxu0 %v1549
  %v1551 = vand.u32 %v108, 4294901760
  %v1552 = vsub.f32 %v108, %v1551
  %1553 = vmatpush.msra.mxu0 %v1552
  %v1554 = vand.u32 %v106, 4294901760
  %v1555 = vsub.f32 %v106, %v1554
  %1556 = vmatpush.msra.mxu0 %v1555
  %v1557 = vand.u32 %v104, 4294901760
  %v1558 = vsub.f32 %v104, %v1557
  %1559 = vmatpush.msra.mxu0 %v1558
  %v1560 = vand.u32 %v102, 4294901760
  %v1561 = vsub.f32 %v102, %v1560
  %1562 = vmatpush.msra.mxu0 %v1561
  %v1563 = vand.u32 %v129, 4294901760
  %v1564 = vsub.f32 %v129, %v1563
  %1565 = vmatmul.f32.gmra.mxu0 %v1564
  %v1566 = vpop.f32.mrf.mxu0
  %v1567 = vadd.f32 %v1495, %v1566
  %v1568 = vand.u32 %v132, 4294901760
  %v1569 = vsub.f32 %v132, %v1568
  %1570 = vmatmul.f32.gmra.mxu0 %v1569
  %v1571 = vpop.f32.mrf.mxu0
  %v1572 = vadd.f32 %v1499, %v1571
  %v1573 = vand.u32 %v135, 4294901760
  %v1574 = vsub.f32 %v135, %v1573
  %1575 = vmatmul.f32.gmra.mxu0 %v1574
  %v1576 = vpop.f32.mrf.mxu0
  %v1577 = vadd.f32 %v1503, %v1576
  %v1578 = vand.u32 %v138, 4294901760
  %v1579 = vsub.f32 %v138, %v1578
  %1580 = vmatmul.f32.gmra.mxu0 %v1579
  %v1581 = vpop.f32.mrf.mxu0
  %v1582 = vadd.f32 %v1507, %v1581
  %v1583 = vand.u32 %v141, 4294901760
  %v1584 = vsub.f32 %v141, %v1583
  %1585 = vmatmul.f32.gmra.mxu0 %v1584
  %v1586 = vpop.f32.mrf.mxu0
  %v1587 = vadd.f32 %v1511, %v1586
  %v1588 = vand.u32 %v144, 4294901760
  %v1589 = vsub.f32 %v144, %v1588
  %1590 = vmatmul.f32.gmra.mxu0 %v1589
  %v1591 = vpop.f32.mrf.mxu0
  %v1592 = vadd.f32 %v1515, %v1591
  %v1593 = vand.u32 %v147, 4294901760
  %v1594 = vsub.f32 %v147, %v1593
  %1595 = vmatmul.f32.gmra.mxu0 %v1594
  %v1596 = vpop.f32.mrf.mxu0
  %v1597 = vadd.f32 %v1519, %v1596
  %v1598 = vand.u32 %v150, 4294901760
  %v1599 = vsub.f32 %v150, %v1598
  %1600 = vmatmul.f32.gmra.mxu0 %v1599
  %v1601 = vpop.f32.mrf.mxu0
  %v1602 = vadd.f32 %v1523, %v1601
  %v1603 = vand.u32 %v153, 4294901760
  %v1604 = vsub.f32 %v153, %v1603
  %1605 = vmatmul.f32.gmra.mxu0 %v1604
  %v1606 = vpop.f32.mrf.mxu0
  %v1607 = vadd.f32 %v1527, %v1606
  %1608 = vdwg.mxu0
  %1609 = vmatpush.msra.mxu0 0.0
  %1610 = vmatpush.msra.mxu0 0.0
  %1611 = vmatpush.msra.mxu0 0.0
  %1612 = vmatpush.msra.mxu0 0.0
  %1613 = vmatpush.msra.mxu0 0.0
  %1614 = vmatpush.msra.mxu0 0.0
  %1615 = vmatpush.msra.mxu0 0.0
  %v1616 = vand.u32 %v118, 4294901760
  %1617 = vmatpush.msra.mxu0 %v1616
  %v1618 = vand.u32 %v116, 4294901760
  %1619 = vmatpush.msra.mxu0 %v1618
  %v1620 = vand.u32 %v114, 4294901760
  %1621 = vmatpush.msra.mxu0 %v1620
  %v1622 = vand.u32 %v112, 4294901760
  %1623 = vmatpush.msra.mxu0 %v1622
  %v1624 = vand.u32 %v110, 4294901760
  %1625 = vmatpush.msra.mxu0 %v1624
  %v1626 = vand.u32 %v108, 4294901760
  %1627 = vmatpush.msra.mxu0 %v1626
  %v1628 = vand.u32 %v106, 4294901760
  %1629 = vmatpush.msra.mxu0 %v1628
  %v1630 = vand.u32 %v104, 4294901760
  %1631 = vmatpush.msra.mxu0 %v1630
  %v1632 = vand.u32 %v102, 4294901760
  %1633 = vmatpush.msra.mxu0 %v1632
  %v1634 = vand.u32 %v129, 4294901760
  %v1635 = vsub.f32 %v129, %v1634
  %v1636 = vand.u32 %v1635, 4294901760
  %1637 = vmatmul.f32.gmra.mxu0 %v1636
  %v1638 = vpop.f32.mrf.mxu0
  %v1639 = vadd.f32 %v1567, %v1638
  %v1640 = vand.u32 %v132, 4294901760
  %v1641 = vsub.f32 %v132, %v1640
  %v1642 = vand.u32 %v1641, 4294901760
  %1643 = vmatmul.f32.gmra.mxu0 %v1642
  %v1644 = vpop.f32.mrf.mxu0
  %v1645 = vadd.f32 %v1572, %v1644
  %v1646 = vand.u32 %v135, 4294901760
  %v1647 = vsub.f32 %v135, %v1646
  %v1648 = vand.u32 %v1647, 4294901760
  %1649 = vmatmul.f32.gmra.mxu0 %v1648
  %v1650 = vpop.f32.mrf.mxu0
  %v1651 = vadd.f32 %v1577, %v1650
  %v1652 = vand.u32 %v138, 4294901760
  %v1653 = vsub.f32 %v138, %v1652
  %v1654 = vand.u32 %v1653, 4294901760
  %1655 = vmatmul.f32.gmra.mxu0 %v1654
  %v1656 = vpop.f32.mrf.mxu0
  %v1657 = vadd.f32 %v1582, %v1656
  %v1658 = vand.u32 %v141, 4294901760
  %v1659 = vsub.f32 %v141, %v1658
  %v1660 = vand.u32 %v1659, 4294901760
  %1661 = vmatmul.f32.gmra.mxu0 %v1660
  %v1662 = vpop.f32.mrf.mxu0
  %v1663 = vadd.f32 %v1587, %v1662
  %v1664 = vand.u32 %v144, 4294901760
  %v1665 = vsub.f32 %v144, %v1664
  %v1666 = vand.u32 %v1665, 4294901760
  %1667 = vmatmul.f32.gmra.mxu0 %v1666
  %v1668 = vpop.f32.mrf.mxu0
  %v1669 = vadd.f32 %v1592, %v1668
  %v1670 = vand.u32 %v147, 4294901760
  %v1671 = vsub.f32 %v147, %v1670
  %v1672 = vand.u32 %v1671, 4294901760
  %1673 = vmatmul.f32.gmra.mxu0 %v1672
  %v1674 = vpop.f32.mrf.mxu0
  %v1675 = vadd.f32 %v1597, %v1674
  %v1676 = vand.u32 %v150, 4294901760
  %v1677 = vsub.f32 %v150, %v1676
  %v1678 = vand.u32 %v1677, 4294901760
  %1679 = vmatmul.f32.gmra.mxu0 %v1678
  %v1680 = vpop.f32.mrf.mxu0
  %v1681 = vadd.f32 %v1602, %v1680
  %v1682 = vand.u32 %v153, 4294901760
  %v1683 = vsub.f32 %v153, %v1682
  %v1684 = vand.u32 %v1683, 4294901760
  %1685 = vmatmul.f32.gmra.mxu0 %v1684
  %v1686 = vpop.f32.mrf.mxu0
  %v1687 = vadd.f32 %v1607, %v1686
  %1688 = vdwg.mxu0
  %1689 = vmatpush.msra.mxu0 0.0
  %1690 = vmatpush.msra.mxu0 0.0
  %1691 = vmatpush.msra.mxu0 0.0
  %1692 = vmatpush.msra.mxu0 0.0
  %1693 = vmatpush.msra.mxu0 0.0
  %1694 = vmatpush.msra.mxu0 0.0
  %1695 = vmatpush.msra.mxu0 0.0
  %v1696 = vand.u32 %v118, 4294901760
  %v1697 = vsub.f32 %v118, %v1696
  %v1698 = vand.u32 %v1697, 4294901760
  %1699 = vmatpush.msra.mxu0 %v1698
  %v1700 = vand.u32 %v116, 4294901760
  %v1701 = vsub.f32 %v116, %v1700
  %v1702 = vand.u32 %v1701, 4294901760
  %1703 = vmatpush.msra.mxu0 %v1702
  %v1704 = vand.u32 %v114, 4294901760
  %v1705 = vsub.f32 %v114, %v1704
  %v1706 = vand.u32 %v1705, 4294901760
  %1707 = vmatpush.msra.mxu0 %v1706
  %v1708 = vand.u32 %v112, 4294901760
  %v1709 = vsub.f32 %v112, %v1708
  %v1710 = vand.u32 %v1709, 4294901760
  %1711 = vmatpush.msra.mxu0 %v1710
  %v1712 = vand.u32 %v110, 4294901760
  %v1713 = vsub.f32 %v110, %v1712
  %v1714 = vand.u32 %v1713, 4294901760
  %1715 = vmatpush.msra.mxu0 %v1714
  %v1716 = vand.u32 %v108, 4294901760
  %v1717 = vsub.f32 %v108, %v1716
  %v1718 = vand.u32 %v1717, 4294901760
  %1719 = vmatpush.msra.mxu0 %v1718
  %v1720 = vand.u32 %v106, 4294901760
  %v1721 = vsub.f32 %v106, %v1720
  %v1722 = vand.u32 %v1721, 4294901760
  %1723 = vmatpush.msra.mxu0 %v1722
  %v1724 = vand.u32 %v104, 4294901760
  %v1725 = vsub.f32 %v104, %v1724
  %v1726 = vand.u32 %v1725, 4294901760
  %1727 = vmatpush.msra.mxu0 %v1726
  %v1728 = vand.u32 %v102, 4294901760
  %v1729 = vsub.f32 %v102, %v1728
  %v1730 = vand.u32 %v1729, 4294901760
  %1731 = vmatpush.msra.mxu0 %v1730
  %v1732 = vand.u32 %v129, 4294901760
  %1733 = vmatmul.f32.gmra.mxu0 %v1732
  %v1734 = vpop.f32.mrf.mxu0
  %v1735 = vadd.f32 %v1639, %v1734
  %v1736 = vand.u32 %v132, 4294901760
  %1737 = vmatmul.f32.gmra.mxu0 %v1736
  %v1738 = vpop.f32.mrf.mxu0
  %v1739 = vadd.f32 %v1645, %v1738
  %v1740 = vand.u32 %v135, 4294901760
  %1741 = vmatmul.f32.gmra.mxu0 %v1740
  %v1742 = vpop.f32.mrf.mxu0
  %v1743 = vadd.f32 %v1651, %v1742
  %v1744 = vand.u32 %v138, 4294901760
  %1745 = vmatmul.f32.gmra.mxu0 %v1744
  %v1746 = vpop.f32.mrf.mxu0
  %v1747 = vadd.f32 %v1657, %v1746
  %v1748 = vand.u32 %v141, 4294901760
  %1749 = vmatmul.f32.gmra.mxu0 %v1748
  %v1750 = vpop.f32.mrf.mxu0
  %v1751 = vadd.f32 %v1663, %v1750
  %v1752 = vand.u32 %v144, 4294901760
  %1753 = vmatmul.f32.gmra.mxu0 %v1752
  %v1754 = vpop.f32.mrf.mxu0
  %v1755 = vadd.f32 %v1669, %v1754
  %v1756 = vand.u32 %v147, 4294901760
  %1757 = vmatmul.f32.gmra.mxu0 %v1756
  %v1758 = vpop.f32.mrf.mxu0
  %v1759 = vadd.f32 %v1675, %v1758
  %v1760 = vand.u32 %v150, 4294901760
  %1761 = vmatmul.f32.gmra.mxu0 %v1760
  %v1762 = vpop.f32.mrf.mxu0
  %v1763 = vadd.f32 %v1681, %v1762
  %v1764 = vand.u32 %v153, 4294901760
  %1765 = vmatmul.f32.gmra.mxu0 %v1764
  %v1766 = vpop.f32.mrf.mxu0
  %v1767 = vadd.f32 %v1687, %v1766
  %1768 = vdwg.mxu0
  %1769 = vmatpush.msra.mxu0 0.0
  %1770 = vmatpush.msra.mxu0 0.0
  %1771 = vmatpush.msra.mxu0 0.0
  %1772 = vmatpush.msra.mxu0 0.0
  %1773 = vmatpush.msra.mxu0 0.0
  %1774 = vmatpush.msra.mxu0 0.0
  %1775 = vmatpush.msra.mxu0 0.0
  %v1776 = vand.u32 %v118, 4294901760
  %1777 = vmatpush.msra.mxu0 %v1776
  %v1778 = vand.u32 %v116, 4294901760
  %1779 = vmatpush.msra.mxu0 %v1778
  %v1780 = vand.u32 %v114, 4294901760
  %1781 = vmatpush.msra.mxu0 %v1780
  %v1782 = vand.u32 %v112, 4294901760
  %1783 = vmatpush.msra.mxu0 %v1782
  %v1784 = vand.u32 %v110, 4294901760
  %1785 = vmatpush.msra.mxu0 %v1784
  %v1786 = vand.u32 %v108, 4294901760
  %1787 = vmatpush.msra.mxu0 %v1786
  %v1788 = vand.u32 %v106, 4294901760
  %1789 = vmatpush.msra.mxu0 %v1788
  %v1790 = vand.u32 %v104, 4294901760
  %1791 = vmatpush.msra.mxu0 %v1790
  %v1792 = vand.u32 %v102, 4294901760
  %1793 = vmatpush.msra.mxu0 %v1792
  %v1794 = vand.u32 %v129, 4294901760
  %1795 = vmatmul.f32.gmra.mxu0 %v1794
  %v1796 = vpop.f32.mrf.mxu0
  %v1797 = vadd.f32 %v1735, %v1796
  %v1798 = vand.u32 %v132, 4294901760
  %1799 = vmatmul.f32.gmra.mxu0 %v1798
  %v1800 = vpop.f32.mrf.mxu0
  %v1801 = vadd.f32 %v1739, %v1800
  %v1802 = vand.u32 %v135, 4294901760
  %1803 = vmatmul.f32.gmra.mxu0 %v1802
  %v1804 = vpop.f32.mrf.mxu0
  %v1805 = vadd.f32 %v1743, %v1804
  %v1806 = vand.u32 %v138, 4294901760
  %1807 = vmatmul.f32.gmra.mxu0 %v1806
  %v1808 = vpop.f32.mrf.mxu0
  %v1809 = vadd.f32 %v1747, %v1808
  %v1810 = vand.u32 %v141, 4294901760
  %1811 = vmatmul.f32.gmra.mxu0 %v1810
  %v1812 = vpop.f32.mrf.mxu0
  %v1813 = vadd.f32 %v1751, %v1812
  %v1814 = vand.u32 %v144, 4294901760
  %1815 = vmatmul.f32.gmra.mxu0 %v1814
  %v1816 = vpop.f32.mrf.mxu0
  %v1817 = vadd.f32 %v1755, %v1816
  %v1818 = vand.u32 %v147, 4294901760
  %1819 = vmatmul.f32.gmra.mxu0 %v1818
  %v1820 = vpop.f32.mrf.mxu0
  %v1821 = vadd.f32 %v1759, %v1820
  %v1822 = vand.u32 %v150, 4294901760
  %1823 = vmatmul.f32.gmra.mxu0 %v1822
  %v1824 = vpop.f32.mrf.mxu0
  %v1825 = vadd.f32 %v1763, %v1824
  %v1826 = vand.u32 %v153, 4294901760
  %1827 = vmatmul.f32.gmra.mxu0 %v1826
  %v1828 = vpop.f32.mrf.mxu0
  %v1829 = vadd.f32 %v1767, %v1828
  %1830 = vdwg.mxu0
  %v1831 = vand.u32 %v69, 4294901760
  %1832 = vmatpush.msra.mxu0 %v1831
  %v1833 = vand.u32 %v67, 4294901760
  %1834 = vmatpush.msra.mxu0 %v1833
  %v1835 = vand.u32 %v65, 4294901760
  %1836 = vmatpush.msra.mxu0 %v1835
  %v1837 = vand.u32 %v63, 4294901760
  %1838 = vmatpush.msra.mxu0 %v1837
  %v1839 = vand.u32 %v61, 4294901760
  %1840 = vmatpush.msra.mxu0 %v1839
  %v1841 = vand.u32 %v59, 4294901760
  %1842 = vmatpush.msra.mxu0 %v1841
  %v1843 = vand.u32 %v57, 4294901760
  %1844 = vmatpush.msra.mxu0 %v1843
  %v1845 = vand.u32 %v55, 4294901760
  %1846 = vmatpush.msra.mxu0 %v1845
  %v1847 = vand.u32 %v53, 4294901760
  %1848 = vmatpush.msra.mxu0 %v1847
  %v1849 = vand.u32 %v51, 4294901760
  %1850 = vmatpush.msra.mxu0 %v1849
  %v1851 = vand.u32 %v49, 4294901760
  %1852 = vmatpush.msra.mxu0 %v1851
  %v1853 = vand.u32 %v47, 4294901760
  %1854 = vmatpush.msra.mxu0 %v1853
  %v1855 = vand.u32 %v45, 4294901760
  %1856 = vmatpush.msra.mxu0 %v1855
  %v1857 = vand.u32 %v43, 4294901760
  %1858 = vmatpush.msra.mxu0 %v1857
  %v1859 = vand.u32 %v41, 4294901760
  %1860 = vmatpush.msra.mxu0 %v1859
  %v1861 = vand.u32 %v39, 4294901760
  %1862 = vmatpush.msra.mxu0 %v1861
  %v1863 = vand.u32 %v11, 4294901760
  %v1864 = vsub.f32 %v11, %v1863
  %v1865 = vand.u32 %v1864, 4294901760
  %v1866 = vsub.f32 %v1864, %v1865
  %v1867 = vand.u32 %v1866, 4294901760
  %1868 = vmatmul.f32.gmra.mxu0 %v1867
  %v1869 = vpop.f32.mrf.mxu0
  %v1870 = vadd.f32 %v124, %v1869
  %v1871 = vand.u32 %v14, 4294901760
  %v1872 = vsub.f32 %v14, %v1871
  %v1873 = vand.u32 %v1872, 4294901760
  %v1874 = vsub.f32 %v1872, %v1873
  %v1875 = vand.u32 %v1874, 4294901760
  %1876 = vmatmul.f32.gmra.mxu0 %v1875
  %v1877 = vpop.f32.mrf.mxu0
  %v1878 = vadd.f32 %v124, %v1877
  %v1879 = vand.u32 %v17, 4294901760
  %v1880 = vsub.f32 %v17, %v1879
  %v1881 = vand.u32 %v1880, 4294901760
  %v1882 = vsub.f32 %v1880, %v1881
  %v1883 = vand.u32 %v1882, 4294901760
  %1884 = vmatmul.f32.gmra.mxu0 %v1883
  %v1885 = vpop.f32.mrf.mxu0
  %v1886 = vadd.f32 %v124, %v1885
  %v1887 = vand.u32 %v20, 4294901760
  %v1888 = vsub.f32 %v20, %v1887
  %v1889 = vand.u32 %v1888, 4294901760
  %v1890 = vsub.f32 %v1888, %v1889
  %v1891 = vand.u32 %v1890, 4294901760
  %1892 = vmatmul.f32.gmra.mxu0 %v1891
  %v1893 = vpop.f32.mrf.mxu0
  %v1894 = vadd.f32 %v124, %v1893
  %v1895 = vand.u32 %v23, 4294901760
  %v1896 = vsub.f32 %v23, %v1895
  %v1897 = vand.u32 %v1896, 4294901760
  %v1898 = vsub.f32 %v1896, %v1897
  %v1899 = vand.u32 %v1898, 4294901760
  %1900 = vmatmul.f32.gmra.mxu0 %v1899
  %v1901 = vpop.f32.mrf.mxu0
  %v1902 = vadd.f32 %v124, %v1901
  %v1903 = vand.u32 %v26, 4294901760
  %v1904 = vsub.f32 %v26, %v1903
  %v1905 = vand.u32 %v1904, 4294901760
  %v1906 = vsub.f32 %v1904, %v1905
  %v1907 = vand.u32 %v1906, 4294901760
  %1908 = vmatmul.f32.gmra.mxu0 %v1907
  %v1909 = vpop.f32.mrf.mxu0
  %v1910 = vadd.f32 %v124, %v1909
  %v1911 = vand.u32 %v29, 4294901760
  %v1912 = vsub.f32 %v29, %v1911
  %v1913 = vand.u32 %v1912, 4294901760
  %v1914 = vsub.f32 %v1912, %v1913
  %v1915 = vand.u32 %v1914, 4294901760
  %1916 = vmatmul.f32.gmra.mxu0 %v1915
  %v1917 = vpop.f32.mrf.mxu0
  %v1918 = vadd.f32 %v124, %v1917
  %v1919 = vand.u32 %v32, 4294901760
  %v1920 = vsub.f32 %v32, %v1919
  %v1921 = vand.u32 %v1920, 4294901760
  %v1922 = vsub.f32 %v1920, %v1921
  %v1923 = vand.u32 %v1922, 4294901760
  %1924 = vmatmul.f32.gmra.mxu0 %v1923
  %v1925 = vpop.f32.mrf.mxu0
  %v1926 = vadd.f32 %v124, %v1925
  %v1927 = vand.u32 %v35, 4294901760
  %v1928 = vsub.f32 %v35, %v1927
  %v1929 = vand.u32 %v1928, 4294901760
  %v1930 = vsub.f32 %v1928, %v1929
  %v1931 = vand.u32 %v1930, 4294901760
  %1932 = vmatmul.f32.gmra.mxu0 %v1931
  %v1933 = vpop.f32.mrf.mxu0
  %v1934 = vadd.f32 %v124, %v1933
  %1935 = vdwg.mxu0
  %v1936 = vand.u32 %v69, 4294901760
  %v1937 = vsub.f32 %v69, %v1936
  %v1938 = vand.u32 %v1937, 4294901760
  %v1939 = vsub.f32 %v1937, %v1938
  %v1940 = vand.u32 %v1939, 4294901760
  %1941 = vmatpush.msra.mxu0 %v1940
  %v1942 = vand.u32 %v67, 4294901760
  %v1943 = vsub.f32 %v67, %v1942
  %v1944 = vand.u32 %v1943, 4294901760
  %v1945 = vsub.f32 %v1943, %v1944
  %v1946 = vand.u32 %v1945, 4294901760
  %1947 = vmatpush.msra.mxu0 %v1946
  %v1948 = vand.u32 %v65, 4294901760
  %v1949 = vsub.f32 %v65, %v1948
  %v1950 = vand.u32 %v1949, 4294901760
  %v1951 = vsub.f32 %v1949, %v1950
  %v1952 = vand.u32 %v1951, 4294901760
  %1953 = vmatpush.msra.mxu0 %v1952
  %v1954 = vand.u32 %v63, 4294901760
  %v1955 = vsub.f32 %v63, %v1954
  %v1956 = vand.u32 %v1955, 4294901760
  %v1957 = vsub.f32 %v1955, %v1956
  %v1958 = vand.u32 %v1957, 4294901760
  %1959 = vmatpush.msra.mxu0 %v1958
  %v1960 = vand.u32 %v61, 4294901760
  %v1961 = vsub.f32 %v61, %v1960
  %v1962 = vand.u32 %v1961, 4294901760
  %v1963 = vsub.f32 %v1961, %v1962
  %v1964 = vand.u32 %v1963, 4294901760
  %1965 = vmatpush.msra.mxu0 %v1964
  %v1966 = vand.u32 %v59, 4294901760
  %v1967 = vsub.f32 %v59, %v1966
  %v1968 = vand.u32 %v1967, 4294901760
  %v1969 = vsub.f32 %v1967, %v1968
  %v1970 = vand.u32 %v1969, 4294901760
  %1971 = vmatpush.msra.mxu0 %v1970
  %v1972 = vand.u32 %v57, 4294901760
  %v1973 = vsub.f32 %v57, %v1972
  %v1974 = vand.u32 %v1973, 4294901760
  %v1975 = vsub.f32 %v1973, %v1974
  %v1976 = vand.u32 %v1975, 4294901760
  %1977 = vmatpush.msra.mxu0 %v1976
  %v1978 = vand.u32 %v55, 4294901760
  %v1979 = vsub.f32 %v55, %v1978
  %v1980 = vand.u32 %v1979, 4294901760
  %v1981 = vsub.f32 %v1979, %v1980
  %v1982 = vand.u32 %v1981, 4294901760
  %1983 = vmatpush.msra.mxu0 %v1982
  %v1984 = vand.u32 %v53, 4294901760
  %v1985 = vsub.f32 %v53, %v1984
  %v1986 = vand.u32 %v1985, 4294901760
  %v1987 = vsub.f32 %v1985, %v1986
  %v1988 = vand.u32 %v1987, 4294901760
  %1989 = vmatpush.msra.mxu0 %v1988
  %v1990 = vand.u32 %v51, 4294901760
  %v1991 = vsub.f32 %v51, %v1990
  %v1992 = vand.u32 %v1991, 4294901760
  %v1993 = vsub.f32 %v1991, %v1992
  %v1994 = vand.u32 %v1993, 4294901760
  %1995 = vmatpush.msra.mxu0 %v1994
  %v1996 = vand.u32 %v49, 4294901760
  %v1997 = vsub.f32 %v49, %v1996
  %v1998 = vand.u32 %v1997, 4294901760
  %v1999 = vsub.f32 %v1997, %v1998
  %v2000 = vand.u32 %v1999, 4294901760
  %2001 = vmatpush.msra.mxu0 %v2000
  %v2002 = vand.u32 %v47, 4294901760
  %v2003 = vsub.f32 %v47, %v2002
  %v2004 = vand.u32 %v2003, 4294901760
  %v2005 = vsub.f32 %v2003, %v2004
  %v2006 = vand.u32 %v2005, 4294901760
  %2007 = vmatpush.msra.mxu0 %v2006
  %v2008 = vand.u32 %v45, 4294901760
  %v2009 = vsub.f32 %v45, %v2008
  %v2010 = vand.u32 %v2009, 4294901760
  %v2011 = vsub.f32 %v2009, %v2010
  %v2012 = vand.u32 %v2011, 4294901760
  %2013 = vmatpush.msra.mxu0 %v2012
  %v2014 = vand.u32 %v43, 4294901760
  %v2015 = vsub.f32 %v43, %v2014
  %v2016 = vand.u32 %v2015, 4294901760
  %v2017 = vsub.f32 %v2015, %v2016
  %v2018 = vand.u32 %v2017, 4294901760
  %2019 = vmatpush.msra.mxu0 %v2018
  %v2020 = vand.u32 %v41, 4294901760
  %v2021 = vsub.f32 %v41, %v2020
  %v2022 = vand.u32 %v2021, 4294901760
  %v2023 = vsub.f32 %v2021, %v2022
  %v2024 = vand.u32 %v2023, 4294901760
  %2025 = vmatpush.msra.mxu0 %v2024
  %v2026 = vand.u32 %v39, 4294901760
  %v2027 = vsub.f32 %v39, %v2026
  %v2028 = vand.u32 %v2027, 4294901760
  %v2029 = vsub.f32 %v2027, %v2028
  %v2030 = vand.u32 %v2029, 4294901760
  %2031 = vmatpush.msra.mxu0 %v2030
  %v2032 = vand.u32 %v11, 4294901760
  %2033 = vmatmul.f32.gmra.mxu0 %v2032
  %v2034 = vpop.f32.mrf.mxu0
  %v2035 = vadd.f32 %v1870, %v2034
  %v2036 = vand.u32 %v14, 4294901760
  %2037 = vmatmul.f32.gmra.mxu0 %v2036
  %v2038 = vpop.f32.mrf.mxu0
  %v2039 = vadd.f32 %v1878, %v2038
  %v2040 = vand.u32 %v17, 4294901760
  %2041 = vmatmul.f32.gmra.mxu0 %v2040
  %v2042 = vpop.f32.mrf.mxu0
  %v2043 = vadd.f32 %v1886, %v2042
  %v2044 = vand.u32 %v20, 4294901760
  %2045 = vmatmul.f32.gmra.mxu0 %v2044
  %v2046 = vpop.f32.mrf.mxu0
  %v2047 = vadd.f32 %v1894, %v2046
  %v2048 = vand.u32 %v23, 4294901760
  %2049 = vmatmul.f32.gmra.mxu0 %v2048
  %v2050 = vpop.f32.mrf.mxu0
  %v2051 = vadd.f32 %v1902, %v2050
  %v2052 = vand.u32 %v26, 4294901760
  %2053 = vmatmul.f32.gmra.mxu0 %v2052
  %v2054 = vpop.f32.mrf.mxu0
  %v2055 = vadd.f32 %v1910, %v2054
  %v2056 = vand.u32 %v29, 4294901760
  %2057 = vmatmul.f32.gmra.mxu0 %v2056
  %v2058 = vpop.f32.mrf.mxu0
  %v2059 = vadd.f32 %v1918, %v2058
  %v2060 = vand.u32 %v32, 4294901760
  %2061 = vmatmul.f32.gmra.mxu0 %v2060
  %v2062 = vpop.f32.mrf.mxu0
  %v2063 = vadd.f32 %v1926, %v2062
  %v2064 = vand.u32 %v35, 4294901760
  %2065 = vmatmul.f32.gmra.mxu0 %v2064
  %v2066 = vpop.f32.mrf.mxu0
  %v2067 = vadd.f32 %v1934, %v2066
  %2068 = vdwg.mxu0
  %v2069 = vand.u32 %v69, 4294901760
  %v2070 = vsub.f32 %v69, %v2069
  %2071 = vmatpush.msra.mxu0 %v2070
  %v2072 = vand.u32 %v67, 4294901760
  %v2073 = vsub.f32 %v67, %v2072
  %2074 = vmatpush.msra.mxu0 %v2073
  %v2075 = vand.u32 %v65, 4294901760
  %v2076 = vsub.f32 %v65, %v2075
  %2077 = vmatpush.msra.mxu0 %v2076
  %v2078 = vand.u32 %v63, 4294901760
  %v2079 = vsub.f32 %v63, %v2078
  %2080 = vmatpush.msra.mxu0 %v2079
  %v2081 = vand.u32 %v61, 4294901760
  %v2082 = vsub.f32 %v61, %v2081
  %2083 = vmatpush.msra.mxu0 %v2082
  %v2084 = vand.u32 %v59, 4294901760
  %v2085 = vsub.f32 %v59, %v2084
  %2086 = vmatpush.msra.mxu0 %v2085
  %v2087 = vand.u32 %v57, 4294901760
  %v2088 = vsub.f32 %v57, %v2087
  %2089 = vmatpush.msra.mxu0 %v2088
  %v2090 = vand.u32 %v55, 4294901760
  %v2091 = vsub.f32 %v55, %v2090
  %2092 = vmatpush.msra.mxu0 %v2091
  %v2093 = vand.u32 %v53, 4294901760
  %v2094 = vsub.f32 %v53, %v2093
  %2095 = vmatpush.msra.mxu0 %v2094
  %v2096 = vand.u32 %v51, 4294901760
  %v2097 = vsub.f32 %v51, %v2096
  %2098 = vmatpush.msra.mxu0 %v2097
  %v2099 = vand.u32 %v49, 4294901760
  %v2100 = vsub.f32 %v49, %v2099
  %2101 = vmatpush.msra.mxu0 %v2100
  %v2102 = vand.u32 %v47, 4294901760
  %v2103 = vsub.f32 %v47, %v2102
  %2104 = vmatpush.msra.mxu0 %v2103
  %v2105 = vand.u32 %v45, 4294901760
  %v2106 = vsub.f32 %v45, %v2105
  %2107 = vmatpush.msra.mxu0 %v2106
  %v2108 = vand.u32 %v43, 4294901760
  %v2109 = vsub.f32 %v43, %v2108
  %2110 = vmatpush.msra.mxu0 %v2109
  %v2111 = vand.u32 %v41, 4294901760
  %v2112 = vsub.f32 %v41, %v2111
  %2113 = vmatpush.msra.mxu0 %v2112
  %v2114 = vand.u32 %v39, 4294901760
  %v2115 = vsub.f32 %v39, %v2114
  %2116 = vmatpush.msra.mxu0 %v2115
  %v2117 = vand.u32 %v11, 4294901760
  %v2118 = vsub.f32 %v11, %v2117
  %2119 = vmatmul.f32.gmra.mxu0 %v2118
  %v2120 = vpop.f32.mrf.mxu0
  %v2121 = vadd.f32 %v2035, %v2120
  %v2122 = vand.u32 %v14, 4294901760
  %v2123 = vsub.f32 %v14, %v2122
  %2124 = vmatmul.f32.gmra.mxu0 %v2123
  %v2125 = vpop.f32.mrf.mxu0
  %v2126 = vadd.f32 %v2039, %v2125
  %v2127 = vand.u32 %v17, 4294901760
  %v2128 = vsub.f32 %v17, %v2127
  %2129 = vmatmul.f32.gmra.mxu0 %v2128
  %v2130 = vpop.f32.mrf.mxu0
  %v2131 = vadd.f32 %v2043, %v2130
  %v2132 = vand.u32 %v20, 4294901760
  %v2133 = vsub.f32 %v20, %v2132
  %2134 = vmatmul.f32.gmra.mxu0 %v2133
  %v2135 = vpop.f32.mrf.mxu0
  %v2136 = vadd.f32 %v2047, %v2135
  %v2137 = vand.u32 %v23, 4294901760
  %v2138 = vsub.f32 %v23, %v2137
  %2139 = vmatmul.f32.gmra.mxu0 %v2138
  %v2140 = vpop.f32.mrf.mxu0
  %v2141 = vadd.f32 %v2051, %v2140
  %v2142 = vand.u32 %v26, 4294901760
  %v2143 = vsub.f32 %v26, %v2142
  %2144 = vmatmul.f32.gmra.mxu0 %v2143
  %v2145 = vpop.f32.mrf.mxu0
  %v2146 = vadd.f32 %v2055, %v2145
  %v2147 = vand.u32 %v29, 4294901760
  %v2148 = vsub.f32 %v29, %v2147
  %2149 = vmatmul.f32.gmra.mxu0 %v2148
  %v2150 = vpop.f32.mrf.mxu0
  %v2151 = vadd.f32 %v2059, %v2150
  %v2152 = vand.u32 %v32, 4294901760
  %v2153 = vsub.f32 %v32, %v2152
  %2154 = vmatmul.f32.gmra.mxu0 %v2153
  %v2155 = vpop.f32.mrf.mxu0
  %v2156 = vadd.f32 %v2063, %v2155
  %v2157 = vand.u32 %v35, 4294901760
  %v2158 = vsub.f32 %v35, %v2157
  %2159 = vmatmul.f32.gmra.mxu0 %v2158
  %v2160 = vpop.f32.mrf.mxu0
  %v2161 = vadd.f32 %v2067, %v2160
  %2162 = vdwg.mxu0
  %v2163 = vand.u32 %v69, 4294901760
  %2164 = vmatpush.msra.mxu0 %v2163
  %v2165 = vand.u32 %v67, 4294901760
  %2166 = vmatpush.msra.mxu0 %v2165
  %v2167 = vand.u32 %v65, 4294901760
  %2168 = vmatpush.msra.mxu0 %v2167
  %v2169 = vand.u32 %v63, 4294901760
  %2170 = vmatpush.msra.mxu0 %v2169
  %v2171 = vand.u32 %v61, 4294901760
  %2172 = vmatpush.msra.mxu0 %v2171
  %v2173 = vand.u32 %v59, 4294901760
  %2174 = vmatpush.msra.mxu0 %v2173
  %v2175 = vand.u32 %v57, 4294901760
  %2176 = vmatpush.msra.mxu0 %v2175
  %v2177 = vand.u32 %v55, 4294901760
  %2178 = vmatpush.msra.mxu0 %v2177
  %v2179 = vand.u32 %v53, 4294901760
  %2180 = vmatpush.msra.mxu0 %v2179
  %v2181 = vand.u32 %v51, 4294901760
  %2182 = vmatpush.msra.mxu0 %v2181
  %v2183 = vand.u32 %v49, 4294901760
  %2184 = vmatpush.msra.mxu0 %v2183
  %v2185 = vand.u32 %v47, 4294901760
  %2186 = vmatpush.msra.mxu0 %v2185
  %v2187 = vand.u32 %v45, 4294901760
  %2188 = vmatpush.msra.mxu0 %v2187
  %v2189 = vand.u32 %v43, 4294901760
  %2190 = vmatpush.msra.mxu0 %v2189
  %v2191 = vand.u32 %v41, 4294901760
  %2192 = vmatpush.msra.mxu0 %v2191
  %v2193 = vand.u32 %v39, 4294901760
  %2194 = vmatpush.msra.mxu0 %v2193
  %v2195 = vand.u32 %v11, 4294901760
  %v2196 = vsub.f32 %v11, %v2195
  %v2197 = vand.u32 %v2196, 4294901760
  %2198 = vmatmul.f32.gmra.mxu0 %v2197
  %v2199 = vpop.f32.mrf.mxu0
  %v2200 = vadd.f32 %v2121, %v2199
  %v2201 = vand.u32 %v14, 4294901760
  %v2202 = vsub.f32 %v14, %v2201
  %v2203 = vand.u32 %v2202, 4294901760
  %2204 = vmatmul.f32.gmra.mxu0 %v2203
  %v2205 = vpop.f32.mrf.mxu0
  %v2206 = vadd.f32 %v2126, %v2205
  %v2207 = vand.u32 %v17, 4294901760
  %v2208 = vsub.f32 %v17, %v2207
  %v2209 = vand.u32 %v2208, 4294901760
  %2210 = vmatmul.f32.gmra.mxu0 %v2209
  %v2211 = vpop.f32.mrf.mxu0
  %v2212 = vadd.f32 %v2131, %v2211
  %v2213 = vand.u32 %v20, 4294901760
  %v2214 = vsub.f32 %v20, %v2213
  %v2215 = vand.u32 %v2214, 4294901760
  %2216 = vmatmul.f32.gmra.mxu0 %v2215
  %v2217 = vpop.f32.mrf.mxu0
  %v2218 = vadd.f32 %v2136, %v2217
  %v2219 = vand.u32 %v23, 4294901760
  %v2220 = vsub.f32 %v23, %v2219
  %v2221 = vand.u32 %v2220, 4294901760
  %2222 = vmatmul.f32.gmra.mxu0 %v2221
  %v2223 = vpop.f32.mrf.mxu0
  %v2224 = vadd.f32 %v2141, %v2223
  %v2225 = vand.u32 %v26, 4294901760
  %v2226 = vsub.f32 %v26, %v2225
  %v2227 = vand.u32 %v2226, 4294901760
  %2228 = vmatmul.f32.gmra.mxu0 %v2227
  %v2229 = vpop.f32.mrf.mxu0
  %v2230 = vadd.f32 %v2146, %v2229
  %v2231 = vand.u32 %v29, 4294901760
  %v2232 = vsub.f32 %v29, %v2231
  %v2233 = vand.u32 %v2232, 4294901760
  %2234 = vmatmul.f32.gmra.mxu0 %v2233
  %v2235 = vpop.f32.mrf.mxu0
  %v2236 = vadd.f32 %v2151, %v2235
  %v2237 = vand.u32 %v32, 4294901760
  %v2238 = vsub.f32 %v32, %v2237
  %v2239 = vand.u32 %v2238, 4294901760
  %2240 = vmatmul.f32.gmra.mxu0 %v2239
  %v2241 = vpop.f32.mrf.mxu0
  %v2242 = vadd.f32 %v2156, %v2241
  %v2243 = vand.u32 %v35, 4294901760
  %v2244 = vsub.f32 %v35, %v2243
  %v2245 = vand.u32 %v2244, 4294901760
  %2246 = vmatmul.f32.gmra.mxu0 %v2245
  %v2247 = vpop.f32.mrf.mxu0
  %v2248 = vadd.f32 %v2161, %v2247
  %2249 = vdwg.mxu0
  %v2250 = vand.u32 %v69, 4294901760
  %v2251 = vsub.f32 %v69, %v2250
  %v2252 = vand.u32 %v2251, 4294901760
  %2253 = vmatpush.msra.mxu0 %v2252
  %v2254 = vand.u32 %v67, 4294901760
  %v2255 = vsub.f32 %v67, %v2254
  %v2256 = vand.u32 %v2255, 4294901760
  %2257 = vmatpush.msra.mxu0 %v2256
  %v2258 = vand.u32 %v65, 4294901760
  %v2259 = vsub.f32 %v65, %v2258
  %v2260 = vand.u32 %v2259, 4294901760
  %2261 = vmatpush.msra.mxu0 %v2260
  %v2262 = vand.u32 %v63, 4294901760
  %v2263 = vsub.f32 %v63, %v2262
  %v2264 = vand.u32 %v2263, 4294901760
  %2265 = vmatpush.msra.mxu0 %v2264
  %v2266 = vand.u32 %v61, 4294901760
  %v2267 = vsub.f32 %v61, %v2266
  %v2268 = vand.u32 %v2267, 4294901760
  %2269 = vmatpush.msra.mxu0 %v2268
  %v2270 = vand.u32 %v59, 4294901760
  %v2271 = vsub.f32 %v59, %v2270
  %v2272 = vand.u32 %v2271, 4294901760
  %2273 = vmatpush.msra.mxu0 %v2272
  %v2274 = vand.u32 %v57, 4294901760
  %v2275 = vsub.f32 %v57, %v2274
  %v2276 = vand.u32 %v2275, 4294901760
  %2277 = vmatpush.msra.mxu0 %v2276
  %v2278 = vand.u32 %v55, 4294901760
  %v2279 = vsub.f32 %v55, %v2278
  %v2280 = vand.u32 %v2279, 4294901760
  %2281 = vmatpush.msra.mxu0 %v2280
  %v2282 = vand.u32 %v53, 4294901760
  %v2283 = vsub.f32 %v53, %v2282
  %v2284 = vand.u32 %v2283, 4294901760
  %2285 = vmatpush.msra.mxu0 %v2284
  %v2286 = vand.u32 %v51, 4294901760
  %v2287 = vsub.f32 %v51, %v2286
  %v2288 = vand.u32 %v2287, 4294901760
  %2289 = vmatpush.msra.mxu0 %v2288
  %v2290 = vand.u32 %v49, 4294901760
  %v2291 = vsub.f32 %v49, %v2290
  %v2292 = vand.u32 %v2291, 4294901760
  %2293 = vmatpush.msra.mxu0 %v2292
  %v2294 = vand.u32 %v47, 4294901760
  %v2295 = vsub.f32 %v47, %v2294
  %v2296 = vand.u32 %v2295, 4294901760
  %2297 = vmatpush.msra.mxu0 %v2296
  %v2298 = vand.u32 %v45, 4294901760
  %v2299 = vsub.f32 %v45, %v2298
  %v2300 = vand.u32 %v2299, 4294901760
  %2301 = vmatpush.msra.mxu0 %v2300
  %v2302 = vand.u32 %v43, 4294901760
  %v2303 = vsub.f32 %v43, %v2302
  %v2304 = vand.u32 %v2303, 4294901760
  %2305 = vmatpush.msra.mxu0 %v2304
  %v2306 = vand.u32 %v41, 4294901760
  %v2307 = vsub.f32 %v41, %v2306
  %v2308 = vand.u32 %v2307, 4294901760
  %2309 = vmatpush.msra.mxu0 %v2308
  %v2310 = vand.u32 %v39, 4294901760
  %v2311 = vsub.f32 %v39, %v2310
  %v2312 = vand.u32 %v2311, 4294901760
  %2313 = vmatpush.msra.mxu0 %v2312
  %v2314 = vand.u32 %v11, 4294901760
  %2315 = vmatmul.f32.gmra.mxu0 %v2314
  %v2316 = vpop.f32.mrf.mxu0
  %v2317 = vadd.f32 %v2200, %v2316
  %v2318 = vand.u32 %v14, 4294901760
  %2319 = vmatmul.f32.gmra.mxu0 %v2318
  %v2320 = vpop.f32.mrf.mxu0
  %v2321 = vadd.f32 %v2206, %v2320
  %v2322 = vand.u32 %v17, 4294901760
  %2323 = vmatmul.f32.gmra.mxu0 %v2322
  %v2324 = vpop.f32.mrf.mxu0
  %v2325 = vadd.f32 %v2212, %v2324
  %v2326 = vand.u32 %v20, 4294901760
  %2327 = vmatmul.f32.gmra.mxu0 %v2326
  %v2328 = vpop.f32.mrf.mxu0
  %v2329 = vadd.f32 %v2218, %v2328
  %v2330 = vand.u32 %v23, 4294901760
  %2331 = vmatmul.f32.gmra.mxu0 %v2330
  %v2332 = vpop.f32.mrf.mxu0
  %v2333 = vadd.f32 %v2224, %v2332
  %v2334 = vand.u32 %v26, 4294901760
  %2335 = vmatmul.f32.gmra.mxu0 %v2334
  %v2336 = vpop.f32.mrf.mxu0
  %v2337 = vadd.f32 %v2230, %v2336
  %v2338 = vand.u32 %v29, 4294901760
  %2339 = vmatmul.f32.gmra.mxu0 %v2338
  %v2340 = vpop.f32.mrf.mxu0
  %v2341 = vadd.f32 %v2236, %v2340
  %v2342 = vand.u32 %v32, 4294901760
  %2343 = vmatmul.f32.gmra.mxu0 %v2342
  %v2344 = vpop.f32.mrf.mxu0
  %v2345 = vadd.f32 %v2242, %v2344
  %v2346 = vand.u32 %v35, 4294901760
  %2347 = vmatmul.f32.gmra.mxu0 %v2346
  %v2348 = vpop.f32.mrf.mxu0
  %v2349 = vadd.f32 %v2248, %v2348
  %2350 = vdwg.mxu0
  %v2351 = vand.u32 %v69, 4294901760
  %2352 = vmatpush.msra.mxu0 %v2351
  %v2353 = vand.u32 %v67, 4294901760
  %2354 = vmatpush.msra.mxu0 %v2353
  %v2355 = vand.u32 %v65, 4294901760
  %2356 = vmatpush.msra.mxu0 %v2355
  %v2357 = vand.u32 %v63, 4294901760
  %2358 = vmatpush.msra.mxu0 %v2357
  %v2359 = vand.u32 %v61, 4294901760
  %2360 = vmatpush.msra.mxu0 %v2359
  %v2361 = vand.u32 %v59, 4294901760
  %2362 = vmatpush.msra.mxu0 %v2361
  %v2363 = vand.u32 %v57, 4294901760
  %2364 = vmatpush.msra.mxu0 %v2363
  %v2365 = vand.u32 %v55, 4294901760
  %2366 = vmatpush.msra.mxu0 %v2365
  %v2367 = vand.u32 %v53, 4294901760
  %2368 = vmatpush.msra.mxu0 %v2367
  %v2369 = vand.u32 %v51, 4294901760
  %2370 = vmatpush.msra.mxu0 %v2369
  %v2371 = vand.u32 %v49, 4294901760
  %2372 = vmatpush.msra.mxu0 %v2371
  %v2373 = vand.u32 %v47, 4294901760
  %2374 = vmatpush.msra.mxu0 %v2373
  %v2375 = vand.u32 %v45, 4294901760
  %2376 = vmatpush.msra.mxu0 %v2375
  %v2377 = vand.u32 %v43, 4294901760
  %2378 = vmatpush.msra.mxu0 %v2377
  %v2379 = vand.u32 %v41, 4294901760
  %2380 = vmatpush.msra.mxu0 %v2379
  %v2381 = vand.u32 %v39, 4294901760
  %2382 = vmatpush.msra.mxu0 %v2381
  %v2383 = vand.u32 %v11, 4294901760
  %2384 = vmatmul.f32.gmra.mxu0 %v2383
  %v2385 = vpop.f32.mrf.mxu0
  %v2386 = vadd.f32 %v2317, %v2385
  %v2387 = vand.u32 %v14, 4294901760
  %2388 = vmatmul.f32.gmra.mxu0 %v2387
  %v2389 = vpop.f32.mrf.mxu0
  %v2390 = vadd.f32 %v2321, %v2389
  %v2391 = vand.u32 %v17, 4294901760
  %2392 = vmatmul.f32.gmra.mxu0 %v2391
  %v2393 = vpop.f32.mrf.mxu0
  %v2394 = vadd.f32 %v2325, %v2393
  %v2395 = vand.u32 %v20, 4294901760
  %2396 = vmatmul.f32.gmra.mxu0 %v2395
  %v2397 = vpop.f32.mrf.mxu0
  %v2398 = vadd.f32 %v2329, %v2397
  %v2399 = vand.u32 %v23, 4294901760
  %2400 = vmatmul.f32.gmra.mxu0 %v2399
  %v2401 = vpop.f32.mrf.mxu0
  %v2402 = vadd.f32 %v2333, %v2401
  %v2403 = vand.u32 %v26, 4294901760
  %2404 = vmatmul.f32.gmra.mxu0 %v2403
  %v2405 = vpop.f32.mrf.mxu0
  %v2406 = vadd.f32 %v2337, %v2405
  %v2407 = vand.u32 %v29, 4294901760
  %2408 = vmatmul.f32.gmra.mxu0 %v2407
  %v2409 = vpop.f32.mrf.mxu0
  %v2410 = vadd.f32 %v2341, %v2409
  %v2411 = vand.u32 %v32, 4294901760
  %2412 = vmatmul.f32.gmra.mxu0 %v2411
  %v2413 = vpop.f32.mrf.mxu0
  %v2414 = vadd.f32 %v2345, %v2413
  %v2415 = vand.u32 %v35, 4294901760
  %2416 = vmatmul.f32.gmra.mxu0 %v2415
  %v2417 = vpop.f32.mrf.mxu0
  %v2418 = vadd.f32 %v2349, %v2417
  %2419 = vdwg.mxu0
  %v2420 = vand.u32 %v101, 4294901760
  %2421 = vmatpush.msra.mxu0 %v2420
  %v2422 = vand.u32 %v99, 4294901760
  %2423 = vmatpush.msra.mxu0 %v2422
  %v2424 = vand.u32 %v97, 4294901760
  %2425 = vmatpush.msra.mxu0 %v2424
  %v2426 = vand.u32 %v95, 4294901760
  %2427 = vmatpush.msra.mxu0 %v2426
  %v2428 = vand.u32 %v93, 4294901760
  %2429 = vmatpush.msra.mxu0 %v2428
  %v2430 = vand.u32 %v91, 4294901760
  %2431 = vmatpush.msra.mxu0 %v2430
  %v2432 = vand.u32 %v89, 4294901760
  %2433 = vmatpush.msra.mxu0 %v2432
  %v2434 = vand.u32 %v87, 4294901760
  %2435 = vmatpush.msra.mxu0 %v2434
  %v2436 = vand.u32 %v85, 4294901760
  %2437 = vmatpush.msra.mxu0 %v2436
  %v2438 = vand.u32 %v83, 4294901760
  %2439 = vmatpush.msra.mxu0 %v2438
  %v2440 = vand.u32 %v81, 4294901760
  %2441 = vmatpush.msra.mxu0 %v2440
  %v2442 = vand.u32 %v79, 4294901760
  %2443 = vmatpush.msra.mxu0 %v2442
  %v2444 = vand.u32 %v77, 4294901760
  %2445 = vmatpush.msra.mxu0 %v2444
  %v2446 = vand.u32 %v75, 4294901760
  %2447 = vmatpush.msra.mxu0 %v2446
  %v2448 = vand.u32 %v73, 4294901760
  %2449 = vmatpush.msra.mxu0 %v2448
  %v2450 = vand.u32 %v71, 4294901760
  %2451 = vmatpush.msra.mxu0 %v2450
  %v2452 = vand.u32 %v12, 4294901760
  %v2453 = vsub.f32 %v12, %v2452
  %v2454 = vand.u32 %v2453, 4294901760
  %v2455 = vsub.f32 %v2453, %v2454
  %v2456 = vand.u32 %v2455, 4294901760
  %2457 = vmatmul.f32.gmra.mxu0 %v2456
  %v2458 = vpop.f32.mrf.mxu0
  %v2459 = vadd.f32 %v2386, %v2458
  %v2460 = vand.u32 %v15, 4294901760
  %v2461 = vsub.f32 %v15, %v2460
  %v2462 = vand.u32 %v2461, 4294901760
  %v2463 = vsub.f32 %v2461, %v2462
  %v2464 = vand.u32 %v2463, 4294901760
  %2465 = vmatmul.f32.gmra.mxu0 %v2464
  %v2466 = vpop.f32.mrf.mxu0
  %v2467 = vadd.f32 %v2390, %v2466
  %v2468 = vand.u32 %v18, 4294901760
  %v2469 = vsub.f32 %v18, %v2468
  %v2470 = vand.u32 %v2469, 4294901760
  %v2471 = vsub.f32 %v2469, %v2470
  %v2472 = vand.u32 %v2471, 4294901760
  %2473 = vmatmul.f32.gmra.mxu0 %v2472
  %v2474 = vpop.f32.mrf.mxu0
  %v2475 = vadd.f32 %v2394, %v2474
  %v2476 = vand.u32 %v21, 4294901760
  %v2477 = vsub.f32 %v21, %v2476
  %v2478 = vand.u32 %v2477, 4294901760
  %v2479 = vsub.f32 %v2477, %v2478
  %v2480 = vand.u32 %v2479, 4294901760
  %2481 = vmatmul.f32.gmra.mxu0 %v2480
  %v2482 = vpop.f32.mrf.mxu0
  %v2483 = vadd.f32 %v2398, %v2482
  %v2484 = vand.u32 %v24, 4294901760
  %v2485 = vsub.f32 %v24, %v2484
  %v2486 = vand.u32 %v2485, 4294901760
  %v2487 = vsub.f32 %v2485, %v2486
  %v2488 = vand.u32 %v2487, 4294901760
  %2489 = vmatmul.f32.gmra.mxu0 %v2488
  %v2490 = vpop.f32.mrf.mxu0
  %v2491 = vadd.f32 %v2402, %v2490
  %v2492 = vand.u32 %v27, 4294901760
  %v2493 = vsub.f32 %v27, %v2492
  %v2494 = vand.u32 %v2493, 4294901760
  %v2495 = vsub.f32 %v2493, %v2494
  %v2496 = vand.u32 %v2495, 4294901760
  %2497 = vmatmul.f32.gmra.mxu0 %v2496
  %v2498 = vpop.f32.mrf.mxu0
  %v2499 = vadd.f32 %v2406, %v2498
  %v2500 = vand.u32 %v30, 4294901760
  %v2501 = vsub.f32 %v30, %v2500
  %v2502 = vand.u32 %v2501, 4294901760
  %v2503 = vsub.f32 %v2501, %v2502
  %v2504 = vand.u32 %v2503, 4294901760
  %2505 = vmatmul.f32.gmra.mxu0 %v2504
  %v2506 = vpop.f32.mrf.mxu0
  %v2507 = vadd.f32 %v2410, %v2506
  %v2508 = vand.u32 %v33, 4294901760
  %v2509 = vsub.f32 %v33, %v2508
  %v2510 = vand.u32 %v2509, 4294901760
  %v2511 = vsub.f32 %v2509, %v2510
  %v2512 = vand.u32 %v2511, 4294901760
  %2513 = vmatmul.f32.gmra.mxu0 %v2512
  %v2514 = vpop.f32.mrf.mxu0
  %v2515 = vadd.f32 %v2414, %v2514
  %v2516 = vand.u32 %v36, 4294901760
  %v2517 = vsub.f32 %v36, %v2516
  %v2518 = vand.u32 %v2517, 4294901760
  %v2519 = vsub.f32 %v2517, %v2518
  %v2520 = vand.u32 %v2519, 4294901760
  %2521 = vmatmul.f32.gmra.mxu0 %v2520
  %v2522 = vpop.f32.mrf.mxu0
  %v2523 = vadd.f32 %v2418, %v2522
  %2524 = vdwg.mxu0
  %v2525 = vand.u32 %v101, 4294901760
  %v2526 = vsub.f32 %v101, %v2525
  %v2527 = vand.u32 %v2526, 4294901760
  %v2528 = vsub.f32 %v2526, %v2527
  %v2529 = vand.u32 %v2528, 4294901760
  %2530 = vmatpush.msra.mxu0 %v2529
  %v2531 = vand.u32 %v99, 4294901760
  %v2532 = vsub.f32 %v99, %v2531
  %v2533 = vand.u32 %v2532, 4294901760
  %v2534 = vsub.f32 %v2532, %v2533
  %v2535 = vand.u32 %v2534, 4294901760
  %2536 = vmatpush.msra.mxu0 %v2535
  %v2537 = vand.u32 %v97, 4294901760
  %v2538 = vsub.f32 %v97, %v2537
  %v2539 = vand.u32 %v2538, 4294901760
  %v2540 = vsub.f32 %v2538, %v2539
  %v2541 = vand.u32 %v2540, 4294901760
  %2542 = vmatpush.msra.mxu0 %v2541
  %v2543 = vand.u32 %v95, 4294901760
  %v2544 = vsub.f32 %v95, %v2543
  %v2545 = vand.u32 %v2544, 4294901760
  %v2546 = vsub.f32 %v2544, %v2545
  %v2547 = vand.u32 %v2546, 4294901760
  %2548 = vmatpush.msra.mxu0 %v2547
  %v2549 = vand.u32 %v93, 4294901760
  %v2550 = vsub.f32 %v93, %v2549
  %v2551 = vand.u32 %v2550, 4294901760
  %v2552 = vsub.f32 %v2550, %v2551
  %v2553 = vand.u32 %v2552, 4294901760
  %2554 = vmatpush.msra.mxu0 %v2553
  %v2555 = vand.u32 %v91, 4294901760
  %v2556 = vsub.f32 %v91, %v2555
  %v2557 = vand.u32 %v2556, 4294901760
  %v2558 = vsub.f32 %v2556, %v2557
  %v2559 = vand.u32 %v2558, 4294901760
  %2560 = vmatpush.msra.mxu0 %v2559
  %v2561 = vand.u32 %v89, 4294901760
  %v2562 = vsub.f32 %v89, %v2561
  %v2563 = vand.u32 %v2562, 4294901760
  %v2564 = vsub.f32 %v2562, %v2563
  %v2565 = vand.u32 %v2564, 4294901760
  %2566 = vmatpush.msra.mxu0 %v2565
  %v2567 = vand.u32 %v87, 4294901760
  %v2568 = vsub.f32 %v87, %v2567
  %v2569 = vand.u32 %v2568, 4294901760
  %v2570 = vsub.f32 %v2568, %v2569
  %v2571 = vand.u32 %v2570, 4294901760
  %2572 = vmatpush.msra.mxu0 %v2571
  %v2573 = vand.u32 %v85, 4294901760
  %v2574 = vsub.f32 %v85, %v2573
  %v2575 = vand.u32 %v2574, 4294901760
  %v2576 = vsub.f32 %v2574, %v2575
  %v2577 = vand.u32 %v2576, 4294901760
  %2578 = vmatpush.msra.mxu0 %v2577
  %v2579 = vand.u32 %v83, 4294901760
  %v2580 = vsub.f32 %v83, %v2579
  %v2581 = vand.u32 %v2580, 4294901760
  %v2582 = vsub.f32 %v2580, %v2581
  %v2583 = vand.u32 %v2582, 4294901760
  %2584 = vmatpush.msra.mxu0 %v2583
  %v2585 = vand.u32 %v81, 4294901760
  %v2586 = vsub.f32 %v81, %v2585
  %v2587 = vand.u32 %v2586, 4294901760
  %v2588 = vsub.f32 %v2586, %v2587
  %v2589 = vand.u32 %v2588, 4294901760
  %2590 = vmatpush.msra.mxu0 %v2589
  %v2591 = vand.u32 %v79, 4294901760
  %v2592 = vsub.f32 %v79, %v2591
  %v2593 = vand.u32 %v2592, 4294901760
  %v2594 = vsub.f32 %v2592, %v2593
  %v2595 = vand.u32 %v2594, 4294901760
  %2596 = vmatpush.msra.mxu0 %v2595
  %v2597 = vand.u32 %v77, 4294901760
  %v2598 = vsub.f32 %v77, %v2597
  %v2599 = vand.u32 %v2598, 4294901760
  %v2600 = vsub.f32 %v2598, %v2599
  %v2601 = vand.u32 %v2600, 4294901760
  %2602 = vmatpush.msra.mxu0 %v2601
  %v2603 = vand.u32 %v75, 4294901760
  %v2604 = vsub.f32 %v75, %v2603
  %v2605 = vand.u32 %v2604, 4294901760
  %v2606 = vsub.f32 %v2604, %v2605
  %v2607 = vand.u32 %v2606, 4294901760
  %2608 = vmatpush.msra.mxu0 %v2607
  %v2609 = vand.u32 %v73, 4294901760
  %v2610 = vsub.f32 %v73, %v2609
  %v2611 = vand.u32 %v2610, 4294901760
  %v2612 = vsub.f32 %v2610, %v2611
  %v2613 = vand.u32 %v2612, 4294901760
  %2614 = vmatpush.msra.mxu0 %v2613
  %v2615 = vand.u32 %v71, 4294901760
  %v2616 = vsub.f32 %v71, %v2615
  %v2617 = vand.u32 %v2616, 4294901760
  %v2618 = vsub.f32 %v2616, %v2617
  %v2619 = vand.u32 %v2618, 4294901760
  %2620 = vmatpush.msra.mxu0 %v2619
  %v2621 = vand.u32 %v12, 4294901760
  %2622 = vmatmul.f32.gmra.mxu0 %v2621
  %v2623 = vpop.f32.mrf.mxu0
  %v2624 = vadd.f32 %v2459, %v2623
  %v2625 = vand.u32 %v15, 4294901760
  %2626 = vmatmul.f32.gmra.mxu0 %v2625
  %v2627 = vpop.f32.mrf.mxu0
  %v2628 = vadd.f32 %v2467, %v2627
  %v2629 = vand.u32 %v18, 4294901760
  %2630 = vmatmul.f32.gmra.mxu0 %v2629
  %v2631 = vpop.f32.mrf.mxu0
  %v2632 = vadd.f32 %v2475, %v2631
  %v2633 = vand.u32 %v21, 4294901760
  %2634 = vmatmul.f32.gmra.mxu0 %v2633
  %v2635 = vpop.f32.mrf.mxu0
  %v2636 = vadd.f32 %v2483, %v2635
  %v2637 = vand.u32 %v24, 4294901760
  %2638 = vmatmul.f32.gmra.mxu0 %v2637
  %v2639 = vpop.f32.mrf.mxu0
  %v2640 = vadd.f32 %v2491, %v2639
  %v2641 = vand.u32 %v27, 4294901760
  %2642 = vmatmul.f32.gmra.mxu0 %v2641
  %v2643 = vpop.f32.mrf.mxu0
  %v2644 = vadd.f32 %v2499, %v2643
  %v2645 = vand.u32 %v30, 4294901760
  %2646 = vmatmul.f32.gmra.mxu0 %v2645
  %v2647 = vpop.f32.mrf.mxu0
  %v2648 = vadd.f32 %v2507, %v2647
  %v2649 = vand.u32 %v33, 4294901760
  %2650 = vmatmul.f32.gmra.mxu0 %v2649
  %v2651 = vpop.f32.mrf.mxu0
  %v2652 = vadd.f32 %v2515, %v2651
  %v2653 = vand.u32 %v36, 4294901760
  %2654 = vmatmul.f32.gmra.mxu0 %v2653
  %v2655 = vpop.f32.mrf.mxu0
  %v2656 = vadd.f32 %v2523, %v2655
  %2657 = vdwg.mxu0
  %v2658 = vand.u32 %v101, 4294901760
  %v2659 = vsub.f32 %v101, %v2658
  %2660 = vmatpush.msra.mxu0 %v2659
  %v2661 = vand.u32 %v99, 4294901760
  %v2662 = vsub.f32 %v99, %v2661
  %2663 = vmatpush.msra.mxu0 %v2662
  %v2664 = vand.u32 %v97, 4294901760
  %v2665 = vsub.f32 %v97, %v2664
  %2666 = vmatpush.msra.mxu0 %v2665
  %v2667 = vand.u32 %v95, 4294901760
  %v2668 = vsub.f32 %v95, %v2667
  %2669 = vmatpush.msra.mxu0 %v2668
  %v2670 = vand.u32 %v93, 4294901760
  %v2671 = vsub.f32 %v93, %v2670
  %2672 = vmatpush.msra.mxu0 %v2671
  %v2673 = vand.u32 %v91, 4294901760
  %v2674 = vsub.f32 %v91, %v2673
  %2675 = vmatpush.msra.mxu0 %v2674
  %v2676 = vand.u32 %v89, 4294901760
  %v2677 = vsub.f32 %v89, %v2676
  %2678 = vmatpush.msra.mxu0 %v2677
  %v2679 = vand.u32 %v87, 4294901760
  %v2680 = vsub.f32 %v87, %v2679
  %2681 = vmatpush.msra.mxu0 %v2680
  %v2682 = vand.u32 %v85, 4294901760
  %v2683 = vsub.f32 %v85, %v2682
  %2684 = vmatpush.msra.mxu0 %v2683
  %v2685 = vand.u32 %v83, 4294901760
  %v2686 = vsub.f32 %v83, %v2685
  %2687 = vmatpush.msra.mxu0 %v2686
  %v2688 = vand.u32 %v81, 4294901760
  %v2689 = vsub.f32 %v81, %v2688
  %2690 = vmatpush.msra.mxu0 %v2689
  %v2691 = vand.u32 %v79, 4294901760
  %v2692 = vsub.f32 %v79, %v2691
  %2693 = vmatpush.msra.mxu0 %v2692
  %v2694 = vand.u32 %v77, 4294901760
  %v2695 = vsub.f32 %v77, %v2694
  %2696 = vmatpush.msra.mxu0 %v2695
  %v2697 = vand.u32 %v75, 4294901760
  %v2698 = vsub.f32 %v75, %v2697
  %2699 = vmatpush.msra.mxu0 %v2698
  %v2700 = vand.u32 %v73, 4294901760
  %v2701 = vsub.f32 %v73, %v2700
  %2702 = vmatpush.msra.mxu0 %v2701
  %v2703 = vand.u32 %v71, 4294901760
  %v2704 = vsub.f32 %v71, %v2703
  %2705 = vmatpush.msra.mxu0 %v2704
  %v2706 = vand.u32 %v12, 4294901760
  %v2707 = vsub.f32 %v12, %v2706
  %2708 = vmatmul.f32.gmra.mxu0 %v2707
  %v2709 = vpop.f32.mrf.mxu0
  %v2710 = vadd.f32 %v2624, %v2709
  %v2711 = vand.u32 %v15, 4294901760
  %v2712 = vsub.f32 %v15, %v2711
  %2713 = vmatmul.f32.gmra.mxu0 %v2712
  %v2714 = vpop.f32.mrf.mxu0
  %v2715 = vadd.f32 %v2628, %v2714
  %v2716 = vand.u32 %v18, 4294901760
  %v2717 = vsub.f32 %v18, %v2716
  %2718 = vmatmul.f32.gmra.mxu0 %v2717
  %v2719 = vpop.f32.mrf.mxu0
  %v2720 = vadd.f32 %v2632, %v2719
  %v2721 = vand.u32 %v21, 4294901760
  %v2722 = vsub.f32 %v21, %v2721
  %2723 = vmatmul.f32.gmra.mxu0 %v2722
  %v2724 = vpop.f32.mrf.mxu0
  %v2725 = vadd.f32 %v2636, %v2724
  %v2726 = vand.u32 %v24, 4294901760
  %v2727 = vsub.f32 %v24, %v2726
  %2728 = vmatmul.f32.gmra.mxu0 %v2727
  %v2729 = vpop.f32.mrf.mxu0
  %v2730 = vadd.f32 %v2640, %v2729
  %v2731 = vand.u32 %v27, 4294901760
  %v2732 = vsub.f32 %v27, %v2731
  %2733 = vmatmul.f32.gmra.mxu0 %v2732
  %v2734 = vpop.f32.mrf.mxu0
  %v2735 = vadd.f32 %v2644, %v2734
  %v2736 = vand.u32 %v30, 4294901760
  %v2737 = vsub.f32 %v30, %v2736
  %2738 = vmatmul.f32.gmra.mxu0 %v2737
  %v2739 = vpop.f32.mrf.mxu0
  %v2740 = vadd.f32 %v2648, %v2739
  %v2741 = vand.u32 %v33, 4294901760
  %v2742 = vsub.f32 %v33, %v2741
  %2743 = vmatmul.f32.gmra.mxu0 %v2742
  %v2744 = vpop.f32.mrf.mxu0
  %v2745 = vadd.f32 %v2652, %v2744
  %v2746 = vand.u32 %v36, 4294901760
  %v2747 = vsub.f32 %v36, %v2746
  %2748 = vmatmul.f32.gmra.mxu0 %v2747
  %v2749 = vpop.f32.mrf.mxu0
  %v2750 = vadd.f32 %v2656, %v2749
  %2751 = vdwg.mxu0
  %v2752 = vand.u32 %v101, 4294901760
  %2753 = vmatpush.msra.mxu0 %v2752
  %v2754 = vand.u32 %v99, 4294901760
  %2755 = vmatpush.msra.mxu0 %v2754
  %v2756 = vand.u32 %v97, 4294901760
  %2757 = vmatpush.msra.mxu0 %v2756
  %v2758 = vand.u32 %v95, 4294901760
  %2759 = vmatpush.msra.mxu0 %v2758
  %v2760 = vand.u32 %v93, 4294901760
  %2761 = vmatpush.msra.mxu0 %v2760
  %v2762 = vand.u32 %v91, 4294901760
  %2763 = vmatpush.msra.mxu0 %v2762
  %v2764 = vand.u32 %v89, 4294901760
  %2765 = vmatpush.msra.mxu0 %v2764
  %v2766 = vand.u32 %v87, 4294901760
  %2767 = vmatpush.msra.mxu0 %v2766
  %v2768 = vand.u32 %v85, 4294901760
  %2769 = vmatpush.msra.mxu0 %v2768
  %v2770 = vand.u32 %v83, 4294901760
  %2771 = vmatpush.msra.mxu0 %v2770
  %v2772 = vand.u32 %v81, 4294901760
  %2773 = vmatpush.msra.mxu0 %v2772
  %v2774 = vand.u32 %v79, 4294901760
  %2775 = vmatpush.msra.mxu0 %v2774
  %v2776 = vand.u32 %v77, 4294901760
  %2777 = vmatpush.msra.mxu0 %v2776
  %v2778 = vand.u32 %v75, 4294901760
  %2779 = vmatpush.msra.mxu0 %v2778
  %v2780 = vand.u32 %v73, 4294901760
  %2781 = vmatpush.msra.mxu0 %v2780
  %v2782 = vand.u32 %v71, 4294901760
  %2783 = vmatpush.msra.mxu0 %v2782
  %v2784 = vand.u32 %v12, 4294901760
  %v2785 = vsub.f32 %v12, %v2784
  %v2786 = vand.u32 %v2785, 4294901760
  %2787 = vmatmul.f32.gmra.mxu0 %v2786
  %v2788 = vpop.f32.mrf.mxu0
  %v2789 = vadd.f32 %v2710, %v2788
  %v2790 = vand.u32 %v15, 4294901760
  %v2791 = vsub.f32 %v15, %v2790
  %v2792 = vand.u32 %v2791, 4294901760
  %2793 = vmatmul.f32.gmra.mxu0 %v2792
  %v2794 = vpop.f32.mrf.mxu0
  %v2795 = vadd.f32 %v2715, %v2794
  %v2796 = vand.u32 %v18, 4294901760
  %v2797 = vsub.f32 %v18, %v2796
  %v2798 = vand.u32 %v2797, 4294901760
  %2799 = vmatmul.f32.gmra.mxu0 %v2798
  %v2800 = vpop.f32.mrf.mxu0
  %v2801 = vadd.f32 %v2720, %v2800
  %v2802 = vand.u32 %v21, 4294901760
  %v2803 = vsub.f32 %v21, %v2802
  %v2804 = vand.u32 %v2803, 4294901760
  %2805 = vmatmul.f32.gmra.mxu0 %v2804
  %v2806 = vpop.f32.mrf.mxu0
  %v2807 = vadd.f32 %v2725, %v2806
  %v2808 = vand.u32 %v24, 4294901760
  %v2809 = vsub.f32 %v24, %v2808
  %v2810 = vand.u32 %v2809, 4294901760
  %2811 = vmatmul.f32.gmra.mxu0 %v2810
  %v2812 = vpop.f32.mrf.mxu0
  %v2813 = vadd.f32 %v2730, %v2812
  %v2814 = vand.u32 %v27, 4294901760
  %v2815 = vsub.f32 %v27, %v2814
  %v2816 = vand.u32 %v2815, 4294901760
  %2817 = vmatmul.f32.gmra.mxu0 %v2816
  %v2818 = vpop.f32.mrf.mxu0
  %v2819 = vadd.f32 %v2735, %v2818
  %v2820 = vand.u32 %v30, 4294901760
  %v2821 = vsub.f32 %v30, %v2820
  %v2822 = vand.u32 %v2821, 4294901760
  %2823 = vmatmul.f32.gmra.mxu0 %v2822
  %v2824 = vpop.f32.mrf.mxu0
  %v2825 = vadd.f32 %v2740, %v2824
  %v2826 = vand.u32 %v33, 4294901760
  %v2827 = vsub.f32 %v33, %v2826
  %v2828 = vand.u32 %v2827, 4294901760
  %2829 = vmatmul.f32.gmra.mxu0 %v2828
  %v2830 = vpop.f32.mrf.mxu0
  %v2831 = vadd.f32 %v2745, %v2830
  %v2832 = vand.u32 %v36, 4294901760
  %v2833 = vsub.f32 %v36, %v2832
  %v2834 = vand.u32 %v2833, 4294901760
  %2835 = vmatmul.f32.gmra.mxu0 %v2834
  %v2836 = vpop.f32.mrf.mxu0
  %v2837 = vadd.f32 %v2750, %v2836
  %2838 = vdwg.mxu0
  %v2839 = vand.u32 %v101, 4294901760
  %v2840 = vsub.f32 %v101, %v2839
  %v2841 = vand.u32 %v2840, 4294901760
  %2842 = vmatpush.msra.mxu0 %v2841
  %v2843 = vand.u32 %v99, 4294901760
  %v2844 = vsub.f32 %v99, %v2843
  %v2845 = vand.u32 %v2844, 4294901760
  %2846 = vmatpush.msra.mxu0 %v2845
  %v2847 = vand.u32 %v97, 4294901760
  %v2848 = vsub.f32 %v97, %v2847
  %v2849 = vand.u32 %v2848, 4294901760
  %2850 = vmatpush.msra.mxu0 %v2849
  %v2851 = vand.u32 %v95, 4294901760
  %v2852 = vsub.f32 %v95, %v2851
  %v2853 = vand.u32 %v2852, 4294901760
  %2854 = vmatpush.msra.mxu0 %v2853
  %v2855 = vand.u32 %v93, 4294901760
  %v2856 = vsub.f32 %v93, %v2855
  %v2857 = vand.u32 %v2856, 4294901760
  %2858 = vmatpush.msra.mxu0 %v2857
  %v2859 = vand.u32 %v91, 4294901760
  %v2860 = vsub.f32 %v91, %v2859
  %v2861 = vand.u32 %v2860, 4294901760
  %2862 = vmatpush.msra.mxu0 %v2861
  %v2863 = vand.u32 %v89, 4294901760
  %v2864 = vsub.f32 %v89, %v2863
  %v2865 = vand.u32 %v2864, 4294901760
  %2866 = vmatpush.msra.mxu0 %v2865
  %v2867 = vand.u32 %v87, 4294901760
  %v2868 = vsub.f32 %v87, %v2867
  %v2869 = vand.u32 %v2868, 4294901760
  %2870 = vmatpush.msra.mxu0 %v2869
  %v2871 = vand.u32 %v85, 4294901760
  %v2872 = vsub.f32 %v85, %v2871
  %v2873 = vand.u32 %v2872, 4294901760
  %2874 = vmatpush.msra.mxu0 %v2873
  %v2875 = vand.u32 %v83, 4294901760
  %v2876 = vsub.f32 %v83, %v2875
  %v2877 = vand.u32 %v2876, 4294901760
  %2878 = vmatpush.msra.mxu0 %v2877
  %v2879 = vand.u32 %v81, 4294901760
  %v2880 = vsub.f32 %v81, %v2879
  %v2881 = vand.u32 %v2880, 4294901760
  %2882 = vmatpush.msra.mxu0 %v2881
  %v2883 = vand.u32 %v79, 4294901760
  %v2884 = vsub.f32 %v79, %v2883
  %v2885 = vand.u32 %v2884, 4294901760
  %2886 = vmatpush.msra.mxu0 %v2885
  %v2887 = vand.u32 %v77, 4294901760
  %v2888 = vsub.f32 %v77, %v2887
  %v2889 = vand.u32 %v2888, 4294901760
  %2890 = vmatpush.msra.mxu0 %v2889
  %v2891 = vand.u32 %v75, 4294901760
  %v2892 = vsub.f32 %v75, %v2891
  %v2893 = vand.u32 %v2892, 4294901760
  %2894 = vmatpush.msra.mxu0 %v2893
  %v2895 = vand.u32 %v73, 4294901760
  %v2896 = vsub.f32 %v73, %v2895
  %v2897 = vand.u32 %v2896, 4294901760
  %2898 = vmatpush.msra.mxu0 %v2897
  %v2899 = vand.u32 %v71, 4294901760
  %v2900 = vsub.f32 %v71, %v2899
  %v2901 = vand.u32 %v2900, 4294901760
  %2902 = vmatpush.msra.mxu0 %v2901
  %v2903 = vand.u32 %v12, 4294901760
  %2904 = vmatmul.f32.gmra.mxu0 %v2903
  %v2905 = vpop.f32.mrf.mxu0
  %v2906 = vadd.f32 %v2789, %v2905
  %v2907 = vand.u32 %v15, 4294901760
  %2908 = vmatmul.f32.gmra.mxu0 %v2907
  %v2909 = vpop.f32.mrf.mxu0
  %v2910 = vadd.f32 %v2795, %v2909
  %v2911 = vand.u32 %v18, 4294901760
  %2912 = vmatmul.f32.gmra.mxu0 %v2911
  %v2913 = vpop.f32.mrf.mxu0
  %v2914 = vadd.f32 %v2801, %v2913
  %v2915 = vand.u32 %v21, 4294901760
  %2916 = vmatmul.f32.gmra.mxu0 %v2915
  %v2917 = vpop.f32.mrf.mxu0
  %v2918 = vadd.f32 %v2807, %v2917
  %v2919 = vand.u32 %v24, 4294901760
  %2920 = vmatmul.f32.gmra.mxu0 %v2919
  %v2921 = vpop.f32.mrf.mxu0
  %v2922 = vadd.f32 %v2813, %v2921
  %v2923 = vand.u32 %v27, 4294901760
  %2924 = vmatmul.f32.gmra.mxu0 %v2923
  %v2925 = vpop.f32.mrf.mxu0
  %v2926 = vadd.f32 %v2819, %v2925
  %v2927 = vand.u32 %v30, 4294901760
  %2928 = vmatmul.f32.gmra.mxu0 %v2927
  %v2929 = vpop.f32.mrf.mxu0
  %v2930 = vadd.f32 %v2825, %v2929
  %v2931 = vand.u32 %v33, 4294901760
  %2932 = vmatmul.f32.gmra.mxu0 %v2931
  %v2933 = vpop.f32.mrf.mxu0
  %v2934 = vadd.f32 %v2831, %v2933
  %v2935 = vand.u32 %v36, 4294901760
  %2936 = vmatmul.f32.gmra.mxu0 %v2935
  %v2937 = vpop.f32.mrf.mxu0
  %v2938 = vadd.f32 %v2837, %v2937
  %2939 = vdwg.mxu0
  %v2940 = vand.u32 %v101, 4294901760
  %2941 = vmatpush.msra.mxu0 %v2940
  %v2942 = vand.u32 %v99, 4294901760
  %2943 = vmatpush.msra.mxu0 %v2942
  %v2944 = vand.u32 %v97, 4294901760
  %2945 = vmatpush.msra.mxu0 %v2944
  %v2946 = vand.u32 %v95, 4294901760
  %2947 = vmatpush.msra.mxu0 %v2946
  %v2948 = vand.u32 %v93, 4294901760
  %2949 = vmatpush.msra.mxu0 %v2948
  %v2950 = vand.u32 %v91, 4294901760
  %2951 = vmatpush.msra.mxu0 %v2950
  %v2952 = vand.u32 %v89, 4294901760
  %2953 = vmatpush.msra.mxu0 %v2952
  %v2954 = vand.u32 %v87, 4294901760
  %2955 = vmatpush.msra.mxu0 %v2954
  %v2956 = vand.u32 %v85, 4294901760
  %2957 = vmatpush.msra.mxu0 %v2956
  %v2958 = vand.u32 %v83, 4294901760
  %2959 = vmatpush.msra.mxu0 %v2958
  %v2960 = vand.u32 %v81, 4294901760
  %2961 = vmatpush.msra.mxu0 %v2960
  %v2962 = vand.u32 %v79, 4294901760
  %2963 = vmatpush.msra.mxu0 %v2962
  %v2964 = vand.u32 %v77, 4294901760
  %2965 = vmatpush.msra.mxu0 %v2964
  %v2966 = vand.u32 %v75, 4294901760
  %2967 = vmatpush.msra.mxu0 %v2966
  %v2968 = vand.u32 %v73, 4294901760
  %2969 = vmatpush.msra.mxu0 %v2968
  %v2970 = vand.u32 %v71, 4294901760
  %2971 = vmatpush.msra.mxu0 %v2970
  %v2972 = vand.u32 %v12, 4294901760
  %2973 = vmatmul.f32.gmra.mxu0 %v2972
  %v2974 = vpop.f32.mrf.mxu0
  %v2975 = vadd.f32 %v2906, %v2974
  %v2976 = vand.u32 %v15, 4294901760
  %2977 = vmatmul.f32.gmra.mxu0 %v2976
  %v2978 = vpop.f32.mrf.mxu0
  %v2979 = vadd.f32 %v2910, %v2978
  %v2980 = vand.u32 %v18, 4294901760
  %2981 = vmatmul.f32.gmra.mxu0 %v2980
  %v2982 = vpop.f32.mrf.mxu0
  %v2983 = vadd.f32 %v2914, %v2982
  %v2984 = vand.u32 %v21, 4294901760
  %2985 = vmatmul.f32.gmra.mxu0 %v2984
  %v2986 = vpop.f32.mrf.mxu0
  %v2987 = vadd.f32 %v2918, %v2986
  %v2988 = vand.u32 %v24, 4294901760
  %2989 = vmatmul.f32.gmra.mxu0 %v2988
  %v2990 = vpop.f32.mrf.mxu0
  %v2991 = vadd.f32 %v2922, %v2990
  %v2992 = vand.u32 %v27, 4294901760
  %2993 = vmatmul.f32.gmra.mxu0 %v2992
  %v2994 = vpop.f32.mrf.mxu0
  %v2995 = vadd.f32 %v2926, %v2994
  %v2996 = vand.u32 %v30, 4294901760
  %2997 = vmatmul.f32.gmra.mxu0 %v2996
  %v2998 = vpop.f32.mrf.mxu0
  %v2999 = vadd.f32 %v2930, %v2998
  %v3000 = vand.u32 %v33, 4294901760
  %3001 = vmatmul.f32.gmra.mxu0 %v3000
  %v3002 = vpop.f32.mrf.mxu0
  %v3003 = vadd.f32 %v2934, %v3002
  %v3004 = vand.u32 %v36, 4294901760
  %3005 = vmatmul.f32.gmra.mxu0 %v3004
  %v3006 = vpop.f32.mrf.mxu0
  %v3007 = vadd.f32 %v2938, %v3006
  %3008 = vdwg.mxu0
  %3009 = vmatpush.msra.mxu0 0.0
  %3010 = vmatpush.msra.mxu0 0.0
  %3011 = vmatpush.msra.mxu0 0.0
  %3012 = vmatpush.msra.mxu0 0.0
  %3013 = vmatpush.msra.mxu0 0.0
  %3014 = vmatpush.msra.mxu0 0.0
  %3015 = vmatpush.msra.mxu0 0.0
  %v3016 = vand.u32 %v119, 4294901760
  %3017 = vmatpush.msra.mxu0 %v3016
  %v3018 = vand.u32 %v117, 4294901760
  %3019 = vmatpush.msra.mxu0 %v3018
  %v3020 = vand.u32 %v115, 4294901760
  %3021 = vmatpush.msra.mxu0 %v3020
  %v3022 = vand.u32 %v113, 4294901760
  %3023 = vmatpush.msra.mxu0 %v3022
  %v3024 = vand.u32 %v111, 4294901760
  %3025 = vmatpush.msra.mxu0 %v3024
  %v3026 = vand.u32 %v109, 4294901760
  %3027 = vmatpush.msra.mxu0 %v3026
  %v3028 = vand.u32 %v107, 4294901760
  %3029 = vmatpush.msra.mxu0 %v3028
  %v3030 = vand.u32 %v105, 4294901760
  %3031 = vmatpush.msra.mxu0 %v3030
  %v3032 = vand.u32 %v103, 4294901760
  %3033 = vmatpush.msra.mxu0 %v3032
  %v3034 = vand.u32 %v129, 4294901760
  %v3035 = vsub.f32 %v129, %v3034
  %v3036 = vand.u32 %v3035, 4294901760
  %v3037 = vsub.f32 %v3035, %v3036
  %v3038 = vand.u32 %v3037, 4294901760
  %3039 = vmatmul.f32.gmra.mxu0 %v3038
  %v3040 = vpop.f32.mrf.mxu0
  %v3041 = vadd.f32 %v2975, %v3040
  %v3042 = vand.u32 %v132, 4294901760
  %v3043 = vsub.f32 %v132, %v3042
  %v3044 = vand.u32 %v3043, 4294901760
  %v3045 = vsub.f32 %v3043, %v3044
  %v3046 = vand.u32 %v3045, 4294901760
  %3047 = vmatmul.f32.gmra.mxu0 %v3046
  %v3048 = vpop.f32.mrf.mxu0
  %v3049 = vadd.f32 %v2979, %v3048
  %v3050 = vand.u32 %v135, 4294901760
  %v3051 = vsub.f32 %v135, %v3050
  %v3052 = vand.u32 %v3051, 4294901760
  %v3053 = vsub.f32 %v3051, %v3052
  %v3054 = vand.u32 %v3053, 4294901760
  %3055 = vmatmul.f32.gmra.mxu0 %v3054
  %v3056 = vpop.f32.mrf.mxu0
  %v3057 = vadd.f32 %v2983, %v3056
  %v3058 = vand.u32 %v138, 4294901760
  %v3059 = vsub.f32 %v138, %v3058
  %v3060 = vand.u32 %v3059, 4294901760
  %v3061 = vsub.f32 %v3059, %v3060
  %v3062 = vand.u32 %v3061, 4294901760
  %3063 = vmatmul.f32.gmra.mxu0 %v3062
  %v3064 = vpop.f32.mrf.mxu0
  %v3065 = vadd.f32 %v2987, %v3064
  %v3066 = vand.u32 %v141, 4294901760
  %v3067 = vsub.f32 %v141, %v3066
  %v3068 = vand.u32 %v3067, 4294901760
  %v3069 = vsub.f32 %v3067, %v3068
  %v3070 = vand.u32 %v3069, 4294901760
  %3071 = vmatmul.f32.gmra.mxu0 %v3070
  %v3072 = vpop.f32.mrf.mxu0
  %v3073 = vadd.f32 %v2991, %v3072
  %v3074 = vand.u32 %v144, 4294901760
  %v3075 = vsub.f32 %v144, %v3074
  %v3076 = vand.u32 %v3075, 4294901760
  %v3077 = vsub.f32 %v3075, %v3076
  %v3078 = vand.u32 %v3077, 4294901760
  %3079 = vmatmul.f32.gmra.mxu0 %v3078
  %v3080 = vpop.f32.mrf.mxu0
  %v3081 = vadd.f32 %v2995, %v3080
  %v3082 = vand.u32 %v147, 4294901760
  %v3083 = vsub.f32 %v147, %v3082
  %v3084 = vand.u32 %v3083, 4294901760
  %v3085 = vsub.f32 %v3083, %v3084
  %v3086 = vand.u32 %v3085, 4294901760
  %3087 = vmatmul.f32.gmra.mxu0 %v3086
  %v3088 = vpop.f32.mrf.mxu0
  %v3089 = vadd.f32 %v2999, %v3088
  %v3090 = vand.u32 %v150, 4294901760
  %v3091 = vsub.f32 %v150, %v3090
  %v3092 = vand.u32 %v3091, 4294901760
  %v3093 = vsub.f32 %v3091, %v3092
  %v3094 = vand.u32 %v3093, 4294901760
  %3095 = vmatmul.f32.gmra.mxu0 %v3094
  %v3096 = vpop.f32.mrf.mxu0
  %v3097 = vadd.f32 %v3003, %v3096
  %v3098 = vand.u32 %v153, 4294901760
  %v3099 = vsub.f32 %v153, %v3098
  %v3100 = vand.u32 %v3099, 4294901760
  %v3101 = vsub.f32 %v3099, %v3100
  %v3102 = vand.u32 %v3101, 4294901760
  %3103 = vmatmul.f32.gmra.mxu0 %v3102
  %v3104 = vpop.f32.mrf.mxu0
  %v3105 = vadd.f32 %v3007, %v3104
  %3106 = vdwg.mxu0
  %3107 = vmatpush.msra.mxu0 0.0
  %3108 = vmatpush.msra.mxu0 0.0
  %3109 = vmatpush.msra.mxu0 0.0
  %3110 = vmatpush.msra.mxu0 0.0
  %3111 = vmatpush.msra.mxu0 0.0
  %3112 = vmatpush.msra.mxu0 0.0
  %3113 = vmatpush.msra.mxu0 0.0
  %v3114 = vand.u32 %v119, 4294901760
  %v3115 = vsub.f32 %v119, %v3114
  %v3116 = vand.u32 %v3115, 4294901760
  %v3117 = vsub.f32 %v3115, %v3116
  %v3118 = vand.u32 %v3117, 4294901760
  %3119 = vmatpush.msra.mxu0 %v3118
  %v3120 = vand.u32 %v117, 4294901760
  %v3121 = vsub.f32 %v117, %v3120
  %v3122 = vand.u32 %v3121, 4294901760
  %v3123 = vsub.f32 %v3121, %v3122
  %v3124 = vand.u32 %v3123, 4294901760
  %3125 = vmatpush.msra.mxu0 %v3124
  %v3126 = vand.u32 %v115, 4294901760
  %v3127 = vsub.f32 %v115, %v3126
  %v3128 = vand.u32 %v3127, 4294901760
  %v3129 = vsub.f32 %v3127, %v3128
  %v3130 = vand.u32 %v3129, 4294901760
  %3131 = vmatpush.msra.mxu0 %v3130
  %v3132 = vand.u32 %v113, 4294901760
  %v3133 = vsub.f32 %v113, %v3132
  %v3134 = vand.u32 %v3133, 4294901760
  %v3135 = vsub.f32 %v3133, %v3134
  %v3136 = vand.u32 %v3135, 4294901760
  %3137 = vmatpush.msra.mxu0 %v3136
  %v3138 = vand.u32 %v111, 4294901760
  %v3139 = vsub.f32 %v111, %v3138
  %v3140 = vand.u32 %v3139, 4294901760
  %v3141 = vsub.f32 %v3139, %v3140
  %v3142 = vand.u32 %v3141, 4294901760
  %3143 = vmatpush.msra.mxu0 %v3142
  %v3144 = vand.u32 %v109, 4294901760
  %v3145 = vsub.f32 %v109, %v3144
  %v3146 = vand.u32 %v3145, 4294901760
  %v3147 = vsub.f32 %v3145, %v3146
  %v3148 = vand.u32 %v3147, 4294901760
  %3149 = vmatpush.msra.mxu0 %v3148
  %v3150 = vand.u32 %v107, 4294901760
  %v3151 = vsub.f32 %v107, %v3150
  %v3152 = vand.u32 %v3151, 4294901760
  %v3153 = vsub.f32 %v3151, %v3152
  %v3154 = vand.u32 %v3153, 4294901760
  %3155 = vmatpush.msra.mxu0 %v3154
  %v3156 = vand.u32 %v105, 4294901760
  %v3157 = vsub.f32 %v105, %v3156
  %v3158 = vand.u32 %v3157, 4294901760
  %v3159 = vsub.f32 %v3157, %v3158
  %v3160 = vand.u32 %v3159, 4294901760
  %3161 = vmatpush.msra.mxu0 %v3160
  %v3162 = vand.u32 %v103, 4294901760
  %v3163 = vsub.f32 %v103, %v3162
  %v3164 = vand.u32 %v3163, 4294901760
  %v3165 = vsub.f32 %v3163, %v3164
  %v3166 = vand.u32 %v3165, 4294901760
  %3167 = vmatpush.msra.mxu0 %v3166
  %v3168 = vand.u32 %v129, 4294901760
  %3169 = vmatmul.f32.gmra.mxu0 %v3168
  %v3170 = vpop.f32.mrf.mxu0
  %v3171 = vadd.f32 %v3041, %v3170
  %v3172 = vand.u32 %v132, 4294901760
  %3173 = vmatmul.f32.gmra.mxu0 %v3172
  %v3174 = vpop.f32.mrf.mxu0
  %v3175 = vadd.f32 %v3049, %v3174
  %v3176 = vand.u32 %v135, 4294901760
  %3177 = vmatmul.f32.gmra.mxu0 %v3176
  %v3178 = vpop.f32.mrf.mxu0
  %v3179 = vadd.f32 %v3057, %v3178
  %v3180 = vand.u32 %v138, 4294901760
  %3181 = vmatmul.f32.gmra.mxu0 %v3180
  %v3182 = vpop.f32.mrf.mxu0
  %v3183 = vadd.f32 %v3065, %v3182
  %v3184 = vand.u32 %v141, 4294901760
  %3185 = vmatmul.f32.gmra.mxu0 %v3184
  %v3186 = vpop.f32.mrf.mxu0
  %v3187 = vadd.f32 %v3073, %v3186
  %v3188 = vand.u32 %v144, 4294901760
  %3189 = vmatmul.f32.gmra.mxu0 %v3188
  %v3190 = vpop.f32.mrf.mxu0
  %v3191 = vadd.f32 %v3081, %v3190
  %v3192 = vand.u32 %v147, 4294901760
  %3193 = vmatmul.f32.gmra.mxu0 %v3192
  %v3194 = vpop.f32.mrf.mxu0
  %v3195 = vadd.f32 %v3089, %v3194
  %v3196 = vand.u32 %v150, 4294901760
  %3197 = vmatmul.f32.gmra.mxu0 %v3196
  %v3198 = vpop.f32.mrf.mxu0
  %v3199 = vadd.f32 %v3097, %v3198
  %v3200 = vand.u32 %v153, 4294901760
  %3201 = vmatmul.f32.gmra.mxu0 %v3200
  %v3202 = vpop.f32.mrf.mxu0
  %v3203 = vadd.f32 %v3105, %v3202
  %3204 = vdwg.mxu0
  %3205 = vmatpush.msra.mxu0 0.0
  %3206 = vmatpush.msra.mxu0 0.0
  %3207 = vmatpush.msra.mxu0 0.0
  %3208 = vmatpush.msra.mxu0 0.0
  %3209 = vmatpush.msra.mxu0 0.0
  %3210 = vmatpush.msra.mxu0 0.0
  %3211 = vmatpush.msra.mxu0 0.0
  %v3212 = vand.u32 %v119, 4294901760
  %v3213 = vsub.f32 %v119, %v3212
  %3214 = vmatpush.msra.mxu0 %v3213
  %v3215 = vand.u32 %v117, 4294901760
  %v3216 = vsub.f32 %v117, %v3215
  %3217 = vmatpush.msra.mxu0 %v3216
  %v3218 = vand.u32 %v115, 4294901760
  %v3219 = vsub.f32 %v115, %v3218
  %3220 = vmatpush.msra.mxu0 %v3219
  %v3221 = vand.u32 %v113, 4294901760
  %v3222 = vsub.f32 %v113, %v3221
  %3223 = vmatpush.msra.mxu0 %v3222
  %v3224 = vand.u32 %v111, 4294901760
  %v3225 = vsub.f32 %v111, %v3224
  %3226 = vmatpush.msra.mxu0 %v3225
  %v3227 = vand.u32 %v109, 4294901760
  %v3228 = vsub.f32 %v109, %v3227
  %3229 = vmatpush.msra.mxu0 %v3228
  %v3230 = vand.u32 %v107, 4294901760
  %v3231 = vsub.f32 %v107, %v3230
  %3232 = vmatpush.msra.mxu0 %v3231
  %v3233 = vand.u32 %v105, 4294901760
  %v3234 = vsub.f32 %v105, %v3233
  %3235 = vmatpush.msra.mxu0 %v3234
  %v3236 = vand.u32 %v103, 4294901760
  %v3237 = vsub.f32 %v103, %v3236
  %3238 = vmatpush.msra.mxu0 %v3237
  %v3239 = vand.u32 %v129, 4294901760
  %v3240 = vsub.f32 %v129, %v3239
  %3241 = vmatmul.f32.gmra.mxu0 %v3240
  %v3242 = vpop.f32.mrf.mxu0
  %v3243 = vadd.f32 %v3171, %v3242
  %v3244 = vand.u32 %v132, 4294901760
  %v3245 = vsub.f32 %v132, %v3244
  %3246 = vmatmul.f32.gmra.mxu0 %v3245
  %v3247 = vpop.f32.mrf.mxu0
  %v3248 = vadd.f32 %v3175, %v3247
  %v3249 = vand.u32 %v135, 4294901760
  %v3250 = vsub.f32 %v135, %v3249
  %3251 = vmatmul.f32.gmra.mxu0 %v3250
  %v3252 = vpop.f32.mrf.mxu0
  %v3253 = vadd.f32 %v3179, %v3252
  %v3254 = vand.u32 %v138, 4294901760
  %v3255 = vsub.f32 %v138, %v3254
  %3256 = vmatmul.f32.gmra.mxu0 %v3255
  %v3257 = vpop.f32.mrf.mxu0
  %v3258 = vadd.f32 %v3183, %v3257
  %v3259 = vand.u32 %v141, 4294901760
  %v3260 = vsub.f32 %v141, %v3259
  %3261 = vmatmul.f32.gmra.mxu0 %v3260
  %v3262 = vpop.f32.mrf.mxu0
  %v3263 = vadd.f32 %v3187, %v3262
  %v3264 = vand.u32 %v144, 4294901760
  %v3265 = vsub.f32 %v144, %v3264
  %3266 = vmatmul.f32.gmra.mxu0 %v3265
  %v3267 = vpop.f32.mrf.mxu0
  %v3268 = vadd.f32 %v3191, %v3267
  %v3269 = vand.u32 %v147, 4294901760
  %v3270 = vsub.f32 %v147, %v3269
  %3271 = vmatmul.f32.gmra.mxu0 %v3270
  %v3272 = vpop.f32.mrf.mxu0
  %v3273 = vadd.f32 %v3195, %v3272
  %v3274 = vand.u32 %v150, 4294901760
  %v3275 = vsub.f32 %v150, %v3274
  %3276 = vmatmul.f32.gmra.mxu0 %v3275
  %v3277 = vpop.f32.mrf.mxu0
  %v3278 = vadd.f32 %v3199, %v3277
  %v3279 = vand.u32 %v153, 4294901760
  %v3280 = vsub.f32 %v153, %v3279
  %3281 = vmatmul.f32.gmra.mxu0 %v3280
  %v3282 = vpop.f32.mrf.mxu0
  %v3283 = vadd.f32 %v3203, %v3282
  %3284 = vdwg.mxu0
  %3285 = vmatpush.msra.mxu0 0.0
  %3286 = vmatpush.msra.mxu0 0.0
  %3287 = vmatpush.msra.mxu0 0.0
  %3288 = vmatpush.msra.mxu0 0.0
  %3289 = vmatpush.msra.mxu0 0.0
  %3290 = vmatpush.msra.mxu0 0.0
  %3291 = vmatpush.msra.mxu0 0.0
  %v3292 = vand.u32 %v119, 4294901760
  %3293 = vmatpush.msra.mxu0 %v3292
  %v3294 = vand.u32 %v117, 4294901760
  %3295 = vmatpush.msra.mxu0 %v3294
  %v3296 = vand.u32 %v115, 4294901760
  %3297 = vmatpush.msra.mxu0 %v3296
  %v3298 = vand.u32 %v113, 4294901760
  %3299 = vmatpush.msra.mxu0 %v3298
  %v3300 = vand.u32 %v111, 4294901760
  %3301 = vmatpush.msra.mxu0 %v3300
  %v3302 = vand.u32 %v109, 4294901760
  %3303 = vmatpush.msra.mxu0 %v3302
  %v3304 = vand.u32 %v107, 4294901760
  %3305 = vmatpush.msra.mxu0 %v3304
  %v3306 = vand.u32 %v105, 4294901760
  %3307 = vmatpush.msra.mxu0 %v3306
  %v3308 = vand.u32 %v103, 4294901760
  %3309 = vmatpush.msra.mxu0 %v3308
  %v3310 = vand.u32 %v129, 4294901760
  %v3311 = vsub.f32 %v129, %v3310
  %v3312 = vand.u32 %v3311, 4294901760
  %3313 = vmatmul.f32.gmra.mxu0 %v3312
  %v3314 = vpop.f32.mrf.mxu0
  %v3315 = vadd.f32 %v3243, %v3314
  %v3316 = vand.u32 %v132, 4294901760
  %v3317 = vsub.f32 %v132, %v3316
  %v3318 = vand.u32 %v3317, 4294901760
  %3319 = vmatmul.f32.gmra.mxu0 %v3318
  %v3320 = vpop.f32.mrf.mxu0
  %v3321 = vadd.f32 %v3248, %v3320
  %v3322 = vand.u32 %v135, 4294901760
  %v3323 = vsub.f32 %v135, %v3322
  %v3324 = vand.u32 %v3323, 4294901760
  %3325 = vmatmul.f32.gmra.mxu0 %v3324
  %v3326 = vpop.f32.mrf.mxu0
  %v3327 = vadd.f32 %v3253, %v3326
  %v3328 = vand.u32 %v138, 4294901760
  %v3329 = vsub.f32 %v138, %v3328
  %v3330 = vand.u32 %v3329, 4294901760
  %3331 = vmatmul.f32.gmra.mxu0 %v3330
  %v3332 = vpop.f32.mrf.mxu0
  %v3333 = vadd.f32 %v3258, %v3332
  %v3334 = vand.u32 %v141, 4294901760
  %v3335 = vsub.f32 %v141, %v3334
  %v3336 = vand.u32 %v3335, 4294901760
  %3337 = vmatmul.f32.gmra.mxu0 %v3336
  %v3338 = vpop.f32.mrf.mxu0
  %v3339 = vadd.f32 %v3263, %v3338
  %v3340 = vand.u32 %v144, 4294901760
  %v3341 = vsub.f32 %v144, %v3340
  %v3342 = vand.u32 %v3341, 4294901760
  %3343 = vmatmul.f32.gmra.mxu0 %v3342
  %v3344 = vpop.f32.mrf.mxu0
  %v3345 = vadd.f32 %v3268, %v3344
  %v3346 = vand.u32 %v147, 4294901760
  %v3347 = vsub.f32 %v147, %v3346
  %v3348 = vand.u32 %v3347, 4294901760
  %3349 = vmatmul.f32.gmra.mxu0 %v3348
  %v3350 = vpop.f32.mrf.mxu0
  %v3351 = vadd.f32 %v3273, %v3350
  %v3352 = vand.u32 %v150, 4294901760
  %v3353 = vsub.f32 %v150, %v3352
  %v3354 = vand.u32 %v3353, 4294901760
  %3355 = vmatmul.f32.gmra.mxu0 %v3354
  %v3356 = vpop.f32.mrf.mxu0
  %v3357 = vadd.f32 %v3278, %v3356
  %v3358 = vand.u32 %v153, 4294901760
  %v3359 = vsub.f32 %v153, %v3358
  %v3360 = vand.u32 %v3359, 4294901760
  %3361 = vmatmul.f32.gmra.mxu0 %v3360
  %v3362 = vpop.f32.mrf.mxu0
  %v3363 = vadd.f32 %v3283, %v3362
  %3364 = vdwg.mxu0
  %3365 = vmatpush.msra.mxu0 0.0
  %3366 = vmatpush.msra.mxu0 0.0
  %3367 = vmatpush.msra.mxu0 0.0
  %3368 = vmatpush.msra.mxu0 0.0
  %3369 = vmatpush.msra.mxu0 0.0
  %3370 = vmatpush.msra.mxu0 0.0
  %3371 = vmatpush.msra.mxu0 0.0
  %v3372 = vand.u32 %v119, 4294901760
  %v3373 = vsub.f32 %v119, %v3372
  %v3374 = vand.u32 %v3373, 4294901760
  %3375 = vmatpush.msra.mxu0 %v3374
  %v3376 = vand.u32 %v117, 4294901760
  %v3377 = vsub.f32 %v117, %v3376
  %v3378 = vand.u32 %v3377, 4294901760
  %3379 = vmatpush.msra.mxu0 %v3378
  %v3380 = vand.u32 %v115, 4294901760
  %v3381 = vsub.f32 %v115, %v3380
  %v3382 = vand.u32 %v3381, 4294901760
  %3383 = vmatpush.msra.mxu0 %v3382
  %v3384 = vand.u32 %v113, 4294901760
  %v3385 = vsub.f32 %v113, %v3384
  %v3386 = vand.u32 %v3385, 4294901760
  %3387 = vmatpush.msra.mxu0 %v3386
  %v3388 = vand.u32 %v111, 4294901760
  %v3389 = vsub.f32 %v111, %v3388
  %v3390 = vand.u32 %v3389, 4294901760
  %3391 = vmatpush.msra.mxu0 %v3390
  %v3392 = vand.u32 %v109, 4294901760
  %v3393 = vsub.f32 %v109, %v3392
  %v3394 = vand.u32 %v3393, 4294901760
  %3395 = vmatpush.msra.mxu0 %v3394
  %v3396 = vand.u32 %v107, 4294901760
  %v3397 = vsub.f32 %v107, %v3396
  %v3398 = vand.u32 %v3397, 4294901760
  %3399 = vmatpush.msra.mxu0 %v3398
  %v3400 = vand.u32 %v105, 4294901760
  %v3401 = vsub.f32 %v105, %v3400
  %v3402 = vand.u32 %v3401, 4294901760
  %3403 = vmatpush.msra.mxu0 %v3402
  %v3404 = vand.u32 %v103, 4294901760
  %v3405 = vsub.f32 %v103, %v3404
  %v3406 = vand.u32 %v3405, 4294901760
  %3407 = vmatpush.msra.mxu0 %v3406
  %v3408 = vand.u32 %v129, 4294901760
  %3409 = vmatmul.f32.gmra.mxu0 %v3408
  %v3410 = vpop.f32.mrf.mxu0
  %v3411 = vadd.f32 %v3315, %v3410
  %v3412 = vand.u32 %v132, 4294901760
  %3413 = vmatmul.f32.gmra.mxu0 %v3412
  %v3414 = vpop.f32.mrf.mxu0
  %v3415 = vadd.f32 %v3321, %v3414
  %v3416 = vand.u32 %v135, 4294901760
  %3417 = vmatmul.f32.gmra.mxu0 %v3416
  %v3418 = vpop.f32.mrf.mxu0
  %v3419 = vadd.f32 %v3327, %v3418
  %v3420 = vand.u32 %v138, 4294901760
  %3421 = vmatmul.f32.gmra.mxu0 %v3420
  %v3422 = vpop.f32.mrf.mxu0
  %v3423 = vadd.f32 %v3333, %v3422
  %v3424 = vand.u32 %v141, 4294901760
  %3425 = vmatmul.f32.gmra.mxu0 %v3424
  %v3426 = vpop.f32.mrf.mxu0
  %v3427 = vadd.f32 %v3339, %v3426
  %v3428 = vand.u32 %v144, 4294901760
  %3429 = vmatmul.f32.gmra.mxu0 %v3428
  %v3430 = vpop.f32.mrf.mxu0
  %v3431 = vadd.f32 %v3345, %v3430
  %v3432 = vand.u32 %v147, 4294901760
  %3433 = vmatmul.f32.gmra.mxu0 %v3432
  %v3434 = vpop.f32.mrf.mxu0
  %v3435 = vadd.f32 %v3351, %v3434
  %v3436 = vand.u32 %v150, 4294901760
  %3437 = vmatmul.f32.gmra.mxu0 %v3436
  %v3438 = vpop.f32.mrf.mxu0
  %v3439 = vadd.f32 %v3357, %v3438
  %v3440 = vand.u32 %v153, 4294901760
  %3441 = vmatmul.f32.gmra.mxu0 %v3440
  %v3442 = vpop.f32.mrf.mxu0
  %v3443 = vadd.f32 %v3363, %v3442
  %3444 = vdwg.mxu0
  %3445 = vmatpush.msra.mxu0 0.0
  %3446 = vmatpush.msra.mxu0 0.0
  %3447 = vmatpush.msra.mxu0 0.0
  %3448 = vmatpush.msra.mxu0 0.0
  %3449 = vmatpush.msra.mxu0 0.0
  %3450 = vmatpush.msra.mxu0 0.0
  %3451 = vmatpush.msra.mxu0 0.0
  %v3452 = vand.u32 %v119, 4294901760
  %3453 = vmatpush.msra.mxu0 %v3452
  %v3454 = vand.u32 %v117, 4294901760
  %3455 = vmatpush.msra.mxu0 %v3454
  %v3456 = vand.u32 %v115, 4294901760
  %3457 = vmatpush.msra.mxu0 %v3456
  %v3458 = vand.u32 %v113, 4294901760
  %3459 = vmatpush.msra.mxu0 %v3458
  %v3460 = vand.u32 %v111, 4294901760
  %3461 = vmatpush.msra.mxu0 %v3460
  %v3462 = vand.u32 %v109, 4294901760
  %3463 = vmatpush.msra.mxu0 %v3462
  %v3464 = vand.u32 %v107, 4294901760
  %3465 = vmatpush.msra.mxu0 %v3464
  %v3466 = vand.u32 %v105, 4294901760
  %3467 = vmatpush.msra.mxu0 %v3466
  %v3468 = vand.u32 %v103, 4294901760
  %3469 = vmatpush.msra.mxu0 %v3468
  %v3470 = vand.u32 %v129, 4294901760
  %3471 = vmatmul.f32.gmra.mxu0 %v3470
  %v3472 = vpop.f32.mrf.mxu0
  %v3473 = vadd.f32 %v3411, %v3472
  %v3474 = vand.u32 %v132, 4294901760
  %3475 = vmatmul.f32.gmra.mxu0 %v3474
  %v3476 = vpop.f32.mrf.mxu0
  %v3477 = vadd.f32 %v3415, %v3476
  %v3478 = vand.u32 %v135, 4294901760
  %3479 = vmatmul.f32.gmra.mxu0 %v3478
  %v3480 = vpop.f32.mrf.mxu0
  %v3481 = vadd.f32 %v3419, %v3480
  %v3482 = vand.u32 %v138, 4294901760
  %3483 = vmatmul.f32.gmra.mxu0 %v3482
  %v3484 = vpop.f32.mrf.mxu0
  %v3485 = vadd.f32 %v3423, %v3484
  %v3486 = vand.u32 %v141, 4294901760
  %3487 = vmatmul.f32.gmra.mxu0 %v3486
  %v3488 = vpop.f32.mrf.mxu0
  %v3489 = vadd.f32 %v3427, %v3488
  %v3490 = vand.u32 %v144, 4294901760
  %3491 = vmatmul.f32.gmra.mxu0 %v3490
  %v3492 = vpop.f32.mrf.mxu0
  %v3493 = vadd.f32 %v3431, %v3492
  %v3494 = vand.u32 %v147, 4294901760
  %3495 = vmatmul.f32.gmra.mxu0 %v3494
  %v3496 = vpop.f32.mrf.mxu0
  %v3497 = vadd.f32 %v3435, %v3496
  %v3498 = vand.u32 %v150, 4294901760
  %3499 = vmatmul.f32.gmra.mxu0 %v3498
  %v3500 = vpop.f32.mrf.mxu0
  %v3501 = vadd.f32 %v3439, %v3500
  %v3502 = vand.u32 %v153, 4294901760
  %3503 = vmatmul.f32.gmra.mxu0 %v3502
  %v3504 = vpop.f32.mrf.mxu0
  %v3505 = vadd.f32 %v3443, %v3504
  %3506 = vdwg.mxu0
  %v3507 = vmax.f32 %v1797, 0.0
  %v3508 = vmax.f32 %v3473, 0.0
  %v3509 = vmax.f32 %v1801, 0.0
  %v3510 = vmax.f32 %v3477, 0.0
  %v3511 = vmax.f32 %v1805, 0.0
  %v3512 = vmax.f32 %v3481, 0.0
  %v3513 = vmax.f32 %v1809, 0.0
  %v3514 = vmax.f32 %v3485, 0.0
  %v3515 = vmax.f32 %v1813, 0.0
  %v3516 = vmax.f32 %v3489, 0.0
  %v3517 = vmax.f32 %v1817, 0.0
  %v3518 = vmax.f32 %v3493, 0.0
  %v3519 = vmax.f32 %v1821, 0.0
  %v3520 = vmax.f32 %v3497, 0.0
  %v3521 = vmax.f32 %v1825, 0.0
  %v3522 = vmax.f32 %v3501, 0.0
  %v3523 = vmax.f32 %v1829, 0.0
  %v3524 = vmax.f32 %v3505, 0.0
  %v3525 = vld [vmem:[%s1 + $0x2a0] sm:$0xff]
  %v3526 = vld [vmem:[%s1 + $0x2b0] sm:$0xff]
  %v3527 = vld [vmem:[%s1 + $0x2c0] sm:$0xff]
  %v3528 = vld [vmem:[%s1 + $0x2d0] sm:$0xff]
  %v3529 = vld [vmem:[%s1 + $0x2e0] sm:$0xff]
  %v3530 = vld [vmem:[%s1 + $0x2f0] sm:$0xff]
  %v3531 = vld [vmem:[%s1 + $0x300] sm:$0xff]
  %v3532 = vld [vmem:[%s1 + $0x310] sm:$0xff]
  %v3533 = vld [vmem:[%s1 + $0x320] sm:$0xff]
  %v3534 = vld [vmem:[%s1 + $0x330] sm:$0xff]
  %v3535 = vld [vmem:[%s1 + $0x340] sm:$0xff]
  %v3536 = vld [vmem:[%s1 + $0x350] sm:$0xff]
  %v3537 = vld [vmem:[%s1 + $0x360] sm:$0xff]
  %v3538 = vld [vmem:[%s1 + $0x370] sm:$0xff]
  %v3539 = vld [vmem:[%s1 + $0x380] sm:$0xff]
  %v3540 = vld [vmem:[%s1 + $0x390] sm:$0xff]
  %v3541 = vld [vmem:[%s1 + $0x3a0] sm:$0xff]
  %v3542 = vld [vmem:[%s1 + $0x3b0] sm:$0xff]
  %v3543 = vld [vmem:[%s1 + $0x3c0] ss:$0 sm:$0xff]
  %vm3544 = vcmask 130048
  %v3546 = vsel %vm3544, %v3508, 0
  %v3549 = vsel %vm3544, %v3510, 0
  %v3552 = vsel %vm3544, %v3512, 0
  %v3555 = vsel %vm3544, %v3514, 0
  %v3558 = vsel %vm3544, %v3516, 0
  %v3561 = vsel %vm3544, %v3518, 0
  %v3564 = vsel %vm3544, %v3520, 0
  %v3567 = vsel %vm3544, %v3522, 0
  %v3570 = vsel %vm3544, %v3524, 0
  %v3572 = vand.u32 %v3540, 4294901760
  %3573 = vmatpush.msra.mxu0 %v3572
  %v3574 = vand.u32 %v3539, 4294901760
  %3575 = vmatpush.msra.mxu0 %v3574
  %v3576 = vand.u32 %v3538, 4294901760
  %3577 = vmatpush.msra.mxu0 %v3576
  %v3578 = vand.u32 %v3537, 4294901760
  %3579 = vmatpush.msra.mxu0 %v3578
  %v3580 = vand.u32 %v3536, 4294901760
  %3581 = vmatpush.msra.mxu0 %v3580
  %v3582 = vand.u32 %v3535, 4294901760
  %3583 = vmatpush.msra.mxu0 %v3582
  %v3584 = vand.u32 %v3534, 4294901760
  %3585 = vmatpush.msra.mxu0 %v3584
  %v3586 = vand.u32 %v3533, 4294901760
  %3587 = vmatpush.msra.mxu0 %v3586
  %v3588 = vand.u32 %v3532, 4294901760
  %3589 = vmatpush.msra.mxu0 %v3588
  %v3590 = vand.u32 %v3531, 4294901760
  %3591 = vmatpush.msra.mxu0 %v3590
  %v3592 = vand.u32 %v3530, 4294901760
  %3593 = vmatpush.msra.mxu0 %v3592
  %v3594 = vand.u32 %v3529, 4294901760
  %3595 = vmatpush.msra.mxu0 %v3594
  %v3596 = vand.u32 %v3528, 4294901760
  %3597 = vmatpush.msra.mxu0 %v3596
  %v3598 = vand.u32 %v3527, 4294901760
  %3599 = vmatpush.msra.mxu0 %v3598
  %v3600 = vand.u32 %v3526, 4294901760
  %3601 = vmatpush.msra.mxu0 %v3600
  %v3602 = vand.u32 %v3525, 4294901760
  %3603 = vmatpush.msra.mxu0 %v3602
  %v3604 = vand.u32 %v3507, 4294901760
  %v3605 = vsub.f32 %v3507, %v3604
  %v3606 = vand.u32 %v3605, 4294901760
  %v3607 = vsub.f32 %v3605, %v3606
  %v3608 = vand.u32 %v3607, 4294901760
  %3609 = vmatmul.f32.gmra.mxu0 %v3608
  %v3610 = vpop.f32.mrf.mxu0
  %v3611 = vadd.f32 %v3543, %v3610
  %v3612 = vand.u32 %v3509, 4294901760
  %v3613 = vsub.f32 %v3509, %v3612
  %v3614 = vand.u32 %v3613, 4294901760
  %v3615 = vsub.f32 %v3613, %v3614
  %v3616 = vand.u32 %v3615, 4294901760
  %3617 = vmatmul.f32.gmra.mxu0 %v3616
  %v3618 = vpop.f32.mrf.mxu0
  %v3619 = vadd.f32 %v3543, %v3618
  %v3620 = vand.u32 %v3511, 4294901760
  %v3621 = vsub.f32 %v3511, %v3620
  %v3622 = vand.u32 %v3621, 4294901760
  %v3623 = vsub.f32 %v3621, %v3622
  %v3624 = vand.u32 %v3623, 4294901760
  %3625 = vmatmul.f32.gmra.mxu0 %v3624
  %v3626 = vpop.f32.mrf.mxu0
  %v3627 = vadd.f32 %v3543, %v3626
  %v3628 = vand.u32 %v3513, 4294901760
  %v3629 = vsub.f32 %v3513, %v3628
  %v3630 = vand.u32 %v3629, 4294901760
  %v3631 = vsub.f32 %v3629, %v3630
  %v3632 = vand.u32 %v3631, 4294901760
  %3633 = vmatmul.f32.gmra.mxu0 %v3632
  %v3634 = vpop.f32.mrf.mxu0
  %v3635 = vadd.f32 %v3543, %v3634
  %v3636 = vand.u32 %v3515, 4294901760
  %v3637 = vsub.f32 %v3515, %v3636
  %v3638 = vand.u32 %v3637, 4294901760
  %v3639 = vsub.f32 %v3637, %v3638
  %v3640 = vand.u32 %v3639, 4294901760
  %3641 = vmatmul.f32.gmra.mxu0 %v3640
  %v3642 = vpop.f32.mrf.mxu0
  %v3643 = vadd.f32 %v3543, %v3642
  %v3644 = vand.u32 %v3517, 4294901760
  %v3645 = vsub.f32 %v3517, %v3644
  %v3646 = vand.u32 %v3645, 4294901760
  %v3647 = vsub.f32 %v3645, %v3646
  %v3648 = vand.u32 %v3647, 4294901760
  %3649 = vmatmul.f32.gmra.mxu0 %v3648
  %v3650 = vpop.f32.mrf.mxu0
  %v3651 = vadd.f32 %v3543, %v3650
  %v3652 = vand.u32 %v3519, 4294901760
  %v3653 = vsub.f32 %v3519, %v3652
  %v3654 = vand.u32 %v3653, 4294901760
  %v3655 = vsub.f32 %v3653, %v3654
  %v3656 = vand.u32 %v3655, 4294901760
  %3657 = vmatmul.f32.gmra.mxu0 %v3656
  %v3658 = vpop.f32.mrf.mxu0
  %v3659 = vadd.f32 %v3543, %v3658
  %v3660 = vand.u32 %v3521, 4294901760
  %v3661 = vsub.f32 %v3521, %v3660
  %v3662 = vand.u32 %v3661, 4294901760
  %v3663 = vsub.f32 %v3661, %v3662
  %v3664 = vand.u32 %v3663, 4294901760
  %3665 = vmatmul.f32.gmra.mxu0 %v3664
  %v3666 = vpop.f32.mrf.mxu0
  %v3667 = vadd.f32 %v3543, %v3666
  %v3668 = vand.u32 %v3523, 4294901760
  %v3669 = vsub.f32 %v3523, %v3668
  %v3670 = vand.u32 %v3669, 4294901760
  %v3671 = vsub.f32 %v3669, %v3670
  %v3672 = vand.u32 %v3671, 4294901760
  %3673 = vmatmul.f32.gmra.mxu0 %v3672
  %v3674 = vpop.f32.mrf.mxu0
  %v3675 = vadd.f32 %v3543, %v3674
  %3676 = vdwg.mxu0
  %v3677 = vand.u32 %v3540, 4294901760
  %v3678 = vsub.f32 %v3540, %v3677
  %v3679 = vand.u32 %v3678, 4294901760
  %v3680 = vsub.f32 %v3678, %v3679
  %v3681 = vand.u32 %v3680, 4294901760
  %3682 = vmatpush.msra.mxu0 %v3681
  %v3683 = vand.u32 %v3539, 4294901760
  %v3684 = vsub.f32 %v3539, %v3683
  %v3685 = vand.u32 %v3684, 4294901760
  %v3686 = vsub.f32 %v3684, %v3685
  %v3687 = vand.u32 %v3686, 4294901760
  %3688 = vmatpush.msra.mxu0 %v3687
  %v3689 = vand.u32 %v3538, 4294901760
  %v3690 = vsub.f32 %v3538, %v3689
  %v3691 = vand.u32 %v3690, 4294901760
  %v3692 = vsub.f32 %v3690, %v3691
  %v3693 = vand.u32 %v3692, 4294901760
  %3694 = vmatpush.msra.mxu0 %v3693
  %v3695 = vand.u32 %v3537, 4294901760
  %v3696 = vsub.f32 %v3537, %v3695
  %v3697 = vand.u32 %v3696, 4294901760
  %v3698 = vsub.f32 %v3696, %v3697
  %v3699 = vand.u32 %v3698, 4294901760
  %3700 = vmatpush.msra.mxu0 %v3699
  %v3701 = vand.u32 %v3536, 4294901760
  %v3702 = vsub.f32 %v3536, %v3701
  %v3703 = vand.u32 %v3702, 4294901760
  %v3704 = vsub.f32 %v3702, %v3703
  %v3705 = vand.u32 %v3704, 4294901760
  %3706 = vmatpush.msra.mxu0 %v3705
  %v3707 = vand.u32 %v3535, 4294901760
  %v3708 = vsub.f32 %v3535, %v3707
  %v3709 = vand.u32 %v3708, 4294901760
  %v3710 = vsub.f32 %v3708, %v3709
  %v3711 = vand.u32 %v3710, 4294901760
  %3712 = vmatpush.msra.mxu0 %v3711
  %v3713 = vand.u32 %v3534, 4294901760
  %v3714 = vsub.f32 %v3534, %v3713
  %v3715 = vand.u32 %v3714, 4294901760
  %v3716 = vsub.f32 %v3714, %v3715
  %v3717 = vand.u32 %v3716, 4294901760
  %3718 = vmatpush.msra.mxu0 %v3717
  %v3719 = vand.u32 %v3533, 4294901760
  %v3720 = vsub.f32 %v3533, %v3719
  %v3721 = vand.u32 %v3720, 4294901760
  %v3722 = vsub.f32 %v3720, %v3721
  %v3723 = vand.u32 %v3722, 4294901760
  %3724 = vmatpush.msra.mxu0 %v3723
  %v3725 = vand.u32 %v3532, 4294901760
  %v3726 = vsub.f32 %v3532, %v3725
  %v3727 = vand.u32 %v3726, 4294901760
  %v3728 = vsub.f32 %v3726, %v3727
  %v3729 = vand.u32 %v3728, 4294901760
  %3730 = vmatpush.msra.mxu0 %v3729
  %v3731 = vand.u32 %v3531, 4294901760
  %v3732 = vsub.f32 %v3531, %v3731
  %v3733 = vand.u32 %v3732, 4294901760
  %v3734 = vsub.f32 %v3732, %v3733
  %v3735 = vand.u32 %v3734, 4294901760
  %3736 = vmatpush.msra.mxu0 %v3735
  %v3737 = vand.u32 %v3530, 4294901760
  %v3738 = vsub.f32 %v3530, %v3737
  %v3739 = vand.u32 %v3738, 4294901760
  %v3740 = vsub.f32 %v3738, %v3739
  %v3741 = vand.u32 %v3740, 4294901760
  %3742 = vmatpush.msra.mxu0 %v3741
  %v3743 = vand.u32 %v3529, 4294901760
  %v3744 = vsub.f32 %v3529, %v3743
  %v3745 = vand.u32 %v3744, 4294901760
  %v3746 = vsub.f32 %v3744, %v3745
  %v3747 = vand.u32 %v3746, 4294901760
  %3748 = vmatpush.msra.mxu0 %v3747
  %v3749 = vand.u32 %v3528, 4294901760
  %v3750 = vsub.f32 %v3528, %v3749
  %v3751 = vand.u32 %v3750, 4294901760
  %v3752 = vsub.f32 %v3750, %v3751
  %v3753 = vand.u32 %v3752, 4294901760
  %3754 = vmatpush.msra.mxu0 %v3753
  %v3755 = vand.u32 %v3527, 4294901760
  %v3756 = vsub.f32 %v3527, %v3755
  %v3757 = vand.u32 %v3756, 4294901760
  %v3758 = vsub.f32 %v3756, %v3757
  %v3759 = vand.u32 %v3758, 4294901760
  %3760 = vmatpush.msra.mxu0 %v3759
  %v3761 = vand.u32 %v3526, 4294901760
  %v3762 = vsub.f32 %v3526, %v3761
  %v3763 = vand.u32 %v3762, 4294901760
  %v3764 = vsub.f32 %v3762, %v3763
  %v3765 = vand.u32 %v3764, 4294901760
  %3766 = vmatpush.msra.mxu0 %v3765
  %v3767 = vand.u32 %v3525, 4294901760
  %v3768 = vsub.f32 %v3525, %v3767
  %v3769 = vand.u32 %v3768, 4294901760
  %v3770 = vsub.f32 %v3768, %v3769
  %v3771 = vand.u32 %v3770, 4294901760
  %3772 = vmatpush.msra.mxu0 %v3771
  %v3773 = vand.u32 %v3507, 4294901760
  %3774 = vmatmul.f32.gmra.mxu0 %v3773
  %v3775 = vpop.f32.mrf.mxu0
  %v3776 = vadd.f32 %v3611, %v3775
  %v3777 = vand.u32 %v3509, 4294901760
  %3778 = vmatmul.f32.gmra.mxu0 %v3777
  %v3779 = vpop.f32.mrf.mxu0
  %v3780 = vadd.f32 %v3619, %v3779
  %v3781 = vand.u32 %v3511, 4294901760
  %3782 = vmatmul.f32.gmra.mxu0 %v3781
  %v3783 = vpop.f32.mrf.mxu0
  %v3784 = vadd.f32 %v3627, %v3783
  %v3785 = vand.u32 %v3513, 4294901760
  %3786 = vmatmul.f32.gmra.mxu0 %v3785
  %v3787 = vpop.f32.mrf.mxu0
  %v3788 = vadd.f32 %v3635, %v3787
  %v3789 = vand.u32 %v3515, 4294901760
  %3790 = vmatmul.f32.gmra.mxu0 %v3789
  %v3791 = vpop.f32.mrf.mxu0
  %v3792 = vadd.f32 %v3643, %v3791
  %v3793 = vand.u32 %v3517, 4294901760
  %3794 = vmatmul.f32.gmra.mxu0 %v3793
  %v3795 = vpop.f32.mrf.mxu0
  %v3796 = vadd.f32 %v3651, %v3795
  %v3797 = vand.u32 %v3519, 4294901760
  %3798 = vmatmul.f32.gmra.mxu0 %v3797
  %v3799 = vpop.f32.mrf.mxu0
  %v3800 = vadd.f32 %v3659, %v3799
  %v3801 = vand.u32 %v3521, 4294901760
  %3802 = vmatmul.f32.gmra.mxu0 %v3801
  %v3803 = vpop.f32.mrf.mxu0
  %v3804 = vadd.f32 %v3667, %v3803
  %v3805 = vand.u32 %v3523, 4294901760
  %3806 = vmatmul.f32.gmra.mxu0 %v3805
  %v3807 = vpop.f32.mrf.mxu0
  %v3808 = vadd.f32 %v3675, %v3807
  %3809 = vdwg.mxu0
  %v3810 = vand.u32 %v3540, 4294901760
  %v3811 = vsub.f32 %v3540, %v3810
  %3812 = vmatpush.msra.mxu0 %v3811
  %v3813 = vand.u32 %v3539, 4294901760
  %v3814 = vsub.f32 %v3539, %v3813
  %3815 = vmatpush.msra.mxu0 %v3814
  %v3816 = vand.u32 %v3538, 4294901760
  %v3817 = vsub.f32 %v3538, %v3816
  %3818 = vmatpush.msra.mxu0 %v3817
  %v3819 = vand.u32 %v3537, 4294901760
  %v3820 = vsub.f32 %v3537, %v3819
  %3821 = vmatpush.msra.mxu0 %v3820
  %v3822 = vand.u32 %v3536, 4294901760
  %v3823 = vsub.f32 %v3536, %v3822
  %3824 = vmatpush.msra.mxu0 %v3823
  %v3825 = vand.u32 %v3535, 4294901760
  %v3826 = vsub.f32 %v3535, %v3825
  %3827 = vmatpush.msra.mxu0 %v3826
  %v3828 = vand.u32 %v3534, 4294901760
  %v3829 = vsub.f32 %v3534, %v3828
  %3830 = vmatpush.msra.mxu0 %v3829
  %v3831 = vand.u32 %v3533, 4294901760
  %v3832 = vsub.f32 %v3533, %v3831
  %3833 = vmatpush.msra.mxu0 %v3832
  %v3834 = vand.u32 %v3532, 4294901760
  %v3835 = vsub.f32 %v3532, %v3834
  %3836 = vmatpush.msra.mxu0 %v3835
  %v3837 = vand.u32 %v3531, 4294901760
  %v3838 = vsub.f32 %v3531, %v3837
  %3839 = vmatpush.msra.mxu0 %v3838
  %v3840 = vand.u32 %v3530, 4294901760
  %v3841 = vsub.f32 %v3530, %v3840
  %3842 = vmatpush.msra.mxu0 %v3841
  %v3843 = vand.u32 %v3529, 4294901760
  %v3844 = vsub.f32 %v3529, %v3843
  %3845 = vmatpush.msra.mxu0 %v3844
  %v3846 = vand.u32 %v3528, 4294901760
  %v3847 = vsub.f32 %v3528, %v3846
  %3848 = vmatpush.msra.mxu0 %v3847
  %v3849 = vand.u32 %v3527, 4294901760
  %v3850 = vsub.f32 %v3527, %v3849
  %3851 = vmatpush.msra.mxu0 %v3850
  %v3852 = vand.u32 %v3526, 4294901760
  %v3853 = vsub.f32 %v3526, %v3852
  %3854 = vmatpush.msra.mxu0 %v3853
  %v3855 = vand.u32 %v3525, 4294901760
  %v3856 = vsub.f32 %v3525, %v3855
  %3857 = vmatpush.msra.mxu0 %v3856
  %v3858 = vand.u32 %v3507, 4294901760
  %v3859 = vsub.f32 %v3507, %v3858
  %3860 = vmatmul.f32.gmra.mxu0 %v3859
  %v3861 = vpop.f32.mrf.mxu0
  %v3862 = vadd.f32 %v3776, %v3861
  %v3863 = vand.u32 %v3509, 4294901760
  %v3864 = vsub.f32 %v3509, %v3863
  %3865 = vmatmul.f32.gmra.mxu0 %v3864
  %v3866 = vpop.f32.mrf.mxu0
  %v3867 = vadd.f32 %v3780, %v3866
  %v3868 = vand.u32 %v3511, 4294901760
  %v3869 = vsub.f32 %v3511, %v3868
  %3870 = vmatmul.f32.gmra.mxu0 %v3869
  %v3871 = vpop.f32.mrf.mxu0
  %v3872 = vadd.f32 %v3784, %v3871
  %v3873 = vand.u32 %v3513, 4294901760
  %v3874 = vsub.f32 %v3513, %v3873
  %3875 = vmatmul.f32.gmra.mxu0 %v3874
  %v3876 = vpop.f32.mrf.mxu0
  %v3877 = vadd.f32 %v3788, %v3876
  %v3878 = vand.u32 %v3515, 4294901760
  %v3879 = vsub.f32 %v3515, %v3878
  %3880 = vmatmul.f32.gmra.mxu0 %v3879
  %v3881 = vpop.f32.mrf.mxu0
  %v3882 = vadd.f32 %v3792, %v3881
  %v3883 = vand.u32 %v3517, 4294901760
  %v3884 = vsub.f32 %v3517, %v3883
  %3885 = vmatmul.f32.gmra.mxu0 %v3884
  %v3886 = vpop.f32.mrf.mxu0
  %v3887 = vadd.f32 %v3796, %v3886
  %v3888 = vand.u32 %v3519, 4294901760
  %v3889 = vsub.f32 %v3519, %v3888
  %3890 = vmatmul.f32.gmra.mxu0 %v3889
  %v3891 = vpop.f32.mrf.mxu0
  %v3892 = vadd.f32 %v3800, %v3891
  %v3893 = vand.u32 %v3521, 4294901760
  %v3894 = vsub.f32 %v3521, %v3893
  %3895 = vmatmul.f32.gmra.mxu0 %v3894
  %v3896 = vpop.f32.mrf.mxu0
  %v3897 = vadd.f32 %v3804, %v3896
  %v3898 = vand.u32 %v3523, 4294901760
  %v3899 = vsub.f32 %v3523, %v3898
  %3900 = vmatmul.f32.gmra.mxu0 %v3899
  %v3901 = vpop.f32.mrf.mxu0
  %v3902 = vadd.f32 %v3808, %v3901
  %3903 = vdwg.mxu0
  %v3904 = vand.u32 %v3540, 4294901760
  %3905 = vmatpush.msra.mxu0 %v3904
  %v3906 = vand.u32 %v3539, 4294901760
  %3907 = vmatpush.msra.mxu0 %v3906
  %v3908 = vand.u32 %v3538, 4294901760
  %3909 = vmatpush.msra.mxu0 %v3908
  %v3910 = vand.u32 %v3537, 4294901760
  %3911 = vmatpush.msra.mxu0 %v3910
  %v3912 = vand.u32 %v3536, 4294901760
  %3913 = vmatpush.msra.mxu0 %v3912
  %v3914 = vand.u32 %v3535, 4294901760
  %3915 = vmatpush.msra.mxu0 %v3914
  %v3916 = vand.u32 %v3534, 4294901760
  %3917 = vmatpush.msra.mxu0 %v3916
  %v3918 = vand.u32 %v3533, 4294901760
  %3919 = vmatpush.msra.mxu0 %v3918
  %v3920 = vand.u32 %v3532, 4294901760
  %3921 = vmatpush.msra.mxu0 %v3920
  %v3922 = vand.u32 %v3531, 4294901760
  %3923 = vmatpush.msra.mxu0 %v3922
  %v3924 = vand.u32 %v3530, 4294901760
  %3925 = vmatpush.msra.mxu0 %v3924
  %v3926 = vand.u32 %v3529, 4294901760
  %3927 = vmatpush.msra.mxu0 %v3926
  %v3928 = vand.u32 %v3528, 4294901760
  %3929 = vmatpush.msra.mxu0 %v3928
  %v3930 = vand.u32 %v3527, 4294901760
  %3931 = vmatpush.msra.mxu0 %v3930
  %v3932 = vand.u32 %v3526, 4294901760
  %3933 = vmatpush.msra.mxu0 %v3932
  %v3934 = vand.u32 %v3525, 4294901760
  %3935 = vmatpush.msra.mxu0 %v3934
  %v3936 = vand.u32 %v3507, 4294901760
  %v3937 = vsub.f32 %v3507, %v3936
  %v3938 = vand.u32 %v3937, 4294901760
  %3939 = vmatmul.f32.gmra.mxu0 %v3938
  %v3940 = vpop.f32.mrf.mxu0
  %v3941 = vadd.f32 %v3862, %v3940
  %v3942 = vand.u32 %v3509, 4294901760
  %v3943 = vsub.f32 %v3509, %v3942
  %v3944 = vand.u32 %v3943, 4294901760
  %3945 = vmatmul.f32.gmra.mxu0 %v3944
  %v3946 = vpop.f32.mrf.mxu0
  %v3947 = vadd.f32 %v3867, %v3946
  %v3948 = vand.u32 %v3511, 4294901760
  %v3949 = vsub.f32 %v3511, %v3948
  %v3950 = vand.u32 %v3949, 4294901760
  %3951 = vmatmul.f32.gmra.mxu0 %v3950
  %v3952 = vpop.f32.mrf.mxu0
  %v3953 = vadd.f32 %v3872, %v3952
  %v3954 = vand.u32 %v3513, 4294901760
  %v3955 = vsub.f32 %v3513, %v3954
  %v3956 = vand.u32 %v3955, 4294901760
  %3957 = vmatmul.f32.gmra.mxu0 %v3956
  %v3958 = vpop.f32.mrf.mxu0
  %v3959 = vadd.f32 %v3877, %v3958
  %v3960 = vand.u32 %v3515, 4294901760
  %v3961 = vsub.f32 %v3515, %v3960
  %v3962 = vand.u32 %v3961, 4294901760
  %3963 = vmatmul.f32.gmra.mxu0 %v3962
  %v3964 = vpop.f32.mrf.mxu0
  %v3965 = vadd.f32 %v3882, %v3964
  %v3966 = vand.u32 %v3517, 4294901760
  %v3967 = vsub.f32 %v3517, %v3966
  %v3968 = vand.u32 %v3967, 4294901760
  %3969 = vmatmul.f32.gmra.mxu0 %v3968
  %v3970 = vpop.f32.mrf.mxu0
  %v3971 = vadd.f32 %v3887, %v3970
  %v3972 = vand.u32 %v3519, 4294901760
  %v3973 = vsub.f32 %v3519, %v3972
  %v3974 = vand.u32 %v3973, 4294901760
  %3975 = vmatmul.f32.gmra.mxu0 %v3974
  %v3976 = vpop.f32.mrf.mxu0
  %v3977 = vadd.f32 %v3892, %v3976
  %v3978 = vand.u32 %v3521, 4294901760
  %v3979 = vsub.f32 %v3521, %v3978
  %v3980 = vand.u32 %v3979, 4294901760
  %3981 = vmatmul.f32.gmra.mxu0 %v3980
  %v3982 = vpop.f32.mrf.mxu0
  %v3983 = vadd.f32 %v3897, %v3982
  %v3984 = vand.u32 %v3523, 4294901760
  %v3985 = vsub.f32 %v3523, %v3984
  %v3986 = vand.u32 %v3985, 4294901760
  %3987 = vmatmul.f32.gmra.mxu0 %v3986
  %v3988 = vpop.f32.mrf.mxu0
  %v3989 = vadd.f32 %v3902, %v3988
  %3990 = vdwg.mxu0
  %v3991 = vand.u32 %v3540, 4294901760
  %v3992 = vsub.f32 %v3540, %v3991
  %v3993 = vand.u32 %v3992, 4294901760
  %3994 = vmatpush.msra.mxu0 %v3993
  %v3995 = vand.u32 %v3539, 4294901760
  %v3996 = vsub.f32 %v3539, %v3995
  %v3997 = vand.u32 %v3996, 4294901760
  %3998 = vmatpush.msra.mxu0 %v3997
  %v3999 = vand.u32 %v3538, 4294901760
  %v4000 = vsub.f32 %v3538, %v3999
  %v4001 = vand.u32 %v4000, 4294901760
  %4002 = vmatpush.msra.mxu0 %v4001
  %v4003 = vand.u32 %v3537, 4294901760
  %v4004 = vsub.f32 %v3537, %v4003
  %v4005 = vand.u32 %v4004, 4294901760
  %4006 = vmatpush.msra.mxu0 %v4005
  %v4007 = vand.u32 %v3536, 4294901760
  %v4008 = vsub.f32 %v3536, %v4007
  %v4009 = vand.u32 %v4008, 4294901760
  %4010 = vmatpush.msra.mxu0 %v4009
  %v4011 = vand.u32 %v3535, 4294901760
  %v4012 = vsub.f32 %v3535, %v4011
  %v4013 = vand.u32 %v4012, 4294901760
  %4014 = vmatpush.msra.mxu0 %v4013
  %v4015 = vand.u32 %v3534, 4294901760
  %v4016 = vsub.f32 %v3534, %v4015
  %v4017 = vand.u32 %v4016, 4294901760
  %4018 = vmatpush.msra.mxu0 %v4017
  %v4019 = vand.u32 %v3533, 4294901760
  %v4020 = vsub.f32 %v3533, %v4019
  %v4021 = vand.u32 %v4020, 4294901760
  %4022 = vmatpush.msra.mxu0 %v4021
  %v4023 = vand.u32 %v3532, 4294901760
  %v4024 = vsub.f32 %v3532, %v4023
  %v4025 = vand.u32 %v4024, 4294901760
  %4026 = vmatpush.msra.mxu0 %v4025
  %v4027 = vand.u32 %v3531, 4294901760
  %v4028 = vsub.f32 %v3531, %v4027
  %v4029 = vand.u32 %v4028, 4294901760
  %4030 = vmatpush.msra.mxu0 %v4029
  %v4031 = vand.u32 %v3530, 4294901760
  %v4032 = vsub.f32 %v3530, %v4031
  %v4033 = vand.u32 %v4032, 4294901760
  %4034 = vmatpush.msra.mxu0 %v4033
  %v4035 = vand.u32 %v3529, 4294901760
  %v4036 = vsub.f32 %v3529, %v4035
  %v4037 = vand.u32 %v4036, 4294901760
  %4038 = vmatpush.msra.mxu0 %v4037
  %v4039 = vand.u32 %v3528, 4294901760
  %v4040 = vsub.f32 %v3528, %v4039
  %v4041 = vand.u32 %v4040, 4294901760
  %4042 = vmatpush.msra.mxu0 %v4041
  %v4043 = vand.u32 %v3527, 4294901760
  %v4044 = vsub.f32 %v3527, %v4043
  %v4045 = vand.u32 %v4044, 4294901760
  %4046 = vmatpush.msra.mxu0 %v4045
  %v4047 = vand.u32 %v3526, 4294901760
  %v4048 = vsub.f32 %v3526, %v4047
  %v4049 = vand.u32 %v4048, 4294901760
  %4050 = vmatpush.msra.mxu0 %v4049
  %v4051 = vand.u32 %v3525, 4294901760
  %v4052 = vsub.f32 %v3525, %v4051
  %v4053 = vand.u32 %v4052, 4294901760
  %4054 = vmatpush.msra.mxu0 %v4053
  %v4055 = vand.u32 %v3507, 4294901760
  %4056 = vmatmul.f32.gmra.mxu0 %v4055
  %v4057 = vpop.f32.mrf.mxu0
  %v4058 = vadd.f32 %v3941, %v4057
  %v4059 = vand.u32 %v3509, 4294901760
  %4060 = vmatmul.f32.gmra.mxu0 %v4059
  %v4061 = vpop.f32.mrf.mxu0
  %v4062 = vadd.f32 %v3947, %v4061
  %v4063 = vand.u32 %v3511, 4294901760
  %4064 = vmatmul.f32.gmra.mxu0 %v4063
  %v4065 = vpop.f32.mrf.mxu0
  %v4066 = vadd.f32 %v3953, %v4065
  %v4067 = vand.u32 %v3513, 4294901760
  %4068 = vmatmul.f32.gmra.mxu0 %v4067
  %v4069 = vpop.f32.mrf.mxu0
  %v4070 = vadd.f32 %v3959, %v4069
  %v4071 = vand.u32 %v3515, 4294901760
  %4072 = vmatmul.f32.gmra.mxu0 %v4071
  %v4073 = vpop.f32.mrf.mxu0
  %v4074 = vadd.f32 %v3965, %v4073
  %v4075 = vand.u32 %v3517, 4294901760
  %4076 = vmatmul.f32.gmra.mxu0 %v4075
  %v4077 = vpop.f32.mrf.mxu0
  %v4078 = vadd.f32 %v3971, %v4077
  %v4079 = vand.u32 %v3519, 4294901760
  %4080 = vmatmul.f32.gmra.mxu0 %v4079
  %v4081 = vpop.f32.mrf.mxu0
  %v4082 = vadd.f32 %v3977, %v4081
  %v4083 = vand.u32 %v3521, 4294901760
  %4084 = vmatmul.f32.gmra.mxu0 %v4083
  %v4085 = vpop.f32.mrf.mxu0
  %v4086 = vadd.f32 %v3983, %v4085
  %v4087 = vand.u32 %v3523, 4294901760
  %4088 = vmatmul.f32.gmra.mxu0 %v4087
  %v4089 = vpop.f32.mrf.mxu0
  %v4090 = vadd.f32 %v3989, %v4089
  %4091 = vdwg.mxu0
  %v4092 = vand.u32 %v3540, 4294901760
  %4093 = vmatpush.msra.mxu0 %v4092
  %v4094 = vand.u32 %v3539, 4294901760
  %4095 = vmatpush.msra.mxu0 %v4094
  %v4096 = vand.u32 %v3538, 4294901760
  %4097 = vmatpush.msra.mxu0 %v4096
  %v4098 = vand.u32 %v3537, 4294901760
  %4099 = vmatpush.msra.mxu0 %v4098
  %v4100 = vand.u32 %v3536, 4294901760
  %4101 = vmatpush.msra.mxu0 %v4100
  %v4102 = vand.u32 %v3535, 4294901760
  %4103 = vmatpush.msra.mxu0 %v4102
  %v4104 = vand.u32 %v3534, 4294901760
  %4105 = vmatpush.msra.mxu0 %v4104
  %v4106 = vand.u32 %v3533, 4294901760
  %4107 = vmatpush.msra.mxu0 %v4106
  %v4108 = vand.u32 %v3532, 4294901760
  %4109 = vmatpush.msra.mxu0 %v4108
  %v4110 = vand.u32 %v3531, 4294901760
  %4111 = vmatpush.msra.mxu0 %v4110
  %v4112 = vand.u32 %v3530, 4294901760
  %4113 = vmatpush.msra.mxu0 %v4112
  %v4114 = vand.u32 %v3529, 4294901760
  %4115 = vmatpush.msra.mxu0 %v4114
  %v4116 = vand.u32 %v3528, 4294901760
  %4117 = vmatpush.msra.mxu0 %v4116
  %v4118 = vand.u32 %v3527, 4294901760
  %4119 = vmatpush.msra.mxu0 %v4118
  %v4120 = vand.u32 %v3526, 4294901760
  %4121 = vmatpush.msra.mxu0 %v4120
  %v4122 = vand.u32 %v3525, 4294901760
  %4123 = vmatpush.msra.mxu0 %v4122
  %v4124 = vand.u32 %v3507, 4294901760
  %4125 = vmatmul.f32.gmra.mxu0 %v4124
  %v4126 = vpop.f32.mrf.mxu0
  %v4127 = vadd.f32 %v4058, %v4126
  %v4128 = vand.u32 %v3509, 4294901760
  %4129 = vmatmul.f32.gmra.mxu0 %v4128
  %v4130 = vpop.f32.mrf.mxu0
  %v4131 = vadd.f32 %v4062, %v4130
  %v4132 = vand.u32 %v3511, 4294901760
  %4133 = vmatmul.f32.gmra.mxu0 %v4132
  %v4134 = vpop.f32.mrf.mxu0
  %v4135 = vadd.f32 %v4066, %v4134
  %v4136 = vand.u32 %v3513, 4294901760
  %4137 = vmatmul.f32.gmra.mxu0 %v4136
  %v4138 = vpop.f32.mrf.mxu0
  %v4139 = vadd.f32 %v4070, %v4138
  %v4140 = vand.u32 %v3515, 4294901760
  %4141 = vmatmul.f32.gmra.mxu0 %v4140
  %v4142 = vpop.f32.mrf.mxu0
  %v4143 = vadd.f32 %v4074, %v4142
  %v4144 = vand.u32 %v3517, 4294901760
  %4145 = vmatmul.f32.gmra.mxu0 %v4144
  %v4146 = vpop.f32.mrf.mxu0
  %v4147 = vadd.f32 %v4078, %v4146
  %v4148 = vand.u32 %v3519, 4294901760
  %4149 = vmatmul.f32.gmra.mxu0 %v4148
  %v4150 = vpop.f32.mrf.mxu0
  %v4151 = vadd.f32 %v4082, %v4150
  %v4152 = vand.u32 %v3521, 4294901760
  %4153 = vmatmul.f32.gmra.mxu0 %v4152
  %v4154 = vpop.f32.mrf.mxu0
  %v4155 = vadd.f32 %v4086, %v4154
  %v4156 = vand.u32 %v3523, 4294901760
  %4157 = vmatmul.f32.gmra.mxu0 %v4156
  %v4158 = vpop.f32.mrf.mxu0
  %v4159 = vadd.f32 %v4090, %v4158
  %4160 = vdwg.mxu0
  %4161 = vmatpush.msra.mxu0 0.0
  %4162 = vmatpush.msra.mxu0 0.0
  %4163 = vmatpush.msra.mxu0 0.0
  %4164 = vmatpush.msra.mxu0 0.0
  %4165 = vmatpush.msra.mxu0 0.0
  %4166 = vmatpush.msra.mxu0 0.0
  %4167 = vmatpush.msra.mxu0 0.0
  %4168 = vmatpush.msra.mxu0 0.0
  %4169 = vmatpush.msra.mxu0 0.0
  %4170 = vmatpush.msra.mxu0 0.0
  %4171 = vmatpush.msra.mxu0 0.0
  %4172 = vmatpush.msra.mxu0 0.0
  %4173 = vmatpush.msra.mxu0 0.0
  %4174 = vmatpush.msra.mxu0 0.0
  %v4175 = vand.u32 %v3542, 4294901760
  %4176 = vmatpush.msra.mxu0 %v4175
  %v4177 = vand.u32 %v3541, 4294901760
  %4178 = vmatpush.msra.mxu0 %v4177
  %v4179 = vand.u32 %v3546, 4294901760
  %v4180 = vsub.f32 %v3546, %v4179
  %v4181 = vand.u32 %v4180, 4294901760
  %v4182 = vsub.f32 %v4180, %v4181
  %v4183 = vand.u32 %v4182, 4294901760
  %4184 = vmatmul.f32.gmra.mxu0 %v4183
  %v4185 = vpop.f32.mrf.mxu0
  %v4186 = vadd.f32 %v4127, %v4185
  %v4187 = vand.u32 %v3549, 4294901760
  %v4188 = vsub.f32 %v3549, %v4187
  %v4189 = vand.u32 %v4188, 4294901760
  %v4190 = vsub.f32 %v4188, %v4189
  %v4191 = vand.u32 %v4190, 4294901760
  %4192 = vmatmul.f32.gmra.mxu0 %v4191
  %v4193 = vpop.f32.mrf.mxu0
  %v4194 = vadd.f32 %v4131, %v4193
  %v4195 = vand.u32 %v3552, 4294901760
  %v4196 = vsub.f32 %v3552, %v4195
  %v4197 = vand.u32 %v4196, 4294901760
  %v4198 = vsub.f32 %v4196, %v4197
  %v4199 = vand.u32 %v4198, 4294901760
  %4200 = vmatmul.f32.gmra.mxu0 %v4199
  %v4201 = vpop.f32.mrf.mxu0
  %v4202 = vadd.f32 %v4135, %v4201
  %v4203 = vand.u32 %v3555, 4294901760
  %v4204 = vsub.f32 %v3555, %v4203
  %v4205 = vand.u32 %v4204, 4294901760
  %v4206 = vsub.f32 %v4204, %v4205
  %v4207 = vand.u32 %v4206, 4294901760
  %4208 = vmatmul.f32.gmra.mxu0 %v4207
  %v4209 = vpop.f32.mrf.mxu0
  %v4210 = vadd.f32 %v4139, %v4209
  %v4211 = vand.u32 %v3558, 4294901760
  %v4212 = vsub.f32 %v3558, %v4211
  %v4213 = vand.u32 %v4212, 4294901760
  %v4214 = vsub.f32 %v4212, %v4213
  %v4215 = vand.u32 %v4214, 4294901760
  %4216 = vmatmul.f32.gmra.mxu0 %v4215
  %v4217 = vpop.f32.mrf.mxu0
  %v4218 = vadd.f32 %v4143, %v4217
  %v4219 = vand.u32 %v3561, 4294901760
  %v4220 = vsub.f32 %v3561, %v4219
  %v4221 = vand.u32 %v4220, 4294901760
  %v4222 = vsub.f32 %v4220, %v4221
  %v4223 = vand.u32 %v4222, 4294901760
  %4224 = vmatmul.f32.gmra.mxu0 %v4223
  %v4225 = vpop.f32.mrf.mxu0
  %v4226 = vadd.f32 %v4147, %v4225
  %v4227 = vand.u32 %v3564, 4294901760
  %v4228 = vsub.f32 %v3564, %v4227
  %v4229 = vand.u32 %v4228, 4294901760
  %v4230 = vsub.f32 %v4228, %v4229
  %v4231 = vand.u32 %v4230, 4294901760
  %4232 = vmatmul.f32.gmra.mxu0 %v4231
  %v4233 = vpop.f32.mrf.mxu0
  %v4234 = vadd.f32 %v4151, %v4233
  %v4235 = vand.u32 %v3567, 4294901760
  %v4236 = vsub.f32 %v3567, %v4235
  %v4237 = vand.u32 %v4236, 4294901760
  %v4238 = vsub.f32 %v4236, %v4237
  %v4239 = vand.u32 %v4238, 4294901760
  %4240 = vmatmul.f32.gmra.mxu0 %v4239
  %v4241 = vpop.f32.mrf.mxu0
  %v4242 = vadd.f32 %v4155, %v4241
  %v4243 = vand.u32 %v3570, 4294901760
  %v4244 = vsub.f32 %v3570, %v4243
  %v4245 = vand.u32 %v4244, 4294901760
  %v4246 = vsub.f32 %v4244, %v4245
  %v4247 = vand.u32 %v4246, 4294901760
  %4248 = vmatmul.f32.gmra.mxu0 %v4247
  %v4249 = vpop.f32.mrf.mxu0
  %v4250 = vadd.f32 %v4159, %v4249
  %4251 = vdwg.mxu0
  %4252 = vmatpush.msra.mxu0 0.0
  %4253 = vmatpush.msra.mxu0 0.0
  %4254 = vmatpush.msra.mxu0 0.0
  %4255 = vmatpush.msra.mxu0 0.0
  %4256 = vmatpush.msra.mxu0 0.0
  %4257 = vmatpush.msra.mxu0 0.0
  %4258 = vmatpush.msra.mxu0 0.0
  %4259 = vmatpush.msra.mxu0 0.0
  %4260 = vmatpush.msra.mxu0 0.0
  %4261 = vmatpush.msra.mxu0 0.0
  %4262 = vmatpush.msra.mxu0 0.0
  %4263 = vmatpush.msra.mxu0 0.0
  %4264 = vmatpush.msra.mxu0 0.0
  %4265 = vmatpush.msra.mxu0 0.0
  %v4266 = vand.u32 %v3542, 4294901760
  %v4267 = vsub.f32 %v3542, %v4266
  %v4268 = vand.u32 %v4267, 4294901760
  %v4269 = vsub.f32 %v4267, %v4268
  %v4270 = vand.u32 %v4269, 4294901760
  %4271 = vmatpush.msra.mxu0 %v4270
  %v4272 = vand.u32 %v3541, 4294901760
  %v4273 = vsub.f32 %v3541, %v4272
  %v4274 = vand.u32 %v4273, 4294901760
  %v4275 = vsub.f32 %v4273, %v4274
  %v4276 = vand.u32 %v4275, 4294901760
  %4277 = vmatpush.msra.mxu0 %v4276
  %v4278 = vand.u32 %v3546, 4294901760
  %4279 = vmatmul.f32.gmra.mxu0 %v4278
  %v4280 = vpop.f32.mrf.mxu0
  %v4281 = vadd.f32 %v4186, %v4280
  %v4282 = vand.u32 %v3549, 4294901760
  %4283 = vmatmul.f32.gmra.mxu0 %v4282
  %v4284 = vpop.f32.mrf.mxu0
  %v4285 = vadd.f32 %v4194, %v4284
  %v4286 = vand.u32 %v3552, 4294901760
  %4287 = vmatmul.f32.gmra.mxu0 %v4286
  %v4288 = vpop.f32.mrf.mxu0
  %v4289 = vadd.f32 %v4202, %v4288
  %v4290 = vand.u32 %v3555, 4294901760
  %4291 = vmatmul.f32.gmra.mxu0 %v4290
  %v4292 = vpop.f32.mrf.mxu0
  %v4293 = vadd.f32 %v4210, %v4292
  %v4294 = vand.u32 %v3558, 4294901760
  %4295 = vmatmul.f32.gmra.mxu0 %v4294
  %v4296 = vpop.f32.mrf.mxu0
  %v4297 = vadd.f32 %v4218, %v4296
  %v4298 = vand.u32 %v3561, 4294901760
  %4299 = vmatmul.f32.gmra.mxu0 %v4298
  %v4300 = vpop.f32.mrf.mxu0
  %v4301 = vadd.f32 %v4226, %v4300
  %v4302 = vand.u32 %v3564, 4294901760
  %4303 = vmatmul.f32.gmra.mxu0 %v4302
  %v4304 = vpop.f32.mrf.mxu0
  %v4305 = vadd.f32 %v4234, %v4304
  %v4306 = vand.u32 %v3567, 4294901760
  %4307 = vmatmul.f32.gmra.mxu0 %v4306
  %v4308 = vpop.f32.mrf.mxu0
  %v4309 = vadd.f32 %v4242, %v4308
  %v4310 = vand.u32 %v3570, 4294901760
  %4311 = vmatmul.f32.gmra.mxu0 %v4310
  %v4312 = vpop.f32.mrf.mxu0
  %v4313 = vadd.f32 %v4250, %v4312
  %4314 = vdwg.mxu0
  %4315 = vmatpush.msra.mxu0 0.0
  %4316 = vmatpush.msra.mxu0 0.0
  %4317 = vmatpush.msra.mxu0 0.0
  %4318 = vmatpush.msra.mxu0 0.0
  %4319 = vmatpush.msra.mxu0 0.0
  %4320 = vmatpush.msra.mxu0 0.0
  %4321 = vmatpush.msra.mxu0 0.0
  %4322 = vmatpush.msra.mxu0 0.0
  %4323 = vmatpush.msra.mxu0 0.0
  %4324 = vmatpush.msra.mxu0 0.0
  %4325 = vmatpush.msra.mxu0 0.0
  %4326 = vmatpush.msra.mxu0 0.0
  %4327 = vmatpush.msra.mxu0 0.0
  %4328 = vmatpush.msra.mxu0 0.0
  %v4329 = vand.u32 %v3542, 4294901760
  %v4330 = vsub.f32 %v3542, %v4329
  %4331 = vmatpush.msra.mxu0 %v4330
  %v4332 = vand.u32 %v3541, 4294901760
  %v4333 = vsub.f32 %v3541, %v4332
  %4334 = vmatpush.msra.mxu0 %v4333
  %v4335 = vand.u32 %v3546, 4294901760
  %v4336 = vsub.f32 %v3546, %v4335
  %4337 = vmatmul.f32.gmra.mxu0 %v4336
  %v4338 = vpop.f32.mrf.mxu0
  %v4339 = vadd.f32 %v4281, %v4338
  %v4340 = vand.u32 %v3549, 4294901760
  %v4341 = vsub.f32 %v3549, %v4340
  %4342 = vmatmul.f32.gmra.mxu0 %v4341
  %v4343 = vpop.f32.mrf.mxu0
  %v4344 = vadd.f32 %v4285, %v4343
  %v4345 = vand.u32 %v3552, 4294901760
  %v4346 = vsub.f32 %v3552, %v4345
  %4347 = vmatmul.f32.gmra.mxu0 %v4346
  %v4348 = vpop.f32.mrf.mxu0
  %v4349 = vadd.f32 %v4289, %v4348
  %v4350 = vand.u32 %v3555, 4294901760
  %v4351 = vsub.f32 %v3555, %v4350
  %4352 = vmatmul.f32.gmra.mxu0 %v4351
  %v4353 = vpop.f32.mrf.mxu0
  %v4354 = vadd.f32 %v4293, %v4353
  %v4355 = vand.u32 %v3558, 4294901760
  %v4356 = vsub.f32 %v3558, %v4355
  %4357 = vmatmul.f32.gmra.mxu0 %v4356
  %v4358 = vpop.f32.mrf.mxu0
  %v4359 = vadd.f32 %v4297, %v4358
  %v4360 = vand.u32 %v3561, 4294901760
  %v4361 = vsub.f32 %v3561, %v4360
  %4362 = vmatmul.f32.gmra.mxu0 %v4361
  %v4363 = vpop.f32.mrf.mxu0
  %v4364 = vadd.f32 %v4301, %v4363
  %v4365 = vand.u32 %v3564, 4294901760
  %v4366 = vsub.f32 %v3564, %v4365
  %4367 = vmatmul.f32.gmra.mxu0 %v4366
  %v4368 = vpop.f32.mrf.mxu0
  %v4369 = vadd.f32 %v4305, %v4368
  %v4370 = vand.u32 %v3567, 4294901760
  %v4371 = vsub.f32 %v3567, %v4370
  %4372 = vmatmul.f32.gmra.mxu0 %v4371
  %v4373 = vpop.f32.mrf.mxu0
  %v4374 = vadd.f32 %v4309, %v4373
  %v4375 = vand.u32 %v3570, 4294901760
  %v4376 = vsub.f32 %v3570, %v4375
  %4377 = vmatmul.f32.gmra.mxu0 %v4376
  %v4378 = vpop.f32.mrf.mxu0
  %v4379 = vadd.f32 %v4313, %v4378
  %4380 = vdwg.mxu0
  %4381 = vmatpush.msra.mxu0 0.0
  %4382 = vmatpush.msra.mxu0 0.0
  %4383 = vmatpush.msra.mxu0 0.0
  %4384 = vmatpush.msra.mxu0 0.0
  %4385 = vmatpush.msra.mxu0 0.0
  %4386 = vmatpush.msra.mxu0 0.0
  %4387 = vmatpush.msra.mxu0 0.0
  %4388 = vmatpush.msra.mxu0 0.0
  %4389 = vmatpush.msra.mxu0 0.0
  %4390 = vmatpush.msra.mxu0 0.0
  %4391 = vmatpush.msra.mxu0 0.0
  %4392 = vmatpush.msra.mxu0 0.0
  %4393 = vmatpush.msra.mxu0 0.0
  %4394 = vmatpush.msra.mxu0 0.0
  %v4395 = vand.u32 %v3542, 4294901760
  %4396 = vmatpush.msra.mxu0 %v4395
  %v4397 = vand.u32 %v3541, 4294901760
  %4398 = vmatpush.msra.mxu0 %v4397
  %v4399 = vand.u32 %v3546, 4294901760
  %v4400 = vsub.f32 %v3546, %v4399
  %v4401 = vand.u32 %v4400, 4294901760
  %4402 = vmatmul.f32.gmra.mxu0 %v4401
  %v4403 = vpop.f32.mrf.mxu0
  %v4404 = vadd.f32 %v4339, %v4403
  %v4405 = vand.u32 %v3549, 4294901760
  %v4406 = vsub.f32 %v3549, %v4405
  %v4407 = vand.u32 %v4406, 4294901760
  %4408 = vmatmul.f32.gmra.mxu0 %v4407
  %v4409 = vpop.f32.mrf.mxu0
  %v4410 = vadd.f32 %v4344, %v4409
  %v4411 = vand.u32 %v3552, 4294901760
  %v4412 = vsub.f32 %v3552, %v4411
  %v4413 = vand.u32 %v4412, 4294901760
  %4414 = vmatmul.f32.gmra.mxu0 %v4413
  %v4415 = vpop.f32.mrf.mxu0
  %v4416 = vadd.f32 %v4349, %v4415
  %v4417 = vand.u32 %v3555, 4294901760
  %v4418 = vsub.f32 %v3555, %v4417
  %v4419 = vand.u32 %v4418, 4294901760
  %4420 = vmatmul.f32.gmra.mxu0 %v4419
  %v4421 = vpop.f32.mrf.mxu0
  %v4422 = vadd.f32 %v4354, %v4421
  %v4423 = vand.u32 %v3558, 4294901760
  %v4424 = vsub.f32 %v3558, %v4423
  %v4425 = vand.u32 %v4424, 4294901760
  %4426 = vmatmul.f32.gmra.mxu0 %v4425
  %v4427 = vpop.f32.mrf.mxu0
  %v4428 = vadd.f32 %v4359, %v4427
  %v4429 = vand.u32 %v3561, 4294901760
  %v4430 = vsub.f32 %v3561, %v4429
  %v4431 = vand.u32 %v4430, 4294901760
  %4432 = vmatmul.f32.gmra.mxu0 %v4431
  %v4433 = vpop.f32.mrf.mxu0
  %v4434 = vadd.f32 %v4364, %v4433
  %v4435 = vand.u32 %v3564, 4294901760
  %v4436 = vsub.f32 %v3564, %v4435
  %v4437 = vand.u32 %v4436, 4294901760
  %4438 = vmatmul.f32.gmra.mxu0 %v4437
  %v4439 = vpop.f32.mrf.mxu0
  %v4440 = vadd.f32 %v4369, %v4439
  %v4441 = vand.u32 %v3567, 4294901760
  %v4442 = vsub.f32 %v3567, %v4441
  %v4443 = vand.u32 %v4442, 4294901760
  %4444 = vmatmul.f32.gmra.mxu0 %v4443
  %v4445 = vpop.f32.mrf.mxu0
  %v4446 = vadd.f32 %v4374, %v4445
  %v4447 = vand.u32 %v3570, 4294901760
  %v4448 = vsub.f32 %v3570, %v4447
  %v4449 = vand.u32 %v4448, 4294901760
  %4450 = vmatmul.f32.gmra.mxu0 %v4449
  %v4451 = vpop.f32.mrf.mxu0
  %v4452 = vadd.f32 %v4379, %v4451
  %4453 = vdwg.mxu0
  %4454 = vmatpush.msra.mxu0 0.0
  %4455 = vmatpush.msra.mxu0 0.0
  %4456 = vmatpush.msra.mxu0 0.0
  %4457 = vmatpush.msra.mxu0 0.0
  %4458 = vmatpush.msra.mxu0 0.0
  %4459 = vmatpush.msra.mxu0 0.0
  %4460 = vmatpush.msra.mxu0 0.0
  %4461 = vmatpush.msra.mxu0 0.0
  %4462 = vmatpush.msra.mxu0 0.0
  %4463 = vmatpush.msra.mxu0 0.0
  %4464 = vmatpush.msra.mxu0 0.0
  %4465 = vmatpush.msra.mxu0 0.0
  %4466 = vmatpush.msra.mxu0 0.0
  %4467 = vmatpush.msra.mxu0 0.0
  %v4468 = vand.u32 %v3542, 4294901760
  %v4469 = vsub.f32 %v3542, %v4468
  %v4470 = vand.u32 %v4469, 4294901760
  %4471 = vmatpush.msra.mxu0 %v4470
  %v4472 = vand.u32 %v3541, 4294901760
  %v4473 = vsub.f32 %v3541, %v4472
  %v4474 = vand.u32 %v4473, 4294901760
  %4475 = vmatpush.msra.mxu0 %v4474
  %v4476 = vand.u32 %v3546, 4294901760
  %4477 = vmatmul.f32.gmra.mxu0 %v4476
  %v4478 = vpop.f32.mrf.mxu0
  %v4479 = vadd.f32 %v4404, %v4478
  %v4480 = vand.u32 %v3549, 4294901760
  %4481 = vmatmul.f32.gmra.mxu0 %v4480
  %v4482 = vpop.f32.mrf.mxu0
  %v4483 = vadd.f32 %v4410, %v4482
  %v4484 = vand.u32 %v3552, 4294901760
  %4485 = vmatmul.f32.gmra.mxu0 %v4484
  %v4486 = vpop.f32.mrf.mxu0
  %v4487 = vadd.f32 %v4416, %v4486
  %v4488 = vand.u32 %v3555, 4294901760
  %4489 = vmatmul.f32.gmra.mxu0 %v4488
  %v4490 = vpop.f32.mrf.mxu0
  %v4491 = vadd.f32 %v4422, %v4490
  %v4492 = vand.u32 %v3558, 4294901760
  %4493 = vmatmul.f32.gmra.mxu0 %v4492
  %v4494 = vpop.f32.mrf.mxu0
  %v4495 = vadd.f32 %v4428, %v4494
  %v4496 = vand.u32 %v3561, 4294901760
  %4497 = vmatmul.f32.gmra.mxu0 %v4496
  %v4498 = vpop.f32.mrf.mxu0
  %v4499 = vadd.f32 %v4434, %v4498
  %v4500 = vand.u32 %v3564, 4294901760
  %4501 = vmatmul.f32.gmra.mxu0 %v4500
  %v4502 = vpop.f32.mrf.mxu0
  %v4503 = vadd.f32 %v4440, %v4502
  %v4504 = vand.u32 %v3567, 4294901760
  %4505 = vmatmul.f32.gmra.mxu0 %v4504
  %v4506 = vpop.f32.mrf.mxu0
  %v4507 = vadd.f32 %v4446, %v4506
  %v4508 = vand.u32 %v3570, 4294901760
  %4509 = vmatmul.f32.gmra.mxu0 %v4508
  %v4510 = vpop.f32.mrf.mxu0
  %v4511 = vadd.f32 %v4452, %v4510
  %4512 = vdwg.mxu0
  %4513 = vmatpush.msra.mxu0 0.0
  %4514 = vmatpush.msra.mxu0 0.0
  %4515 = vmatpush.msra.mxu0 0.0
  %4516 = vmatpush.msra.mxu0 0.0
  %4517 = vmatpush.msra.mxu0 0.0
  %4518 = vmatpush.msra.mxu0 0.0
  %4519 = vmatpush.msra.mxu0 0.0
  %4520 = vmatpush.msra.mxu0 0.0
  %4521 = vmatpush.msra.mxu0 0.0
  %4522 = vmatpush.msra.mxu0 0.0
  %4523 = vmatpush.msra.mxu0 0.0
  %4524 = vmatpush.msra.mxu0 0.0
  %4525 = vmatpush.msra.mxu0 0.0
  %4526 = vmatpush.msra.mxu0 0.0
  %v4527 = vand.u32 %v3542, 4294901760
  %4528 = vmatpush.msra.mxu0 %v4527
  %v4529 = vand.u32 %v3541, 4294901760
  %4530 = vmatpush.msra.mxu0 %v4529
  %v4531 = vand.u32 %v3546, 4294901760
  %4532 = vmatmul.f32.gmra.mxu0 %v4531
  %v4533 = vpop.f32.mrf.mxu0
  %v4534 = vadd.f32 %v4479, %v4533
  %v4535 = vand.u32 %v3549, 4294901760
  %4536 = vmatmul.f32.gmra.mxu0 %v4535
  %v4537 = vpop.f32.mrf.mxu0
  %v4538 = vadd.f32 %v4483, %v4537
  %v4539 = vand.u32 %v3552, 4294901760
  %4540 = vmatmul.f32.gmra.mxu0 %v4539
  %v4541 = vpop.f32.mrf.mxu0
  %v4542 = vadd.f32 %v4487, %v4541
  %v4543 = vand.u32 %v3555, 4294901760
  %4544 = vmatmul.f32.gmra.mxu0 %v4543
  %v4545 = vpop.f32.mrf.mxu0
  %v4546 = vadd.f32 %v4491, %v4545
  %v4547 = vand.u32 %v3558, 4294901760
  %4548 = vmatmul.f32.gmra.mxu0 %v4547
  %v4549 = vpop.f32.mrf.mxu0
  %v4550 = vadd.f32 %v4495, %v4549
  %v4551 = vand.u32 %v3561, 4294901760
  %4552 = vmatmul.f32.gmra.mxu0 %v4551
  %v4553 = vpop.f32.mrf.mxu0
  %v4554 = vadd.f32 %v4499, %v4553
  %v4555 = vand.u32 %v3564, 4294901760
  %4556 = vmatmul.f32.gmra.mxu0 %v4555
  %v4557 = vpop.f32.mrf.mxu0
  %v4558 = vadd.f32 %v4503, %v4557
  %v4559 = vand.u32 %v3567, 4294901760
  %4560 = vmatmul.f32.gmra.mxu0 %v4559
  %v4561 = vpop.f32.mrf.mxu0
  %v4562 = vadd.f32 %v4507, %v4561
  %v4563 = vand.u32 %v3570, 4294901760
  %4564 = vmatmul.f32.gmra.mxu0 %v4563
  %v4565 = vpop.f32.mrf.mxu0
  %v4566 = vadd.f32 %v4511, %v4565
  %4567 = vdwg.mxu0
  %v4568 = vmax.f32 %v4534, 0.0
  %v4569 = vmax.f32 %v4538, 0.0
  %v4570 = vmax.f32 %v4542, 0.0
  %v4571 = vmax.f32 %v4546, 0.0
  %v4572 = vmax.f32 %v4550, 0.0
  %v4573 = vmax.f32 %v4554, 0.0
  %v4574 = vmax.f32 %v4558, 0.0
  %v4575 = vmax.f32 %v4562, 0.0
  %v4576 = vmax.f32 %v4566, 0.0
  %4578 = vrot.lane.b32.xlu0 %v4569, 32
  %v4579 = vpop.permute.xlu0 %4578
  %4582 = vrot.lane.b32.xlu0 %v4570, 64
  %v4583 = vpop.permute.xlu0 %4582
  %4586 = vrot.lane.b32.xlu0 %v4571, 96
  %v4587 = vpop.permute.xlu0 %4586
  %4590 = vrot.lane.b32.xlu0 %v4573, 32
  %v4591 = vpop.permute.xlu0 %4590
  %4594 = vrot.lane.b32.xlu0 %v4574, 64
  %v4595 = vpop.permute.xlu0 %4594
  %4598 = vrot.lane.b32.xlu0 %v4575, 96
  %v4599 = vpop.permute.xlu0 %4598
  %vm4601 = vcmask 261120
  %v4602 = vsel %vm4601, %v4568, %v4579
  %vm4603 = vcmask 523264
  %v4604 = vsel %vm4603, %v4602, %v4583
  %vm4605 = vcmask 785408
  %v4606 = vsel %vm4605, %v4604, %v4587
  %v4607 = vsel %vm4601, %v4572, %v4591
  %v4608 = vsel %vm4603, %v4607, %v4595
  %v4609 = vsel %vm4605, %v4608, %v4599
  %v4610 = vld [vmem:[%s1 + $0x3d0] sm:$0xff]
  %v4611 = vld [vmem:[%s1 + $0x3e0] sm:$0xff]
  %v4612 = vld [vmem:[%s1 + $0x3f0] sm:$0xff]
  %v4613 = vld [vmem:[%s1 + $0x400] sm:$0xff]
  %v4614 = vld [vmem:[%s1 + $0x410] sm:$0xff]
  %v4615 = vld [vmem:[%s1 + $0x420] sm:$0xff]
  %v4616 = vld [vmem:[%s1 + $0x430] sm:$0xff]
  %v4617 = vld [vmem:[%s1 + $0x440] sm:$0xff]
  %v4618 = vld [vmem:[%s1 + $0x450] sm:$0xff]
  %v4619 = vld [vmem:[%s1 + $0x460] sm:$0xff]
  %v4620 = vld [vmem:[%s1 + $0x470] sm:$0xff]
  %v4621 = vld [vmem:[%s1 + $0x480] sm:$0xff]
  %v4622 = vld [vmem:[%s1 + $0x490] sm:$0xff]
  %v4623 = vld [vmem:[%s1 + $0x4a0] sm:$0xff]
  %v4624 = vld [vmem:[%s1 + $0x4b0] sm:$0xff]
  %v4625 = vld [vmem:[%s1 + $0x4c0] sm:$0xff]
  %v4626 = vld [vmem:[%s1 + $0x4d0] sm:$0xff]
  %v4627 = vld [vmem:[%s1 + $0x4e0] sm:$0xff]
  %v4628 = vld [vmem:[%s1 + $0x4f0] sm:$0xff]
  %v4629 = vld [vmem:[%s1 + $0x500] sm:$0xff]
  %v4630 = vld [vmem:[%s1 + $0x510] sm:$0xff]
  %v4631 = vld [vmem:[%s1 + $0x520] sm:$0xff]
  %v4632 = vld [vmem:[%s1 + $0x530] sm:$0xff]
  %v4633 = vld [vmem:[%s1 + $0x540] sm:$0xff]
  %v4634 = vld [vmem:[%s1 + $0x550] sm:$0xff]
  %v4635 = vld [vmem:[%s1 + $0x560] sm:$0xff]
  %v4636 = vld [vmem:[%s1 + $0x570] sm:$0xff]
  %v4637 = vld [vmem:[%s1 + $0x580] sm:$0xff]
  %v4638 = vld [vmem:[%s1 + $0x590] sm:$0xff]
  %v4639 = vld [vmem:[%s1 + $0x5a0] sm:$0xff]
  %v4640 = vld [vmem:[%s1 + $0x5b0] sm:$0xff]
  %v4641 = vld [vmem:[%s1 + $0x5c0] sm:$0xff]
  %v4642 = vld [vmem:[%s1 + $0x5d0] sm:$0xff]
  %v4643 = vld [vmem:[%s1 + $0x5e0] sm:$0xff]
  %v4644 = vld [vmem:[%s1 + $0x5f0] sm:$0xff]
  %v4645 = vld [vmem:[%s1 + $0x600] sm:$0xff]
  %v4646 = vld [vmem:[%s1 + $0x610] ss:$0 sm:$0xff]
  %v4648 = vsel %vm4601, %v4576, 0
  %v4650 = vand.u32 %v4625, 4294901760
  %4651 = vmatpush.msra.mxu0 %v4650
  %v4652 = vand.u32 %v4624, 4294901760
  %4653 = vmatpush.msra.mxu0 %v4652
  %v4654 = vand.u32 %v4623, 4294901760
  %4655 = vmatpush.msra.mxu0 %v4654
  %v4656 = vand.u32 %v4622, 4294901760
  %4657 = vmatpush.msra.mxu0 %v4656
  %v4658 = vand.u32 %v4621, 4294901760
  %4659 = vmatpush.msra.mxu0 %v4658
  %v4660 = vand.u32 %v4620, 4294901760
  %4661 = vmatpush.msra.mxu0 %v4660
  %v4662 = vand.u32 %v4619, 4294901760
  %4663 = vmatpush.msra.mxu0 %v4662
  %v4664 = vand.u32 %v4618, 4294901760
  %4665 = vmatpush.msra.mxu0 %v4664
  %v4666 = vand.u32 %v4617, 4294901760
  %4667 = vmatpush.msra.mxu0 %v4666
  %v4668 = vand.u32 %v4616, 4294901760
  %4669 = vmatpush.msra.mxu0 %v4668
  %v4670 = vand.u32 %v4615, 4294901760
  %4671 = vmatpush.msra.mxu0 %v4670
  %v4672 = vand.u32 %v4614, 4294901760
  %4673 = vmatpush.msra.mxu0 %v4672
  %v4674 = vand.u32 %v4613, 4294901760
  %4675 = vmatpush.msra.mxu0 %v4674
  %v4676 = vand.u32 %v4612, 4294901760
  %4677 = vmatpush.msra.mxu0 %v4676
  %v4678 = vand.u32 %v4611, 4294901760
  %4679 = vmatpush.msra.mxu0 %v4678
  %v4680 = vand.u32 %v4610, 4294901760
  %4681 = vmatpush.msra.mxu0 %v4680
  %v4682 = vand.u32 %v4606, 4294901760
  %v4683 = vsub.f32 %v4606, %v4682
  %v4684 = vand.u32 %v4683, 4294901760
  %v4685 = vsub.f32 %v4683, %v4684
  %v4686 = vand.u32 %v4685, 4294901760
  %4687 = vmatmul.f32.gmra.mxu0 %v4686
  %v4688 = vpop.f32.mrf.mxu0
  %v4689 = vadd.f32 %v4646, %v4688
  %4690 = vdwg.mxu0
  %v4691 = vand.u32 %v4625, 4294901760
  %v4692 = vsub.f32 %v4625, %v4691
  %v4693 = vand.u32 %v4692, 4294901760
  %v4694 = vsub.f32 %v4692, %v4693
  %v4695 = vand.u32 %v4694, 4294901760
  %4696 = vmatpush.msra.mxu0 %v4695
  %v4697 = vand.u32 %v4624, 4294901760
  %v4698 = vsub.f32 %v4624, %v4697
  %v4699 = vand.u32 %v4698, 4294901760
  %v4700 = vsub.f32 %v4698, %v4699
  %v4701 = vand.u32 %v4700, 4294901760
  %4702 = vmatpush.msra.mxu0 %v4701
  %v4703 = vand.u32 %v4623, 4294901760
  %v4704 = vsub.f32 %v4623, %v4703
  %v4705 = vand.u32 %v4704, 4294901760
  %v4706 = vsub.f32 %v4704, %v4705
  %v4707 = vand.u32 %v4706, 4294901760
  %4708 = vmatpush.msra.mxu0 %v4707
  %v4709 = vand.u32 %v4622, 4294901760
  %v4710 = vsub.f32 %v4622, %v4709
  %v4711 = vand.u32 %v4710, 4294901760
  %v4712 = vsub.f32 %v4710, %v4711
  %v4713 = vand.u32 %v4712, 4294901760
  %4714 = vmatpush.msra.mxu0 %v4713
  %v4715 = vand.u32 %v4621, 4294901760
  %v4716 = vsub.f32 %v4621, %v4715
  %v4717 = vand.u32 %v4716, 4294901760
  %v4718 = vsub.f32 %v4716, %v4717
  %v4719 = vand.u32 %v4718, 4294901760
  %4720 = vmatpush.msra.mxu0 %v4719
  %v4721 = vand.u32 %v4620, 4294901760
  %v4722 = vsub.f32 %v4620, %v4721
  %v4723 = vand.u32 %v4722, 4294901760
  %v4724 = vsub.f32 %v4722, %v4723
  %v4725 = vand.u32 %v4724, 4294901760
  %4726 = vmatpush.msra.mxu0 %v4725
  %v4727 = vand.u32 %v4619, 4294901760
  %v4728 = vsub.f32 %v4619, %v4727
  %v4729 = vand.u32 %v4728, 4294901760
  %v4730 = vsub.f32 %v4728, %v4729
  %v4731 = vand.u32 %v4730, 4294901760
  %4732 = vmatpush.msra.mxu0 %v4731
  %v4733 = vand.u32 %v4618, 4294901760
  %v4734 = vsub.f32 %v4618, %v4733
  %v4735 = vand.u32 %v4734, 4294901760
  %v4736 = vsub.f32 %v4734, %v4735
  %v4737 = vand.u32 %v4736, 4294901760
  %4738 = vmatpush.msra.mxu0 %v4737
  %v4739 = vand.u32 %v4617, 4294901760
  %v4740 = vsub.f32 %v4617, %v4739
  %v4741 = vand.u32 %v4740, 4294901760
  %v4742 = vsub.f32 %v4740, %v4741
  %v4743 = vand.u32 %v4742, 4294901760
  %4744 = vmatpush.msra.mxu0 %v4743
  %v4745 = vand.u32 %v4616, 4294901760
  %v4746 = vsub.f32 %v4616, %v4745
  %v4747 = vand.u32 %v4746, 4294901760
  %v4748 = vsub.f32 %v4746, %v4747
  %v4749 = vand.u32 %v4748, 4294901760
  %4750 = vmatpush.msra.mxu0 %v4749
  %v4751 = vand.u32 %v4615, 4294901760
  %v4752 = vsub.f32 %v4615, %v4751
  %v4753 = vand.u32 %v4752, 4294901760
  %v4754 = vsub.f32 %v4752, %v4753
  %v4755 = vand.u32 %v4754, 4294901760
  %4756 = vmatpush.msra.mxu0 %v4755
  %v4757 = vand.u32 %v4614, 4294901760
  %v4758 = vsub.f32 %v4614, %v4757
  %v4759 = vand.u32 %v4758, 4294901760
  %v4760 = vsub.f32 %v4758, %v4759
  %v4761 = vand.u32 %v4760, 4294901760
  %4762 = vmatpush.msra.mxu0 %v4761
  %v4763 = vand.u32 %v4613, 4294901760
  %v4764 = vsub.f32 %v4613, %v4763
  %v4765 = vand.u32 %v4764, 4294901760
  %v4766 = vsub.f32 %v4764, %v4765
  %v4767 = vand.u32 %v4766, 4294901760
  %4768 = vmatpush.msra.mxu0 %v4767
  %v4769 = vand.u32 %v4612, 4294901760
  %v4770 = vsub.f32 %v4612, %v4769
  %v4771 = vand.u32 %v4770, 4294901760
  %v4772 = vsub.f32 %v4770, %v4771
  %v4773 = vand.u32 %v4772, 4294901760
  %4774 = vmatpush.msra.mxu0 %v4773
  %v4775 = vand.u32 %v4611, 4294901760
  %v4776 = vsub.f32 %v4611, %v4775
  %v4777 = vand.u32 %v4776, 4294901760
  %v4778 = vsub.f32 %v4776, %v4777
  %v4779 = vand.u32 %v4778, 4294901760
  %4780 = vmatpush.msra.mxu0 %v4779
  %v4781 = vand.u32 %v4610, 4294901760
  %v4782 = vsub.f32 %v4610, %v4781
  %v4783 = vand.u32 %v4782, 4294901760
  %v4784 = vsub.f32 %v4782, %v4783
  %v4785 = vand.u32 %v4784, 4294901760
  %4786 = vmatpush.msra.mxu0 %v4785
  %v4787 = vand.u32 %v4606, 4294901760
  %4788 = vmatmul.f32.gmra.mxu0 %v4787
  %v4789 = vpop.f32.mrf.mxu0
  %v4790 = vadd.f32 %v4689, %v4789
  %4791 = vdwg.mxu0
  %v4792 = vand.u32 %v4625, 4294901760
  %v4793 = vsub.f32 %v4625, %v4792
  %4794 = vmatpush.msra.mxu0 %v4793
  %v4795 = vand.u32 %v4624, 4294901760
  %v4796 = vsub.f32 %v4624, %v4795
  %4797 = vmatpush.msra.mxu0 %v4796
  %v4798 = vand.u32 %v4623, 4294901760
  %v4799 = vsub.f32 %v4623, %v4798
  %4800 = vmatpush.msra.mxu0 %v4799
  %v4801 = vand.u32 %v4622, 4294901760
  %v4802 = vsub.f32 %v4622, %v4801
  %4803 = vmatpush.msra.mxu0 %v4802
  %v4804 = vand.u32 %v4621, 4294901760
  %v4805 = vsub.f32 %v4621, %v4804
  %4806 = vmatpush.msra.mxu0 %v4805
  %v4807 = vand.u32 %v4620, 4294901760
  %v4808 = vsub.f32 %v4620, %v4807
  %4809 = vmatpush.msra.mxu0 %v4808
  %v4810 = vand.u32 %v4619, 4294901760
  %v4811 = vsub.f32 %v4619, %v4810
  %4812 = vmatpush.msra.mxu0 %v4811
  %v4813 = vand.u32 %v4618, 4294901760
  %v4814 = vsub.f32 %v4618, %v4813
  %4815 = vmatpush.msra.mxu0 %v4814
  %v4816 = vand.u32 %v4617, 4294901760
  %v4817 = vsub.f32 %v4617, %v4816
  %4818 = vmatpush.msra.mxu0 %v4817
  %v4819 = vand.u32 %v4616, 4294901760
  %v4820 = vsub.f32 %v4616, %v4819
  %4821 = vmatpush.msra.mxu0 %v4820
  %v4822 = vand.u32 %v4615, 4294901760
  %v4823 = vsub.f32 %v4615, %v4822
  %4824 = vmatpush.msra.mxu0 %v4823
  %v4825 = vand.u32 %v4614, 4294901760
  %v4826 = vsub.f32 %v4614, %v4825
  %4827 = vmatpush.msra.mxu0 %v4826
  %v4828 = vand.u32 %v4613, 4294901760
  %v4829 = vsub.f32 %v4613, %v4828
  %4830 = vmatpush.msra.mxu0 %v4829
  %v4831 = vand.u32 %v4612, 4294901760
  %v4832 = vsub.f32 %v4612, %v4831
  %4833 = vmatpush.msra.mxu0 %v4832
  %v4834 = vand.u32 %v4611, 4294901760
  %v4835 = vsub.f32 %v4611, %v4834
  %4836 = vmatpush.msra.mxu0 %v4835
  %v4837 = vand.u32 %v4610, 4294901760
  %v4838 = vsub.f32 %v4610, %v4837
  %4839 = vmatpush.msra.mxu0 %v4838
  %v4840 = vand.u32 %v4606, 4294901760
  %v4841 = vsub.f32 %v4606, %v4840
  %4842 = vmatmul.f32.gmra.mxu0 %v4841
  %v4843 = vpop.f32.mrf.mxu0
  %v4844 = vadd.f32 %v4790, %v4843
  %4845 = vdwg.mxu0
  %v4846 = vand.u32 %v4625, 4294901760
  %4847 = vmatpush.msra.mxu0 %v4846
  %v4848 = vand.u32 %v4624, 4294901760
  %4849 = vmatpush.msra.mxu0 %v4848
  %v4850 = vand.u32 %v4623, 4294901760
  %4851 = vmatpush.msra.mxu0 %v4850
  %v4852 = vand.u32 %v4622, 4294901760
  %4853 = vmatpush.msra.mxu0 %v4852
  %v4854 = vand.u32 %v4621, 4294901760
  %4855 = vmatpush.msra.mxu0 %v4854
  %v4856 = vand.u32 %v4620, 4294901760
  %4857 = vmatpush.msra.mxu0 %v4856
  %v4858 = vand.u32 %v4619, 4294901760
  %4859 = vmatpush.msra.mxu0 %v4858
  %v4860 = vand.u32 %v4618, 4294901760
  %4861 = vmatpush.msra.mxu0 %v4860
  %v4862 = vand.u32 %v4617, 4294901760
  %4863 = vmatpush.msra.mxu0 %v4862
  %v4864 = vand.u32 %v4616, 4294901760
  %4865 = vmatpush.msra.mxu0 %v4864
  %v4866 = vand.u32 %v4615, 4294901760
  %4867 = vmatpush.msra.mxu0 %v4866
  %v4868 = vand.u32 %v4614, 4294901760
  %4869 = vmatpush.msra.mxu0 %v4868
  %v4870 = vand.u32 %v4613, 4294901760
  %4871 = vmatpush.msra.mxu0 %v4870
  %v4872 = vand.u32 %v4612, 4294901760
  %4873 = vmatpush.msra.mxu0 %v4872
  %v4874 = vand.u32 %v4611, 4294901760
  %4875 = vmatpush.msra.mxu0 %v4874
  %v4876 = vand.u32 %v4610, 4294901760
  %4877 = vmatpush.msra.mxu0 %v4876
  %v4878 = vand.u32 %v4606, 4294901760
  %v4879 = vsub.f32 %v4606, %v4878
  %v4880 = vand.u32 %v4879, 4294901760
  %4881 = vmatmul.f32.gmra.mxu0 %v4880
  %v4882 = vpop.f32.mrf.mxu0
  %v4883 = vadd.f32 %v4844, %v4882
  %4884 = vdwg.mxu0
  %v4885 = vand.u32 %v4625, 4294901760
  %v4886 = vsub.f32 %v4625, %v4885
  %v4887 = vand.u32 %v4886, 4294901760
  %4888 = vmatpush.msra.mxu0 %v4887
  %v4889 = vand.u32 %v4624, 4294901760
  %v4890 = vsub.f32 %v4624, %v4889
  %v4891 = vand.u32 %v4890, 4294901760
  %4892 = vmatpush.msra.mxu0 %v4891
  %v4893 = vand.u32 %v4623, 4294901760
  %v4894 = vsub.f32 %v4623, %v4893
  %v4895 = vand.u32 %v4894, 4294901760
  %4896 = vmatpush.msra.mxu0 %v4895
  %v4897 = vand.u32 %v4622, 4294901760
  %v4898 = vsub.f32 %v4622, %v4897
  %v4899 = vand.u32 %v4898, 4294901760
  %4900 = vmatpush.msra.mxu0 %v4899
  %v4901 = vand.u32 %v4621, 4294901760
  %v4902 = vsub.f32 %v4621, %v4901
  %v4903 = vand.u32 %v4902, 4294901760
  %4904 = vmatpush.msra.mxu0 %v4903
  %v4905 = vand.u32 %v4620, 4294901760
  %v4906 = vsub.f32 %v4620, %v4905
  %v4907 = vand.u32 %v4906, 4294901760
  %4908 = vmatpush.msra.mxu0 %v4907
  %v4909 = vand.u32 %v4619, 4294901760
  %v4910 = vsub.f32 %v4619, %v4909
  %v4911 = vand.u32 %v4910, 4294901760
  %4912 = vmatpush.msra.mxu0 %v4911
  %v4913 = vand.u32 %v4618, 4294901760
  %v4914 = vsub.f32 %v4618, %v4913
  %v4915 = vand.u32 %v4914, 4294901760
  %4916 = vmatpush.msra.mxu0 %v4915
  %v4917 = vand.u32 %v4617, 4294901760
  %v4918 = vsub.f32 %v4617, %v4917
  %v4919 = vand.u32 %v4918, 4294901760
  %4920 = vmatpush.msra.mxu0 %v4919
  %v4921 = vand.u32 %v4616, 4294901760
  %v4922 = vsub.f32 %v4616, %v4921
  %v4923 = vand.u32 %v4922, 4294901760
  %4924 = vmatpush.msra.mxu0 %v4923
  %v4925 = vand.u32 %v4615, 4294901760
  %v4926 = vsub.f32 %v4615, %v4925
  %v4927 = vand.u32 %v4926, 4294901760
  %4928 = vmatpush.msra.mxu0 %v4927
  %v4929 = vand.u32 %v4614, 4294901760
  %v4930 = vsub.f32 %v4614, %v4929
  %v4931 = vand.u32 %v4930, 4294901760
  %4932 = vmatpush.msra.mxu0 %v4931
  %v4933 = vand.u32 %v4613, 4294901760
  %v4934 = vsub.f32 %v4613, %v4933
  %v4935 = vand.u32 %v4934, 4294901760
  %4936 = vmatpush.msra.mxu0 %v4935
  %v4937 = vand.u32 %v4612, 4294901760
  %v4938 = vsub.f32 %v4612, %v4937
  %v4939 = vand.u32 %v4938, 4294901760
  %4940 = vmatpush.msra.mxu0 %v4939
  %v4941 = vand.u32 %v4611, 4294901760
  %v4942 = vsub.f32 %v4611, %v4941
  %v4943 = vand.u32 %v4942, 4294901760
  %4944 = vmatpush.msra.mxu0 %v4943
  %v4945 = vand.u32 %v4610, 4294901760
  %v4946 = vsub.f32 %v4610, %v4945
  %v4947 = vand.u32 %v4946, 4294901760
  %4948 = vmatpush.msra.mxu0 %v4947
  %v4949 = vand.u32 %v4606, 4294901760
  %4950 = vmatmul.f32.gmra.mxu0 %v4949
  %v4951 = vpop.f32.mrf.mxu0
  %v4952 = vadd.f32 %v4883, %v4951
  %4953 = vdwg.mxu0
  %v4954 = vand.u32 %v4625, 4294901760
  %4955 = vmatpush.msra.mxu0 %v4954
  %v4956 = vand.u32 %v4624, 4294901760
  %4957 = vmatpush.msra.mxu0 %v4956
  %v4958 = vand.u32 %v4623, 4294901760
  %4959 = vmatpush.msra.mxu0 %v4958
  %v4960 = vand.u32 %v4622, 4294901760
  %4961 = vmatpush.msra.mxu0 %v4960
  %v4962 = vand.u32 %v4621, 4294901760
  %4963 = vmatpush.msra.mxu0 %v4962
  %v4964 = vand.u32 %v4620, 4294901760
  %4965 = vmatpush.msra.mxu0 %v4964
  %v4966 = vand.u32 %v4619, 4294901760
  %4967 = vmatpush.msra.mxu0 %v4966
  %v4968 = vand.u32 %v4618, 4294901760
  %4969 = vmatpush.msra.mxu0 %v4968
  %v4970 = vand.u32 %v4617, 4294901760
  %4971 = vmatpush.msra.mxu0 %v4970
  %v4972 = vand.u32 %v4616, 4294901760
  %4973 = vmatpush.msra.mxu0 %v4972
  %v4974 = vand.u32 %v4615, 4294901760
  %4975 = vmatpush.msra.mxu0 %v4974
  %v4976 = vand.u32 %v4614, 4294901760
  %4977 = vmatpush.msra.mxu0 %v4976
  %v4978 = vand.u32 %v4613, 4294901760
  %4979 = vmatpush.msra.mxu0 %v4978
  %v4980 = vand.u32 %v4612, 4294901760
  %4981 = vmatpush.msra.mxu0 %v4980
  %v4982 = vand.u32 %v4611, 4294901760
  %4983 = vmatpush.msra.mxu0 %v4982
  %v4984 = vand.u32 %v4610, 4294901760
  %4985 = vmatpush.msra.mxu0 %v4984
  %v4986 = vand.u32 %v4606, 4294901760
  %4987 = vmatmul.f32.gmra.mxu0 %v4986
  %v4988 = vpop.f32.mrf.mxu0
  %v4989 = vadd.f32 %v4952, %v4988
  %4990 = vdwg.mxu0
  %v4991 = vand.u32 %v4641, 4294901760
  %4992 = vmatpush.msra.mxu0 %v4991
  %v4993 = vand.u32 %v4640, 4294901760
  %4994 = vmatpush.msra.mxu0 %v4993
  %v4995 = vand.u32 %v4639, 4294901760
  %4996 = vmatpush.msra.mxu0 %v4995
  %v4997 = vand.u32 %v4638, 4294901760
  %4998 = vmatpush.msra.mxu0 %v4997
  %v4999 = vand.u32 %v4637, 4294901760
  %5000 = vmatpush.msra.mxu0 %v4999
  %v5001 = vand.u32 %v4636, 4294901760
  %5002 = vmatpush.msra.mxu0 %v5001
  %v5003 = vand.u32 %v4635, 4294901760
  %5004 = vmatpush.msra.mxu0 %v5003
  %v5005 = vand.u32 %v4634, 4294901760
  %5006 = vmatpush.msra.mxu0 %v5005
  %v5007 = vand.u32 %v4633, 4294901760
  %5008 = vmatpush.msra.mxu0 %v5007
  %v5009 = vand.u32 %v4632, 4294901760
  %5010 = vmatpush.msra.mxu0 %v5009
  %v5011 = vand.u32 %v4631, 4294901760
  %5012 = vmatpush.msra.mxu0 %v5011
  %v5013 = vand.u32 %v4630, 4294901760
  %5014 = vmatpush.msra.mxu0 %v5013
  %v5015 = vand.u32 %v4629, 4294901760
  %5016 = vmatpush.msra.mxu0 %v5015
  %v5017 = vand.u32 %v4628, 4294901760
  %5018 = vmatpush.msra.mxu0 %v5017
  %v5019 = vand.u32 %v4627, 4294901760
  %5020 = vmatpush.msra.mxu0 %v5019
  %v5021 = vand.u32 %v4626, 4294901760
  %5022 = vmatpush.msra.mxu0 %v5021
  %v5023 = vand.u32 %v4609, 4294901760
  %v5024 = vsub.f32 %v4609, %v5023
  %v5025 = vand.u32 %v5024, 4294901760
  %v5026 = vsub.f32 %v5024, %v5025
  %v5027 = vand.u32 %v5026, 4294901760
  %5028 = vmatmul.f32.gmra.mxu0 %v5027
  %v5029 = vpop.f32.mrf.mxu0
  %v5030 = vadd.f32 %v4989, %v5029
  %5031 = vdwg.mxu0
  %v5032 = vand.u32 %v4641, 4294901760
  %v5033 = vsub.f32 %v4641, %v5032
  %v5034 = vand.u32 %v5033, 4294901760
  %v5035 = vsub.f32 %v5033, %v5034
  %v5036 = vand.u32 %v5035, 4294901760
  %5037 = vmatpush.msra.mxu0 %v5036
  %v5038 = vand.u32 %v4640, 4294901760
  %v5039 = vsub.f32 %v4640, %v5038
  %v5040 = vand.u32 %v5039, 4294901760
  %v5041 = vsub.f32 %v5039, %v5040
  %v5042 = vand.u32 %v5041, 4294901760
  %5043 = vmatpush.msra.mxu0 %v5042
  %v5044 = vand.u32 %v4639, 4294901760
  %v5045 = vsub.f32 %v4639, %v5044
  %v5046 = vand.u32 %v5045, 4294901760
  %v5047 = vsub.f32 %v5045, %v5046
  %v5048 = vand.u32 %v5047, 4294901760
  %5049 = vmatpush.msra.mxu0 %v5048
  %v5050 = vand.u32 %v4638, 4294901760
  %v5051 = vsub.f32 %v4638, %v5050
  %v5052 = vand.u32 %v5051, 4294901760
  %v5053 = vsub.f32 %v5051, %v5052
  %v5054 = vand.u32 %v5053, 4294901760
  %5055 = vmatpush.msra.mxu0 %v5054
  %v5056 = vand.u32 %v4637, 4294901760
  %v5057 = vsub.f32 %v4637, %v5056
  %v5058 = vand.u32 %v5057, 4294901760
  %v5059 = vsub.f32 %v5057, %v5058
  %v5060 = vand.u32 %v5059, 4294901760
  %5061 = vmatpush.msra.mxu0 %v5060
  %v5062 = vand.u32 %v4636, 4294901760
  %v5063 = vsub.f32 %v4636, %v5062
  %v5064 = vand.u32 %v5063, 4294901760
  %v5065 = vsub.f32 %v5063, %v5064
  %v5066 = vand.u32 %v5065, 4294901760
  %5067 = vmatpush.msra.mxu0 %v5066
  %v5068 = vand.u32 %v4635, 4294901760
  %v5069 = vsub.f32 %v4635, %v5068
  %v5070 = vand.u32 %v5069, 4294901760
  %v5071 = vsub.f32 %v5069, %v5070
  %v5072 = vand.u32 %v5071, 4294901760
  %5073 = vmatpush.msra.mxu0 %v5072
  %v5074 = vand.u32 %v4634, 4294901760
  %v5075 = vsub.f32 %v4634, %v5074
  %v5076 = vand.u32 %v5075, 4294901760
  %v5077 = vsub.f32 %v5075, %v5076
  %v5078 = vand.u32 %v5077, 4294901760
  %5079 = vmatpush.msra.mxu0 %v5078
  %v5080 = vand.u32 %v4633, 4294901760
  %v5081 = vsub.f32 %v4633, %v5080
  %v5082 = vand.u32 %v5081, 4294901760
  %v5083 = vsub.f32 %v5081, %v5082
  %v5084 = vand.u32 %v5083, 4294901760
  %5085 = vmatpush.msra.mxu0 %v5084
  %v5086 = vand.u32 %v4632, 4294901760
  %v5087 = vsub.f32 %v4632, %v5086
  %v5088 = vand.u32 %v5087, 4294901760
  %v5089 = vsub.f32 %v5087, %v5088
  %v5090 = vand.u32 %v5089, 4294901760
  %5091 = vmatpush.msra.mxu0 %v5090
  %v5092 = vand.u32 %v4631, 4294901760
  %v5093 = vsub.f32 %v4631, %v5092
  %v5094 = vand.u32 %v5093, 4294901760
  %v5095 = vsub.f32 %v5093, %v5094
  %v5096 = vand.u32 %v5095, 4294901760
  %5097 = vmatpush.msra.mxu0 %v5096
  %v5098 = vand.u32 %v4630, 4294901760
  %v5099 = vsub.f32 %v4630, %v5098
  %v5100 = vand.u32 %v5099, 4294901760
  %v5101 = vsub.f32 %v5099, %v5100
  %v5102 = vand.u32 %v5101, 4294901760
  %5103 = vmatpush.msra.mxu0 %v5102
  %v5104 = vand.u32 %v4629, 4294901760
  %v5105 = vsub.f32 %v4629, %v5104
  %v5106 = vand.u32 %v5105, 4294901760
  %v5107 = vsub.f32 %v5105, %v5106
  %v5108 = vand.u32 %v5107, 4294901760
  %5109 = vmatpush.msra.mxu0 %v5108
  %v5110 = vand.u32 %v4628, 4294901760
  %v5111 = vsub.f32 %v4628, %v5110
  %v5112 = vand.u32 %v5111, 4294901760
  %v5113 = vsub.f32 %v5111, %v5112
  %v5114 = vand.u32 %v5113, 4294901760
  %5115 = vmatpush.msra.mxu0 %v5114
  %v5116 = vand.u32 %v4627, 4294901760
  %v5117 = vsub.f32 %v4627, %v5116
  %v5118 = vand.u32 %v5117, 4294901760
  %v5119 = vsub.f32 %v5117, %v5118
  %v5120 = vand.u32 %v5119, 4294901760
  %5121 = vmatpush.msra.mxu0 %v5120
  %v5122 = vand.u32 %v4626, 4294901760
  %v5123 = vsub.f32 %v4626, %v5122
  %v5124 = vand.u32 %v5123, 4294901760
  %v5125 = vsub.f32 %v5123, %v5124
  %v5126 = vand.u32 %v5125, 4294901760
  %5127 = vmatpush.msra.mxu0 %v5126
  %v5128 = vand.u32 %v4609, 4294901760
  %5129 = vmatmul.f32.gmra.mxu0 %v5128
  %v5130 = vpop.f32.mrf.mxu0
  %v5131 = vadd.f32 %v5030, %v5130
  %5132 = vdwg.mxu0
  %v5133 = vand.u32 %v4641, 4294901760
  %v5134 = vsub.f32 %v4641, %v5133
  %5135 = vmatpush.msra.mxu0 %v5134
  %v5136 = vand.u32 %v4640, 4294901760
  %v5137 = vsub.f32 %v4640, %v5136
  %5138 = vmatpush.msra.mxu0 %v5137
  %v5139 = vand.u32 %v4639, 4294901760
  %v5140 = vsub.f32 %v4639, %v5139
  %5141 = vmatpush.msra.mxu0 %v5140
  %v5142 = vand.u32 %v4638, 4294901760
  %v5143 = vsub.f32 %v4638, %v5142
  %5144 = vmatpush.msra.mxu0 %v5143
  %v5145 = vand.u32 %v4637, 4294901760
  %v5146 = vsub.f32 %v4637, %v5145
  %5147 = vmatpush.msra.mxu0 %v5146
  %v5148 = vand.u32 %v4636, 4294901760
  %v5149 = vsub.f32 %v4636, %v5148
  %5150 = vmatpush.msra.mxu0 %v5149
  %v5151 = vand.u32 %v4635, 4294901760
  %v5152 = vsub.f32 %v4635, %v5151
  %5153 = vmatpush.msra.mxu0 %v5152
  %v5154 = vand.u32 %v4634, 4294901760
  %v5155 = vsub.f32 %v4634, %v5154
  %5156 = vmatpush.msra.mxu0 %v5155
  %v5157 = vand.u32 %v4633, 4294901760
  %v5158 = vsub.f32 %v4633, %v5157
  %5159 = vmatpush.msra.mxu0 %v5158
  %v5160 = vand.u32 %v4632, 4294901760
  %v5161 = vsub.f32 %v4632, %v5160
  %5162 = vmatpush.msra.mxu0 %v5161
  %v5163 = vand.u32 %v4631, 4294901760
  %v5164 = vsub.f32 %v4631, %v5163
  %5165 = vmatpush.msra.mxu0 %v5164
  %v5166 = vand.u32 %v4630, 4294901760
  %v5167 = vsub.f32 %v4630, %v5166
  %5168 = vmatpush.msra.mxu0 %v5167
  %v5169 = vand.u32 %v4629, 4294901760
  %v5170 = vsub.f32 %v4629, %v5169
  %5171 = vmatpush.msra.mxu0 %v5170
  %v5172 = vand.u32 %v4628, 4294901760
  %v5173 = vsub.f32 %v4628, %v5172
  %5174 = vmatpush.msra.mxu0 %v5173
  %v5175 = vand.u32 %v4627, 4294901760
  %v5176 = vsub.f32 %v4627, %v5175
  %5177 = vmatpush.msra.mxu0 %v5176
  %v5178 = vand.u32 %v4626, 4294901760
  %v5179 = vsub.f32 %v4626, %v5178
  %5180 = vmatpush.msra.mxu0 %v5179
  %v5181 = vand.u32 %v4609, 4294901760
  %v5182 = vsub.f32 %v4609, %v5181
  %5183 = vmatmul.f32.gmra.mxu0 %v5182
  %v5184 = vpop.f32.mrf.mxu0
  %v5185 = vadd.f32 %v5131, %v5184
  %5186 = vdwg.mxu0
  %v5187 = vand.u32 %v4641, 4294901760
  %5188 = vmatpush.msra.mxu0 %v5187
  %v5189 = vand.u32 %v4640, 4294901760
  %5190 = vmatpush.msra.mxu0 %v5189
  %v5191 = vand.u32 %v4639, 4294901760
  %5192 = vmatpush.msra.mxu0 %v5191
  %v5193 = vand.u32 %v4638, 4294901760
  %5194 = vmatpush.msra.mxu0 %v5193
  %v5195 = vand.u32 %v4637, 4294901760
  %5196 = vmatpush.msra.mxu0 %v5195
  %v5197 = vand.u32 %v4636, 4294901760
  %5198 = vmatpush.msra.mxu0 %v5197
  %v5199 = vand.u32 %v4635, 4294901760
  %5200 = vmatpush.msra.mxu0 %v5199
  %v5201 = vand.u32 %v4634, 4294901760
  %5202 = vmatpush.msra.mxu0 %v5201
  %v5203 = vand.u32 %v4633, 4294901760
  %5204 = vmatpush.msra.mxu0 %v5203
  %v5205 = vand.u32 %v4632, 4294901760
  %5206 = vmatpush.msra.mxu0 %v5205
  %v5207 = vand.u32 %v4631, 4294901760
  %5208 = vmatpush.msra.mxu0 %v5207
  %v5209 = vand.u32 %v4630, 4294901760
  %5210 = vmatpush.msra.mxu0 %v5209
  %v5211 = vand.u32 %v4629, 4294901760
  %5212 = vmatpush.msra.mxu0 %v5211
  %v5213 = vand.u32 %v4628, 4294901760
  %5214 = vmatpush.msra.mxu0 %v5213
  %v5215 = vand.u32 %v4627, 4294901760
  %5216 = vmatpush.msra.mxu0 %v5215
  %v5217 = vand.u32 %v4626, 4294901760
  %5218 = vmatpush.msra.mxu0 %v5217
  %v5219 = vand.u32 %v4609, 4294901760
  %v5220 = vsub.f32 %v4609, %v5219
  %v5221 = vand.u32 %v5220, 4294901760
  %5222 = vmatmul.f32.gmra.mxu0 %v5221
  %v5223 = vpop.f32.mrf.mxu0
  %v5224 = vadd.f32 %v5185, %v5223
  %5225 = vdwg.mxu0
  %v5226 = vand.u32 %v4641, 4294901760
  %v5227 = vsub.f32 %v4641, %v5226
  %v5228 = vand.u32 %v5227, 4294901760
  %5229 = vmatpush.msra.mxu0 %v5228
  %v5230 = vand.u32 %v4640, 4294901760
  %v5231 = vsub.f32 %v4640, %v5230
  %v5232 = vand.u32 %v5231, 4294901760
  %5233 = vmatpush.msra.mxu0 %v5232
  %v5234 = vand.u32 %v4639, 4294901760
  %v5235 = vsub.f32 %v4639, %v5234
  %v5236 = vand.u32 %v5235, 4294901760
  %5237 = vmatpush.msra.mxu0 %v5236
  %v5238 = vand.u32 %v4638, 4294901760
  %v5239 = vsub.f32 %v4638, %v5238
  %v5240 = vand.u32 %v5239, 4294901760
  %5241 = vmatpush.msra.mxu0 %v5240
  %v5242 = vand.u32 %v4637, 4294901760
  %v5243 = vsub.f32 %v4637, %v5242
  %v5244 = vand.u32 %v5243, 4294901760
  %5245 = vmatpush.msra.mxu0 %v5244
  %v5246 = vand.u32 %v4636, 4294901760
  %v5247 = vsub.f32 %v4636, %v5246
  %v5248 = vand.u32 %v5247, 4294901760
  %5249 = vmatpush.msra.mxu0 %v5248
  %v5250 = vand.u32 %v4635, 4294901760
  %v5251 = vsub.f32 %v4635, %v5250
  %v5252 = vand.u32 %v5251, 4294901760
  %5253 = vmatpush.msra.mxu0 %v5252
  %v5254 = vand.u32 %v4634, 4294901760
  %v5255 = vsub.f32 %v4634, %v5254
  %v5256 = vand.u32 %v5255, 4294901760
  %5257 = vmatpush.msra.mxu0 %v5256
  %v5258 = vand.u32 %v4633, 4294901760
  %v5259 = vsub.f32 %v4633, %v5258
  %v5260 = vand.u32 %v5259, 4294901760
  %5261 = vmatpush.msra.mxu0 %v5260
  %v5262 = vand.u32 %v4632, 4294901760
  %v5263 = vsub.f32 %v4632, %v5262
  %v5264 = vand.u32 %v5263, 4294901760
  %5265 = vmatpush.msra.mxu0 %v5264
  %v5266 = vand.u32 %v4631, 4294901760
  %v5267 = vsub.f32 %v4631, %v5266
  %v5268 = vand.u32 %v5267, 4294901760
  %5269 = vmatpush.msra.mxu0 %v5268
  %v5270 = vand.u32 %v4630, 4294901760
  %v5271 = vsub.f32 %v4630, %v5270
  %v5272 = vand.u32 %v5271, 4294901760
  %5273 = vmatpush.msra.mxu0 %v5272
  %v5274 = vand.u32 %v4629, 4294901760
  %v5275 = vsub.f32 %v4629, %v5274
  %v5276 = vand.u32 %v5275, 4294901760
  %5277 = vmatpush.msra.mxu0 %v5276
  %v5278 = vand.u32 %v4628, 4294901760
  %v5279 = vsub.f32 %v4628, %v5278
  %v5280 = vand.u32 %v5279, 4294901760
  %5281 = vmatpush.msra.mxu0 %v5280
  %v5282 = vand.u32 %v4627, 4294901760
  %v5283 = vsub.f32 %v4627, %v5282
  %v5284 = vand.u32 %v5283, 4294901760
  %5285 = vmatpush.msra.mxu0 %v5284
  %v5286 = vand.u32 %v4626, 4294901760
  %v5287 = vsub.f32 %v4626, %v5286
  %v5288 = vand.u32 %v5287, 4294901760
  %5289 = vmatpush.msra.mxu0 %v5288
  %v5290 = vand.u32 %v4609, 4294901760
  %5291 = vmatmul.f32.gmra.mxu0 %v5290
  %v5292 = vpop.f32.mrf.mxu0
  %v5293 = vadd.f32 %v5224, %v5292
  %5294 = vdwg.mxu0
  %v5295 = vand.u32 %v4641, 4294901760
  %5296 = vmatpush.msra.mxu0 %v5295
  %v5297 = vand.u32 %v4640, 4294901760
  %5298 = vmatpush.msra.mxu0 %v5297
  %v5299 = vand.u32 %v4639, 4294901760
  %5300 = vmatpush.msra.mxu0 %v5299
  %v5301 = vand.u32 %v4638, 4294901760
  %5302 = vmatpush.msra.mxu0 %v5301
  %v5303 = vand.u32 %v4637, 4294901760
  %5304 = vmatpush.msra.mxu0 %v5303
  %v5305 = vand.u32 %v4636, 4294901760
  %5306 = vmatpush.msra.mxu0 %v5305
  %v5307 = vand.u32 %v4635, 4294901760
  %5308 = vmatpush.msra.mxu0 %v5307
  %v5309 = vand.u32 %v4634, 4294901760
  %5310 = vmatpush.msra.mxu0 %v5309
  %v5311 = vand.u32 %v4633, 4294901760
  %5312 = vmatpush.msra.mxu0 %v5311
  %v5313 = vand.u32 %v4632, 4294901760
  %5314 = vmatpush.msra.mxu0 %v5313
  %v5315 = vand.u32 %v4631, 4294901760
  %5316 = vmatpush.msra.mxu0 %v5315
  %v5317 = vand.u32 %v4630, 4294901760
  %5318 = vmatpush.msra.mxu0 %v5317
  %v5319 = vand.u32 %v4629, 4294901760
  %5320 = vmatpush.msra.mxu0 %v5319
  %v5321 = vand.u32 %v4628, 4294901760
  %5322 = vmatpush.msra.mxu0 %v5321
  %v5323 = vand.u32 %v4627, 4294901760
  %5324 = vmatpush.msra.mxu0 %v5323
  %v5325 = vand.u32 %v4626, 4294901760
  %5326 = vmatpush.msra.mxu0 %v5325
  %v5327 = vand.u32 %v4609, 4294901760
  %5328 = vmatmul.f32.gmra.mxu0 %v5327
  %v5329 = vpop.f32.mrf.mxu0
  %v5330 = vadd.f32 %v5293, %v5329
  %5331 = vdwg.mxu0
  %5332 = vmatpush.msra.mxu0 0.0
  %5333 = vmatpush.msra.mxu0 0.0
  %5334 = vmatpush.msra.mxu0 0.0
  %5335 = vmatpush.msra.mxu0 0.0
  %5336 = vmatpush.msra.mxu0 0.0
  %5337 = vmatpush.msra.mxu0 0.0
  %5338 = vmatpush.msra.mxu0 0.0
  %5339 = vmatpush.msra.mxu0 0.0
  %5340 = vmatpush.msra.mxu0 0.0
  %5341 = vmatpush.msra.mxu0 0.0
  %5342 = vmatpush.msra.mxu0 0.0
  %5343 = vmatpush.msra.mxu0 0.0
  %v5344 = vand.u32 %v4645, 4294901760
  %5345 = vmatpush.msra.mxu0 %v5344
  %v5346 = vand.u32 %v4644, 4294901760
  %5347 = vmatpush.msra.mxu0 %v5346
  %v5348 = vand.u32 %v4643, 4294901760
  %5349 = vmatpush.msra.mxu0 %v5348
  %v5350 = vand.u32 %v4642, 4294901760
  %5351 = vmatpush.msra.mxu0 %v5350
  %v5352 = vand.u32 %v4648, 4294901760
  %v5353 = vsub.f32 %v4648, %v5352
  %v5354 = vand.u32 %v5353, 4294901760
  %v5355 = vsub.f32 %v5353, %v5354
  %v5356 = vand.u32 %v5355, 4294901760
  %5357 = vmatmul.f32.gmra.mxu0 %v5356
  %v5358 = vpop.f32.mrf.mxu0
  %v5359 = vadd.f32 %v5330, %v5358
  %5360 = vdwg.mxu0
  %5361 = vmatpush.msra.mxu0 0.0
  %5362 = vmatpush.msra.mxu0 0.0
  %5363 = vmatpush.msra.mxu0 0.0
  %5364 = vmatpush.msra.mxu0 0.0
  %5365 = vmatpush.msra.mxu0 0.0
  %5366 = vmatpush.msra.mxu0 0.0
  %5367 = vmatpush.msra.mxu0 0.0
  %5368 = vmatpush.msra.mxu0 0.0
  %5369 = vmatpush.msra.mxu0 0.0
  %5370 = vmatpush.msra.mxu0 0.0
  %5371 = vmatpush.msra.mxu0 0.0
  %5372 = vmatpush.msra.mxu0 0.0
  %v5373 = vand.u32 %v4645, 4294901760
  %v5374 = vsub.f32 %v4645, %v5373
  %v5375 = vand.u32 %v5374, 4294901760
  %v5376 = vsub.f32 %v5374, %v5375
  %v5377 = vand.u32 %v5376, 4294901760
  %5378 = vmatpush.msra.mxu0 %v5377
  %v5379 = vand.u32 %v4644, 4294901760
  %v5380 = vsub.f32 %v4644, %v5379
  %v5381 = vand.u32 %v5380, 4294901760
  %v5382 = vsub.f32 %v5380, %v5381
  %v5383 = vand.u32 %v5382, 4294901760
  %5384 = vmatpush.msra.mxu0 %v5383
  %v5385 = vand.u32 %v4643, 4294901760
  %v5386 = vsub.f32 %v4643, %v5385
  %v5387 = vand.u32 %v5386, 4294901760
  %v5388 = vsub.f32 %v5386, %v5387
  %v5389 = vand.u32 %v5388, 4294901760
  %5390 = vmatpush.msra.mxu0 %v5389
  %v5391 = vand.u32 %v4642, 4294901760
  %v5392 = vsub.f32 %v4642, %v5391
  %v5393 = vand.u32 %v5392, 4294901760
  %v5394 = vsub.f32 %v5392, %v5393
  %v5395 = vand.u32 %v5394, 4294901760
  %5396 = vmatpush.msra.mxu0 %v5395
  %v5397 = vand.u32 %v4648, 4294901760
  %5398 = vmatmul.f32.gmra.mxu0 %v5397
  %v5399 = vpop.f32.mrf.mxu0
  %v5400 = vadd.f32 %v5359, %v5399
  %5401 = vdwg.mxu0
  %5402 = vmatpush.msra.mxu0 0.0
  %5403 = vmatpush.msra.mxu0 0.0
  %5404 = vmatpush.msra.mxu0 0.0
  %5405 = vmatpush.msra.mxu0 0.0
  %5406 = vmatpush.msra.mxu0 0.0
  %5407 = vmatpush.msra.mxu0 0.0
  %5408 = vmatpush.msra.mxu0 0.0
  %5409 = vmatpush.msra.mxu0 0.0
  %5410 = vmatpush.msra.mxu0 0.0
  %5411 = vmatpush.msra.mxu0 0.0
  %5412 = vmatpush.msra.mxu0 0.0
  %5413 = vmatpush.msra.mxu0 0.0
  %v5414 = vand.u32 %v4645, 4294901760
  %v5415 = vsub.f32 %v4645, %v5414
  %5416 = vmatpush.msra.mxu0 %v5415
  %v5417 = vand.u32 %v4644, 4294901760
  %v5418 = vsub.f32 %v4644, %v5417
  %5419 = vmatpush.msra.mxu0 %v5418
  %v5420 = vand.u32 %v4643, 4294901760
  %v5421 = vsub.f32 %v4643, %v5420
  %5422 = vmatpush.msra.mxu0 %v5421
  %v5423 = vand.u32 %v4642, 4294901760
  %v5424 = vsub.f32 %v4642, %v5423
  %5425 = vmatpush.msra.mxu0 %v5424
  %v5426 = vand.u32 %v4648, 4294901760
  %v5427 = vsub.f32 %v4648, %v5426
  %5428 = vmatmul.f32.gmra.mxu0 %v5427
  %v5429 = vpop.f32.mrf.mxu0
  %v5430 = vadd.f32 %v5400, %v5429
  %5431 = vdwg.mxu0
  %5432 = vmatpush.msra.mxu0 0.0
  %5433 = vmatpush.msra.mxu0 0.0
  %5434 = vmatpush.msra.mxu0 0.0
  %5435 = vmatpush.msra.mxu0 0.0
  %5436 = vmatpush.msra.mxu0 0.0
  %5437 = vmatpush.msra.mxu0 0.0
  %5438 = vmatpush.msra.mxu0 0.0
  %5439 = vmatpush.msra.mxu0 0.0
  %5440 = vmatpush.msra.mxu0 0.0
  %5441 = vmatpush.msra.mxu0 0.0
  %5442 = vmatpush.msra.mxu0 0.0
  %5443 = vmatpush.msra.mxu0 0.0
  %v5444 = vand.u32 %v4645, 4294901760
  %5445 = vmatpush.msra.mxu0 %v5444
  %v5446 = vand.u32 %v4644, 4294901760
  %5447 = vmatpush.msra.mxu0 %v5446
  %v5448 = vand.u32 %v4643, 4294901760
  %5449 = vmatpush.msra.mxu0 %v5448
  %v5450 = vand.u32 %v4642, 4294901760
  %5451 = vmatpush.msra.mxu0 %v5450
  %v5452 = vand.u32 %v4648, 4294901760
  %v5453 = vsub.f32 %v4648, %v5452
  %v5454 = vand.u32 %v5453, 4294901760
  %5455 = vmatmul.f32.gmra.mxu0 %v5454
  %v5456 = vpop.f32.mrf.mxu0
  %v5457 = vadd.f32 %v5430, %v5456
  %5458 = vdwg.mxu0
  %5459 = vmatpush.msra.mxu0 0.0
  %5460 = vmatpush.msra.mxu0 0.0
  %5461 = vmatpush.msra.mxu0 0.0
  %5462 = vmatpush.msra.mxu0 0.0
  %5463 = vmatpush.msra.mxu0 0.0
  %5464 = vmatpush.msra.mxu0 0.0
  %5465 = vmatpush.msra.mxu0 0.0
  %5466 = vmatpush.msra.mxu0 0.0
  %5467 = vmatpush.msra.mxu0 0.0
  %5468 = vmatpush.msra.mxu0 0.0
  %5469 = vmatpush.msra.mxu0 0.0
  %5470 = vmatpush.msra.mxu0 0.0
  %v5471 = vand.u32 %v4645, 4294901760
  %v5472 = vsub.f32 %v4645, %v5471
  %v5473 = vand.u32 %v5472, 4294901760
  %5474 = vmatpush.msra.mxu0 %v5473
  %v5475 = vand.u32 %v4644, 4294901760
  %v5476 = vsub.f32 %v4644, %v5475
  %v5477 = vand.u32 %v5476, 4294901760
  %5478 = vmatpush.msra.mxu0 %v5477
  %v5479 = vand.u32 %v4643, 4294901760
  %v5480 = vsub.f32 %v4643, %v5479
  %v5481 = vand.u32 %v5480, 4294901760
  %5482 = vmatpush.msra.mxu0 %v5481
  %v5483 = vand.u32 %v4642, 4294901760
  %v5484 = vsub.f32 %v4642, %v5483
  %v5485 = vand.u32 %v5484, 4294901760
  %5486 = vmatpush.msra.mxu0 %v5485
  %v5487 = vand.u32 %v4648, 4294901760
  %5488 = vmatmul.f32.gmra.mxu0 %v5487
  %v5489 = vpop.f32.mrf.mxu0
  %v5490 = vadd.f32 %v5457, %v5489
  %5491 = vdwg.mxu0
  %5492 = vmatpush.msra.mxu0 0.0
  %5493 = vmatpush.msra.mxu0 0.0
  %5494 = vmatpush.msra.mxu0 0.0
  %5495 = vmatpush.msra.mxu0 0.0
  %5496 = vmatpush.msra.mxu0 0.0
  %5497 = vmatpush.msra.mxu0 0.0
  %5498 = vmatpush.msra.mxu0 0.0
  %5499 = vmatpush.msra.mxu0 0.0
  %5500 = vmatpush.msra.mxu0 0.0
  %5501 = vmatpush.msra.mxu0 0.0
  %5502 = vmatpush.msra.mxu0 0.0
  %5503 = vmatpush.msra.mxu0 0.0
  %v5504 = vand.u32 %v4645, 4294901760
  %5505 = vmatpush.msra.mxu0 %v5504
  %v5506 = vand.u32 %v4644, 4294901760
  %5507 = vmatpush.msra.mxu0 %v5506
  %v5508 = vand.u32 %v4643, 4294901760
  %5509 = vmatpush.msra.mxu0 %v5508
  %v5510 = vand.u32 %v4642, 4294901760
  %5511 = vmatpush.msra.mxu0 %v5510
  %v5512 = vand.u32 %v4648, 4294901760
  %5513 = vmatmul.f32.gmra.mxu0 %v5512
  %v5514 = vpop.f32.mrf.mxu0
  %v5515 = vadd.f32 %v5490, %v5514
  %5516 = vdwg.mxu0
  %v5517 = vmax.f32 %v5515, 0.0
  %v5518 = vld [vmem:[%s1 + $0x620] sm:$0xff]
  %v5519 = vld [vmem:[%s1 + $0x630] sm:$0xff]
  %v5520 = vld [vmem:[%s1 + $0x640] sm:$0xff]
  %v5521 = vld [vmem:[%s1 + $0x650] sm:$0xff]
  %v5522 = vld [vmem:[%s1 + $0x660] sm:$0xff]
  %v5523 = vld [vmem:[%s1 + $0x670] sm:$0xff]
  %v5524 = vld [vmem:[%s1 + $0x680] sm:$0xff]
  %v5525 = vld [vmem:[%s1 + $0x690] sm:$0xff]
  %v5526 = vld [vmem:[%s1 + $0x6a0] ss:$0 sm:$0xff]
  %v5528 = vsel %vm4603, %v5517, 0
  %5530 = vmatpush.msra.mxu0 0.0
  %5531 = vmatpush.msra.mxu0 0.0
  %5532 = vmatpush.msra.mxu0 0.0
  %5533 = vmatpush.msra.mxu0 0.0
  %5534 = vmatpush.msra.mxu0 0.0
  %5535 = vmatpush.msra.mxu0 0.0
  %5536 = vmatpush.msra.mxu0 0.0
  %5537 = vmatpush.msra.mxu0 0.0
  %v5538 = vand.u32 %v5525, 4294901760
  %5539 = vmatpush.msra.mxu0 %v5538
  %v5540 = vand.u32 %v5524, 4294901760
  %5541 = vmatpush.msra.mxu0 %v5540
  %v5542 = vand.u32 %v5523, 4294901760
  %5543 = vmatpush.msra.mxu0 %v5542
  %v5544 = vand.u32 %v5522, 4294901760
  %5545 = vmatpush.msra.mxu0 %v5544
  %v5546 = vand.u32 %v5521, 4294901760
  %5547 = vmatpush.msra.mxu0 %v5546
  %v5548 = vand.u32 %v5520, 4294901760
  %5549 = vmatpush.msra.mxu0 %v5548
  %v5550 = vand.u32 %v5519, 4294901760
  %5551 = vmatpush.msra.mxu0 %v5550
  %v5552 = vand.u32 %v5518, 4294901760
  %5553 = vmatpush.msra.mxu0 %v5552
  %v5554 = vand.u32 %v5528, 4294901760
  %v5555 = vsub.f32 %v5528, %v5554
  %v5556 = vand.u32 %v5555, 4294901760
  %v5557 = vsub.f32 %v5555, %v5556
  %v5558 = vand.u32 %v5557, 4294901760
  %5559 = vmatmul.f32.gmra.mxu0 %v5558
  %v5560 = vpop.f32.mrf.mxu0
  %v5561 = vadd.f32 %v5526, %v5560
  %5562 = vdwg.mxu0
  %5563 = vmatpush.msra.mxu0 0.0
  %5564 = vmatpush.msra.mxu0 0.0
  %5565 = vmatpush.msra.mxu0 0.0
  %5566 = vmatpush.msra.mxu0 0.0
  %5567 = vmatpush.msra.mxu0 0.0
  %5568 = vmatpush.msra.mxu0 0.0
  %5569 = vmatpush.msra.mxu0 0.0
  %5570 = vmatpush.msra.mxu0 0.0
  %v5571 = vand.u32 %v5525, 4294901760
  %v5572 = vsub.f32 %v5525, %v5571
  %v5573 = vand.u32 %v5572, 4294901760
  %v5574 = vsub.f32 %v5572, %v5573
  %v5575 = vand.u32 %v5574, 4294901760
  %5576 = vmatpush.msra.mxu0 %v5575
  %v5577 = vand.u32 %v5524, 4294901760
  %v5578 = vsub.f32 %v5524, %v5577
  %v5579 = vand.u32 %v5578, 4294901760
  %v5580 = vsub.f32 %v5578, %v5579
  %v5581 = vand.u32 %v5580, 4294901760
  %5582 = vmatpush.msra.mxu0 %v5581
  %v5583 = vand.u32 %v5523, 4294901760
  %v5584 = vsub.f32 %v5523, %v5583
  %v5585 = vand.u32 %v5584, 4294901760
  %v5586 = vsub.f32 %v5584, %v5585
  %v5587 = vand.u32 %v5586, 4294901760
  %5588 = vmatpush.msra.mxu0 %v5587
  %v5589 = vand.u32 %v5522, 4294901760
  %v5590 = vsub.f32 %v5522, %v5589
  %v5591 = vand.u32 %v5590, 4294901760
  %v5592 = vsub.f32 %v5590, %v5591
  %v5593 = vand.u32 %v5592, 4294901760
  %5594 = vmatpush.msra.mxu0 %v5593
  %v5595 = vand.u32 %v5521, 4294901760
  %v5596 = vsub.f32 %v5521, %v5595
  %v5597 = vand.u32 %v5596, 4294901760
  %v5598 = vsub.f32 %v5596, %v5597
  %v5599 = vand.u32 %v5598, 4294901760
  %5600 = vmatpush.msra.mxu0 %v5599
  %v5601 = vand.u32 %v5520, 4294901760
  %v5602 = vsub.f32 %v5520, %v5601
  %v5603 = vand.u32 %v5602, 4294901760
  %v5604 = vsub.f32 %v5602, %v5603
  %v5605 = vand.u32 %v5604, 4294901760
  %5606 = vmatpush.msra.mxu0 %v5605
  %v5607 = vand.u32 %v5519, 4294901760
  %v5608 = vsub.f32 %v5519, %v5607
  %v5609 = vand.u32 %v5608, 4294901760
  %v5610 = vsub.f32 %v5608, %v5609
  %v5611 = vand.u32 %v5610, 4294901760
  %5612 = vmatpush.msra.mxu0 %v5611
  %v5613 = vand.u32 %v5518, 4294901760
  %v5614 = vsub.f32 %v5518, %v5613
  %v5615 = vand.u32 %v5614, 4294901760
  %v5616 = vsub.f32 %v5614, %v5615
  %v5617 = vand.u32 %v5616, 4294901760
  %5618 = vmatpush.msra.mxu0 %v5617
  %v5619 = vand.u32 %v5528, 4294901760
  %5620 = vmatmul.f32.gmra.mxu0 %v5619
  %v5621 = vpop.f32.mrf.mxu0
  %v5622 = vadd.f32 %v5561, %v5621
  %5623 = vdwg.mxu0
  %5624 = vmatpush.msra.mxu0 0.0
  %5625 = vmatpush.msra.mxu0 0.0
  %5626 = vmatpush.msra.mxu0 0.0
  %5627 = vmatpush.msra.mxu0 0.0
  %5628 = vmatpush.msra.mxu0 0.0
  %5629 = vmatpush.msra.mxu0 0.0
  %5630 = vmatpush.msra.mxu0 0.0
  %5631 = vmatpush.msra.mxu0 0.0
  %v5632 = vand.u32 %v5525, 4294901760
  %v5633 = vsub.f32 %v5525, %v5632
  %5634 = vmatpush.msra.mxu0 %v5633
  %v5635 = vand.u32 %v5524, 4294901760
  %v5636 = vsub.f32 %v5524, %v5635
  %5637 = vmatpush.msra.mxu0 %v5636
  %v5638 = vand.u32 %v5523, 4294901760
  %v5639 = vsub.f32 %v5523, %v5638
  %5640 = vmatpush.msra.mxu0 %v5639
  %v5641 = vand.u32 %v5522, 4294901760
  %v5642 = vsub.f32 %v5522, %v5641
  %5643 = vmatpush.msra.mxu0 %v5642
  %v5644 = vand.u32 %v5521, 4294901760
  %v5645 = vsub.f32 %v5521, %v5644
  %5646 = vmatpush.msra.mxu0 %v5645
  %v5647 = vand.u32 %v5520, 4294901760
  %v5648 = vsub.f32 %v5520, %v5647
  %5649 = vmatpush.msra.mxu0 %v5648
  %v5650 = vand.u32 %v5519, 4294901760
  %v5651 = vsub.f32 %v5519, %v5650
  %5652 = vmatpush.msra.mxu0 %v5651
  %v5653 = vand.u32 %v5518, 4294901760
  %v5654 = vsub.f32 %v5518, %v5653
  %5655 = vmatpush.msra.mxu0 %v5654
  %v5656 = vand.u32 %v5528, 4294901760
  %v5657 = vsub.f32 %v5528, %v5656
  %5658 = vmatmul.f32.gmra.mxu0 %v5657
  %v5659 = vpop.f32.mrf.mxu0
  %v5660 = vadd.f32 %v5622, %v5659
  %5661 = vdwg.mxu0
  %5662 = vmatpush.msra.mxu0 0.0
  %5663 = vmatpush.msra.mxu0 0.0
  %5664 = vmatpush.msra.mxu0 0.0
  %5665 = vmatpush.msra.mxu0 0.0
  %5666 = vmatpush.msra.mxu0 0.0
  %5667 = vmatpush.msra.mxu0 0.0
  %5668 = vmatpush.msra.mxu0 0.0
  %5669 = vmatpush.msra.mxu0 0.0
  %v5670 = vand.u32 %v5525, 4294901760
  %5671 = vmatpush.msra.mxu0 %v5670
  %v5672 = vand.u32 %v5524, 4294901760
  %5673 = vmatpush.msra.mxu0 %v5672
  %v5674 = vand.u32 %v5523, 4294901760
  %5675 = vmatpush.msra.mxu0 %v5674
  %v5676 = vand.u32 %v5522, 4294901760
  %5677 = vmatpush.msra.mxu0 %v5676
  %v5678 = vand.u32 %v5521, 4294901760
  %5679 = vmatpush.msra.mxu0 %v5678
  %v5680 = vand.u32 %v5520, 4294901760
  %5681 = vmatpush.msra.mxu0 %v5680
  %v5682 = vand.u32 %v5519, 4294901760
  %5683 = vmatpush.msra.mxu0 %v5682
  %v5684 = vand.u32 %v5518, 4294901760
  %5685 = vmatpush.msra.mxu0 %v5684
  %v5686 = vand.u32 %v5528, 4294901760
  %v5687 = vsub.f32 %v5528, %v5686
  %v5688 = vand.u32 %v5687, 4294901760
  %5689 = vmatmul.f32.gmra.mxu0 %v5688
  %v5690 = vpop.f32.mrf.mxu0
  %v5691 = vadd.f32 %v5660, %v5690
  %5692 = vdwg.mxu0
  %5693 = vmatpush.msra.mxu0 0.0
  %5694 = vmatpush.msra.mxu0 0.0
  %5695 = vmatpush.msra.mxu0 0.0
  %5696 = vmatpush.msra.mxu0 0.0
  %5697 = vmatpush.msra.mxu0 0.0
  %5698 = vmatpush.msra.mxu0 0.0
  %5699 = vmatpush.msra.mxu0 0.0
  %5700 = vmatpush.msra.mxu0 0.0
  %v5701 = vand.u32 %v5525, 4294901760
  %v5702 = vsub.f32 %v5525, %v5701
  %v5703 = vand.u32 %v5702, 4294901760
  %5704 = vmatpush.msra.mxu0 %v5703
  %v5705 = vand.u32 %v5524, 4294901760
  %v5706 = vsub.f32 %v5524, %v5705
  %v5707 = vand.u32 %v5706, 4294901760
  %5708 = vmatpush.msra.mxu0 %v5707
  %v5709 = vand.u32 %v5523, 4294901760
  %v5710 = vsub.f32 %v5523, %v5709
  %v5711 = vand.u32 %v5710, 4294901760
  %5712 = vmatpush.msra.mxu0 %v5711
  %v5713 = vand.u32 %v5522, 4294901760
  %v5714 = vsub.f32 %v5522, %v5713
  %v5715 = vand.u32 %v5714, 4294901760
  %5716 = vmatpush.msra.mxu0 %v5715
  %v5717 = vand.u32 %v5521, 4294901760
  %v5718 = vsub.f32 %v5521, %v5717
  %v5719 = vand.u32 %v5718, 4294901760
  %5720 = vmatpush.msra.mxu0 %v5719
  %v5721 = vand.u32 %v5520, 4294901760
  %v5722 = vsub.f32 %v5520, %v5721
  %v5723 = vand.u32 %v5722, 4294901760
  %5724 = vmatpush.msra.mxu0 %v5723
  %v5725 = vand.u32 %v5519, 4294901760
  %v5726 = vsub.f32 %v5519, %v5725
  %v5727 = vand.u32 %v5726, 4294901760
  %5728 = vmatpush.msra.mxu0 %v5727
  %v5729 = vand.u32 %v5518, 4294901760
  %v5730 = vsub.f32 %v5518, %v5729
  %v5731 = vand.u32 %v5730, 4294901760
  %5732 = vmatpush.msra.mxu0 %v5731
  %v5733 = vand.u32 %v5528, 4294901760
  %5734 = vmatmul.f32.gmra.mxu0 %v5733
  %v5735 = vpop.f32.mrf.mxu0
  %v5736 = vadd.f32 %v5691, %v5735
  %5737 = vdwg.mxu0
  %5738 = vmatpush.msra.mxu0 0.0
  %5739 = vmatpush.msra.mxu0 0.0
  %5740 = vmatpush.msra.mxu0 0.0
  %5741 = vmatpush.msra.mxu0 0.0
  %5742 = vmatpush.msra.mxu0 0.0
  %5743 = vmatpush.msra.mxu0 0.0
  %5744 = vmatpush.msra.mxu0 0.0
  %5745 = vmatpush.msra.mxu0 0.0
  %v5746 = vand.u32 %v5525, 4294901760
  %5747 = vmatpush.msra.mxu0 %v5746
  %v5748 = vand.u32 %v5524, 4294901760
  %5749 = vmatpush.msra.mxu0 %v5748
  %v5750 = vand.u32 %v5523, 4294901760
  %5751 = vmatpush.msra.mxu0 %v5750
  %v5752 = vand.u32 %v5522, 4294901760
  %5753 = vmatpush.msra.mxu0 %v5752
  %v5754 = vand.u32 %v5521, 4294901760
  %5755 = vmatpush.msra.mxu0 %v5754
  %v5756 = vand.u32 %v5520, 4294901760
  %5757 = vmatpush.msra.mxu0 %v5756
  %v5758 = vand.u32 %v5519, 4294901760
  %5759 = vmatpush.msra.mxu0 %v5758
  %v5760 = vand.u32 %v5518, 4294901760
  %5761 = vmatpush.msra.mxu0 %v5760
  %v5762 = vand.u32 %v5528, 4294901760
  %5763 = vmatmul.f32.gmra.mxu0 %v5762
  %v5764 = vpop.f32.mrf.mxu0
  %v5765 = vadd.f32 %v5736, %v5764
  %5766 = vdwg.mxu0
  %5767 = vst [vmem:[%s2] sm:$0xff] %v5765
  // Predicated region
  $region10: #{actor_critic_forward.1} parent=0 // pred_check
    _
  $region11: #{actor_critic_forward.1} parent=0 // pred_check_branch
    %5769 = sbr.rel (0) target = $region13
  $region12: #{actor_critic_forward.1} parent=0 // pred_region
    _
  $region13: #{actor_critic_forward.1} parent=0 // pred_fallthru
    _
  // Predicated region
  $region14: #{actor_critic_forward.1} parent=0 // pred_check
    _
  $region15: #{actor_critic_forward.1} parent=0 // pred_check_branch
    %5771 = sbr.rel (0) target = $region17
  $region16: #{actor_critic_forward.1} parent=0 // pred_region
    _
  $region17: #{actor_critic_forward.1} parent=0 // pred_fallthru
    _

</llo_original>
